<compile_context>
chip_gen: v5e
topology: v5e:2x2
jax: 0.10.0
libtpu: 0.0.40
codegen_flags: <defaults>
</compile_context>

<pallas_src>
import numpy as np
from functools import partial

import jax
import jax.numpy as jnp
from jax.experimental import pallas as pl
from jax.experimental.pallas import tpu as pltpu


# ----------------------------------------------------------------------------
# Pallas kernels
# ----------------------------------------------------------------------------

def pallas_matmul_bias(x, w, bias, *, tm=1024, out_dtype=jnp.float32):
    """Row-tiled matmul + broadcast bias:  (M,K) @ (K,N) + (1,N) -> (M,N).

    Grid over M in TM-row blocks ("parallel" -> megacore sharding + pipelined
    HBM<->VMEM DMAs). Weight & bias use constant index_maps -> VMEM resident.
    Operands expected bf16 (full MXU rate, half the DMA bytes); f32 accumulate.
    """
    M, K = x.shape
    Kw, N = w.shape
    assert K == Kw
    tm = max(8, min(tm, M))
    Mp = ((M + tm - 1) // tm) * tm
    if Mp != M:
        x = jnp.pad(x, ((0, Mp - M), (0, 0)))

    def kernel(x_ref, w_ref, b_ref, o_ref):
        acc = jnp.dot(x_ref[...], w_ref[...],
                      preferred_element_type=jnp.float32)
        o_ref[...] = (acc + b_ref[...]).astype(o_ref.dtype)

    out = pl.pallas_call(
        kernel,
        out_shape=jax.ShapeDtypeStruct((Mp, N), out_dtype),
        grid=(Mp // tm,),
        in_specs=[
            pl.BlockSpec((tm, K), lambda i: (i, 0)),
            pl.BlockSpec((K, N), lambda i: (0, 0)),    # resident weight
            pl.BlockSpec((1, N), lambda i: (0, 0)),    # resident bias
        ],
        out_specs=pl.BlockSpec((tm, N), lambda i: (i, 0)),
        compiler_params=pltpu.CompilerParams(
            dimension_semantics=("parallel",)),
    )(x, w, bias)
    return out[:M] if Mp != M else out


def pallas_fused_qkv_window_attention(x_pad, w_qkv_t, rel_bias, *,
                                      num_heads, head_dim, ws, tb_h,
                                      use_bf16_exp):
    """Fused 1x1 qkv projection + windowed multi-head attention.

    x_pad:   (B, Hpp, Wp, C) bf16  NHWC input, padded so ws | Wp, (tb_h*ws) | Hpp
    w_qkv_t: (C, 3C) bf16          qkv weight^T, softmax scale folded into q cols
    rel:     (h, N, N) f32         relative position bias (VMEM resident)
    returns: (B, Hpp, Wp, C) f32   attention output written straight back into
                                   the padded NHWC layout (no un-window pass).

    Each grid step processes tb_h vertically-stacked ws x ws windows of one
    window-column: the (1, tb_h*ws, ws, C) block reshapes to (tb_h*N, C) as a
    free contiguous view with tokens in the reference (ws1, ws2) order.
    """
    B, Hpp, Wp, C = x_pad.shape
    N = ws * ws
    C3 = 3 * C
    assert C == num_heads * head_dim
    assert Hpp % (tb_h * ws) == 0 and Wp % ws == 0

    def kernel(x_ref, w_ref, rel_ref, o_ref):
        # (1, tb_h*ws, ws, C) -> (tb_h*N, C): contiguous window-major view.
        xb = x_ref[...].reshape(tb_h * N, C)
        # fused 1x1 qkv projection (MXU): bf16 operands, f32 accumulate
        qkv = jnp.dot(xb, w_ref[...], preferred_element_type=jnp.float32)
        qkv = qkv.astype(jnp.bfloat16).reshape(tb_h, N, C3)
        rel = rel_ref[...]                                   # (h, N, N) f32
        for hi in range(num_heads):
            lo = hi * head_dim
            q = qkv[:, :, lo:lo + head_dim]                  # (tb_h, N, d)
            k = qkv[:, :, C + lo:C + lo + head_dim]
            v = qkv[:, :, 2 * C + lo:2 * C + lo + head_dim]
            s = jnp.einsum('bnd,bmd->bnm', q, k,
                           preferred_element_type=jnp.float32)
            s = s + rel[hi]
            m = jnp.max(s, axis=-1, keepdims=True)
            if use_bf16_exp:
                # v6e/v7x: EUP has a bf16 path (~2x f32 rate); sums stay f32.
                e = jnp.exp((s - m).astype(jnp.bfloat16)).astype(jnp.float32)
            else:
                # v5e: no bf16 VPU/EUP, keep the softmax chain in f32.
                e = jnp.exp(s - m)
            r = pl.reciprocal(jnp.sum(e, axis=-1, keepdims=True), approx=True)
            p = (e * r).astype(jnp.bfloat16)                 # bf16 -> MXU
            o = jnp.einsum('bnm,bmd->bnd', p, v,
                           preferred_element_type=jnp.float32)
            # per-head direct store (bounds live ranges, no final concat)
            o_ref[:, :, :, lo:lo + head_dim] = (
                o.reshape(1, tb_h * ws, ws, head_dim).astype(o_ref.dtype))

    grid = (B, Hpp // (tb_h * ws), Wp // ws)
    return pl.pallas_call(
        kernel,
        out_shape=jax.ShapeDtypeStruct((B, Hpp, Wp, C), jnp.float32),
        grid=grid,
        in_specs=[
            pl.BlockSpec((1, tb_h * ws, ws, C), lambda b, i, j: (b, i, j, 0)),
            pl.BlockSpec((C, C3), lambda b, i, j: (0, 0)),              # resident
            pl.BlockSpec((num_heads, N, N), lambda b, i, j: (0, 0, 0)),  # resident
        ],
        out_specs=pl.BlockSpec((1, tb_h * ws, ws, C),
                               lambda b, i, j: (b, i, j, 0)),
        compiler_params=pltpu.CompilerParams(
            dimension_semantics=("parallel", "parallel", "parallel")),
    )(x_pad, w_qkv_t, rel_bias)


# ----------------------------------------------------------------------------
# Plain-JAX glue (spatial convs, padding, bias/BN folding) -- NHWC throughout
# ----------------------------------------------------------------------------

# TODO(synk): attn_x / attn_y strip convs and the ws x ws depthwise conv stay
# on lax.conv_general_dilated; only matmul / attention / BN+pointwise hot paths
# are Pallas kernels.
def conv_nhwc(x, w_oihw, padding, groups=1, bias=None):
    w = jnp.transpose(w_oihw, (2, 3, 1, 0))          # OIHW -> HWIO
    out = jax.lax.conv_general_dilated(
        x, w, window_strides=(1, 1), padding=padding,
        dimension_numbers=('NHWC', 'HWIO', 'NHWC'),
        feature_group_count=groups)
    if bias is not None:
        out = out + bias
    return out


def make_relative_position_index(ws):
    coords_h = np.arange(ws)
    coords_w = np.arange(ws)
    coords = np.stack(np.meshgrid(coords_h, coords_w, indexing='ij'))   # (2,ws,ws)
    coords_flatten = coords.reshape(2, -1)                              # (2, N)
    relative_coords = coords_flatten[:, :, None] - coords_flatten[:, None, :]
    relative_coords = relative_coords.transpose(1, 2, 0).copy()         # (N,N,2)
    relative_coords[:, :, 0] += ws - 1
    relative_coords[:, :, 1] += ws - 1
    relative_coords[:, :, 0] *= 2 * ws - 1
    return relative_coords.sum(-1)                                      # (N, N)


def _prefer_bf16_exp():
    # bf16 EUP exists on v6e/v7x; keep f32 softmax on v5e (and anything else).
    try:
        kind = jax.devices()[0].device_kind.lower()
        return ('v6' in kind) or ('v7' in kind)
    except Exception:
        return False


def global_attention_forward(x_nchw, params, *, num_heads, ws, tb_h=8):
    B, C, H, W = x_nchw.shape
    head_dim = C // num_heads
    scale = head_dim ** (-0.5)
    N = ws * ws

    x = jnp.transpose(x_nchw, (0, 2, 3, 1))                  # -> NHWC
    pad_w = (ws - W % ws) % ws
    pad_h = (ws - H % ws) % ws
    Hp, Wp = H + pad_h, W + pad_w
    hh = Hp // ws
    # Pad the window-row count up to a multiple of tb_h instead of shrinking
    # tb_h (extra all-zero windows are cropped away below).
    tb_h = max(1, min(tb_h, hh))
    hh_p = ((hh + tb_h - 1) // tb_h) * tb_h
    Hpp = hh_p * ws
    xp = jnp.pad(x, ((0, 0), (0, Hpp - H), (0, pad_w), (0, 0)))

    # qkv 1x1 conv weight: fold softmax scale into the q columns, bf16
    w_qkv = params['w_qkv']                                  # (3C, C)
    w_qkv = jnp.concatenate([w_qkv[:C] * scale, w_qkv[C:]], axis=0)
    w_qkv_t = w_qkv.T.astype(jnp.bfloat16)                   # (C, 3C)

    # relative position bias (h, N, N), resident in VMEM inside the kernel
    rel = params['rel_table'][params['rel_index'].reshape(-1)]
    rel = rel.reshape(N, N, num_heads).transpose(2, 0, 1).astype(jnp.float32)

    # ---- fused qkv + window attention (Pallas); windowing lives in BlockSpecs
    attn_full = pallas_fused_qkv_window_attention(
        xp.astype(jnp.bfloat16), w_qkv_t, rel,
        num_heads=num_heads, head_dim=head_dim, ws=ws, tb_h=tb_h,
        use_bf16_exp=_prefer_bf16_exp())                     # (B,Hpp,Wp,C) f32
    attn = attn_full[:, :H, :W, :]                           # crop pad windows

    # ---- attn_x / attn_y strip convs (lax, NHWC) ----
    ax_in = jnp.pad(attn, ((0, 0), (0, 1), (0, 0), (0, 0)), mode='reflect')
    ax = conv_nhwc(ax_in, params['w_ax'],
                   padding=[(ws // 2 - 1, ws // 2 - 1), (0, 0)],
                   bias=params['b_ax'])
    ay_in = jnp.pad(attn, ((0, 0), (0, 0), (0, 1), (0, 0)), mode='reflect')
    ay = conv_nhwc(ay_in, params['w_ay'],
                   padding=[(0, 0), (ws // 2 - 1, ws // 2 - 1)],
                   bias=params['b_ay'])
    out = ax + ay                                            # (B, H, W, C)

    # pad_out (+1 row, +1 col)
    out = jnp.pad(out, ((0, 0), (0, 1), (0, 1), (0, 0)))

    # ---- proj: depthwise ws x ws conv (lax) + BN folded into pointwise ----
    p = (ws - 1) // 2
    dw = conv_nhwc(out, params['w_dw'], padding=[(p, p), (p, p)], groups=C)
    Hd, Wd = dw.shape[1], dw.shape[2]

    bn_scale = params['bn_gamma'] / jnp.sqrt(params['bn_var'] + 1e-5)
    bn_shift = params['bn_beta'] - params['bn_mean'] * bn_scale
    # y = (x*s + t) @ Wpw^T  ==  x @ (s[:,None] * Wpw^T) + t @ Wpw^T
    w_pw_t = params['w_pw'].T                                # (Cin, Cout)
    w_fold = (bn_scale[:, None] * w_pw_t).astype(jnp.bfloat16)
    b_fold = (bn_shift[None, :] @ w_pw_t).astype(jnp.float32)  # (1, Cout)

    dw2d = dw.reshape(-1, C).astype(jnp.bfloat16)
    proj2d = pallas_matmul_bias(dw2d, w_fold, b_fold, out_dtype=jnp.float32)
    proj = proj2d.reshape(B, Hd, Wd, C)[:, :H, :W, :]

    return jnp.transpose(proj, (0, 3, 1, 2))                 # back to NCHW


# ----------------------------------------------------------------------------
# Main
# ----------------------------------------------------------------------------

if __name__ == "__main__":
    # small, module-consistent config (dim multiple of heads, default ws=8)
    B, C, H, W = 2, 32, 32, 32
    num_heads, ws = 4, 8

    key = jax.random.PRNGKey(0)
    ks = jax.random.split(key, 12)

    x = jax.random.normal(ks[0], (B, C, H, W), jnp.float32)

    params = {
        # qkv 1x1 conv weight (3C, C), bias=False
        'w_qkv': 0.05 * jax.random.normal(ks[1], (3 * C, C), jnp.float32),
        # relative position bias table ((2ws-1)^2, heads)
        'rel_table': 0.02 * jax.random.normal(ks[2], ((2 * ws - 1) ** 2, num_heads),
                                              jnp.float32),
        'rel_index': jnp.asarray(make_relative_position_index(ws), jnp.int32),
        # attn_x: Conv2d(C, C, (ws, 1)), bias=True
        'w_ax': 0.05 * jax.random.normal(ks[3], (C, C, ws, 1), jnp.float32),
        'b_ax': 0.01 * jax.random.normal(ks[4], (C,), jnp.float32),
        # attn_y: Conv2d(C, C, (1, ws)), bias=True
        'w_ay': 0.05 * jax.random.normal(ks[5], (C, C, 1, ws), jnp.float32),
        'b_ay': 0.01 * jax.random.normal(ks[6], (C,), jnp.float32),
        # proj depthwise conv (C, 1, ws, ws), groups=C, no bias
        'w_dw': 0.05 * jax.random.normal(ks[7], (C, 1, ws, ws), jnp.float32),
        # proj pointwise 1x1 conv (C, C), no bias
        'w_pw': 0.05 * jax.random.normal(ks[8], (C, C), jnp.float32),
        # BatchNorm2d (eval-mode semantics with default running stats)
        'bn_gamma': jnp.ones((C,), jnp.float32),
        'bn_beta': jnp.zeros((C,), jnp.float32),
        'bn_mean': jnp.zeros((C,), jnp.float32),
        'bn_var': jnp.ones((C,), jnp.float32),
    }

    fwd = jax.jit(partial(global_attention_forward, num_heads=num_heads, ws=ws))
    out = fwd(x, params)
    out = jax.block_until_ready(out)

    assert out.shape == (B, C, H, W), out.shape
    assert bool(jnp.all(jnp.isfinite(out)))
    print("KERNEL_OK")
</pallas_src>

<mosaic_0001>
module attributes {stable_mosaic.version = 11 : i64} {
  func.func @kernel(%arg0: i32, %arg1: i32, %arg2: i32, %arg3: memref<1x32x8x32xbf16, #tpu.memory_space<vmem>>, %arg4: memref<32x96xbf16, #tpu.memory_space<vmem>>, %arg5: memref<4x64x64xf32, #tpu.memory_space<vmem>>, %arg6: memref<1x32x8x32xf32, #tpu.memory_space<vmem>>) attributes {dimension_semantics = [#tpu.dimension_semantics<parallel>, #tpu.dimension_semantics<parallel>, #tpu.dimension_semantics<parallel>], iteration_bounds = array<i64: 2, 1, 4>, scalar_prefetch = 0 : i64, scratch_operands = 0 : i64, tpu.core_type = #tpu.core_type<tc>, window_params = [{transform_indices = @transform_0, window_bounds = array<i64: 1, 32, 8, 32>}, {pipeline_mode = #tpu.pipeline_mode<synchronous>, transform_indices = @transform_1, window_bounds = array<i64: 32, 96>}, {pipeline_mode = #tpu.pipeline_mode<synchronous>, transform_indices = @transform_2, window_bounds = array<i64: 4, 64, 64>}, {transform_indices = @transform_3, window_bounds = array<i64: 1, 32, 8, 32>}]} {
    %c0 = arith.constant 0 : index
    %c0_0 = arith.constant 0 : index
    %c0_1 = arith.constant 0 : index
    %c0_2 = arith.constant 0 : index
    %0 = vector.load %arg3[%c0, %c0_0, %c0_1, %c0_2] : memref<1x32x8x32xbf16, #tpu.memory_space<vmem>>, vector<1x32x8x32xbf16>
    %1 = vector.shape_cast %0 : vector<1x32x8x32xbf16> to vector<256x32xbf16>
    %c0_3 = arith.constant 0 : index
    %c0_4 = arith.constant 0 : index
    %2 = vector.load %arg4[%c0_3, %c0_4] : memref<32x96xbf16, #tpu.memory_space<vmem>>, vector<32x96xbf16>
    %cst = arith.constant dense<0.000000e+00> : vector<256x96xf32>
    %3 = tpu.matmul %1, %2, %cst {dimension_numbers = #tpu.dot_dimension_numbers<[1], [0], [0], [1], [0, 0, 1, 1], [], []>} : vector<256x32xbf16>, vector<32x96xbf16>, vector<256x96xf32> -> vector<256x96xf32>
    %4 = arith.truncf %3 : vector<256x96xf32> to vector<256x96xbf16>
    %5 = vector.shape_cast %4 : vector<256x96xbf16> to vector<4x64x96xbf16>
    %c0_5 = arith.constant 0 : index
    %c0_6 = arith.constant 0 : index
    %c0_7 = arith.constant 0 : index
    %6 = vector.load %arg5[%c0_5, %c0_6, %c0_7] : memref<4x64x64xf32, #tpu.memory_space<vmem>>, vector<4x64x64xf32>
    %7 = vector.extract_strided_slice %5 {offsets = [0, 0, 0], sizes = [4, 64, 8], strides = [1, 1, 1]} : vector<4x64x96xbf16> to vector<4x64x8xbf16>
    %8 = vector.extract_strided_slice %5 {offsets = [0, 0, 32], sizes = [4, 64, 8], strides = [1, 1, 1]} : vector<4x64x96xbf16> to vector<4x64x8xbf16>
    %9 = vector.extract_strided_slice %5 {offsets = [0, 0, 64], sizes = [4, 64, 8], strides = [1, 1, 1]} : vector<4x64x96xbf16> to vector<4x64x8xbf16>
    "tpu.trace_start"() <{level = 10 : i32, message = "bnd,bmd->bnm"}> : () -> ()
    %cst_8 = arith.constant dense<0.000000e+00> : vector<4x64x64xf32>
    %10 = tpu.matmul %7, %8, %cst_8 {dimension_numbers = #tpu.dot_dimension_numbers<[2], [2], [1], [1], [0, 0, 0, 1, 1, 1], [0], [0]>} : vector<4x64x8xbf16>, vector<4x64x8xbf16>, vector<4x64x64xf32> -> vector<4x64x64xf32>
    "tpu.trace_stop"() : () -> ()
    %11 = vector.extract_strided_slice %6 {offsets = [0, 0, 0], sizes = [1, 64, 64], strides = [1, 1, 1]} : vector<4x64x64xf32> to vector<1x64x64xf32>
    %12 = vector.shape_cast %11 : vector<1x64x64xf32> to vector<64x64xf32>
    %13 = vector.shape_cast %12 : vector<64x64xf32> to vector<1x64x64xf32>
    %14 = vector.broadcast %13 : vector<1x64x64xf32> to vector<4x64x64xf32>
    %15 = arith.addf %10, %14 : vector<4x64x64xf32>
    %cst_9 = arith.constant dense<0xFF800000> : vector<4x64xf32>
    %16 = vector.multi_reduction <maximumf>, %15, %cst_9 [2] : vector<4x64x64xf32> to vector<4x64xf32>
    %17 = vector.shape_cast %16 : vector<4x64xf32> to vector<4x64x1xf32>
    %18 = vector.broadcast %17 : vector<4x64x1xf32> to vector<4x64x64xf32>
    %19 = arith.subf %15, %18 : vector<4x64x64xf32>
    %20 = math.exp %19 : vector<4x64x64xf32>
    %cst_10 = arith.constant dense<0.000000e+00> : vector<4x64xf32>
    %21 = vector.multi_reduction <add>, %20, %cst_10 [2] : vector<4x64x64xf32> to vector<4x64xf32>
    %22 = vector.shape_cast %21 : vector<4x64xf32> to vector<4x64x1xf32>
    %23 = tpu.reciprocal %22 {approx = true} : vector<4x64x1xf32> -> vector<4x64x1xf32>
    %24 = vector.broadcast %23 : vector<4x64x1xf32> to vector<4x64x64xf32>
    %25 = arith.mulf %20, %24 : vector<4x64x64xf32>
    %26 = arith.truncf %25 : vector<4x64x64xf32> to vector<4x64x64xbf16>
    "tpu.trace_start"() <{level = 10 : i32, message = "bnm,bmd->bnd"}> : () -> ()
    %cst_11 = arith.constant dense<0.000000e+00> : vector<4x64x8xf32>
    %27 = tpu.matmul %26, %9, %cst_11 {dimension_numbers = #tpu.dot_dimension_numbers<[2], [1], [1], [2], [0, 0, 0, 1, 1, 2], [0], [0]>} : vector<4x64x64xbf16>, vector<4x64x8xbf16>, vector<4x64x8xf32> -> vector<4x64x8xf32>
    "tpu.trace_stop"() : () -> ()
    %28 = vector.shape_cast %27 : vector<4x64x8xf32> to vector<1x32x8x8xf32>
    %c0_12 = arith.constant 0 : index
    %c0_13 = arith.constant 0 : index
    %c0_14 = arith.constant 0 : index
    %c0_15 = arith.constant 0 : index
    %29 = vector.load %arg6[%c0_12, %c0_13, %c0_14, %c0_15] : memref<1x32x8x32xf32, #tpu.memory_space<vmem>>, vector<1x32x8x8xf32>
    tpu.vector_store %arg6[%c0_12, %c0_13, %c0_14, %c0_15], %28 {strides = array<i32>} : memref<1x32x8x32xf32, #tpu.memory_space<vmem>>, vector<1x32x8x8xf32>,
    %30 = vector.extract_strided_slice %5 {offsets = [0, 0, 8], sizes = [4, 64, 8], strides = [1, 1, 1]} : vector<4x64x96xbf16> to vector<4x64x8xbf16>
    %31 = vector.extract_strided_slice %5 {offsets = [0, 0, 40], sizes = [4, 64, 8], strides = [1, 1, 1]} : vector<4x64x96xbf16> to vector<4x64x8xbf16>
    %32 = vector.extract_strided_slice %5 {offsets = [0, 0, 72], sizes = [4, 64, 8], strides = [1, 1, 1]} : vector<4x64x96xbf16> to vector<4x64x8xbf16>
    "tpu.trace_start"() <{level = 10 : i32, message = "bnd,bmd->bnm"}> : () -> ()
    %cst_16 = arith.constant dense<0.000000e+00> : vector<4x64x64xf32>
    %33 = tpu.matmul %30, %31, %cst_16 {dimension_numbers = #tpu.dot_dimension_numbers<[2], [2], [1], [1], [0, 0, 0, 1, 1, 1], [0], [0]>} : vector<4x64x8xbf16>, vector<4x64x8xbf16>, vector<4x64x64xf32> -> vector<4x64x64xf32>
    "tpu.trace_stop"() : () -> ()
    %34 = vector.extract_strided_slice %6 {offsets = [1, 0, 0], sizes = [1, 64, 64], strides = [1, 1, 1]} : vector<4x64x64xf32> to vector<1x64x64xf32>
    %35 = vector.shape_cast %34 : vector<1x64x64xf32> to vector<64x64xf32>
    %36 = vector.shape_cast %35 : vector<64x64xf32> to vector<1x64x64xf32>
    %37 = vector.broadcast %36 : vector<1x64x64xf32> to vector<4x64x64xf32>
    %38 = arith.addf %33, %37 : vector<4x64x64xf32>
    %cst_17 = arith.constant dense<0xFF800000> : vector<4x64xf32>
    %39 = vector.multi_reduction <maximumf>, %38, %cst_17 [2] : vector<4x64x64xf32> to vector<4x64xf32>
    %40 = vector.shape_cast %39 : vector<4x64xf32> to vector<4x64x1xf32>
    %41 = vector.broadcast %40 : vector<4x64x1xf32> to vector<4x64x64xf32>
    %42 = arith.subf %38, %41 : vector<4x64x64xf32>
    %43 = math.exp %42 : vector<4x64x64xf32>
    %cst_18 = arith.constant dense<0.000000e+00> : vector<4x64xf32>
    %44 = vector.multi_reduction <add>, %43, %cst_18 [2] : vector<4x64x64xf32> to vector<4x64xf32>
    %45 = vector.shape_cast %44 : vector<4x64xf32> to vector<4x64x1xf32>
    %46 = tpu.reciprocal %45 {approx = true} : vector<4x64x1xf32> -> vector<4x64x1xf32>
    %47 = vector.broadcast %46 : vector<4x64x1xf32> to vector<4x64x64xf32>
    %48 = arith.mulf %43, %47 : vector<4x64x64xf32>
    %49 = arith.truncf %48 : vector<4x64x64xf32> to vector<4x64x64xbf16>
    "tpu.trace_start"() <{level = 10 : i32, message = "bnm,bmd->bnd"}> : () -> ()
    %cst_19 = arith.constant dense<0.000000e+00> : vector<4x64x8xf32>
    %50 = tpu.matmul %49, %32, %cst_19 {dimension_numbers = #tpu.dot_dimension_numbers<[2], [1], [1], [2], [0, 0, 0, 1, 1, 2], [0], [0]>} : vector<4x64x64xbf16>, vector<4x64x8xbf16>, vector<4x64x8xf32> -> vector<4x64x8xf32>
    "tpu.trace_stop"() : () -> ()
    %51 = vector.shape_cast %50 : vector<4x64x8xf32> to vector<1x32x8x8xf32>
    %c0_20 = arith.constant 0 : index
    %c0_21 = arith.constant 0 : index
    %c0_22 = arith.constant 0 : index
    %c8 = arith.constant 8 : index
    %52 = vector.load %arg6[%c0_20, %c0_21, %c0_22, %c8] : memref<1x32x8x32xf32, #tpu.memory_space<vmem>>, vector<1x32x8x8xf32>
    tpu.vector_store %arg6[%c0_20, %c0_21, %c0_22, %c8], %51 {strides = array<i32>} : memref<1x32x8x32xf32, #tpu.memory_space<vmem>>, vector<1x32x8x8xf32>,
    %53 = vector.extract_strided_slice %5 {offsets = [0, 0, 16], sizes = [4, 64, 8], strides = [1, 1, 1]} : vector<4x64x96xbf16> to vector<4x64x8xbf16>
    %54 = vector.extract_strided_slice %5 {offsets = [0, 0, 48], sizes = [4, 64, 8], strides = [1, 1, 1]} : vector<4x64x96xbf16> to vector<4x64x8xbf16>
    %55 = vector.extract_strided_slice %5 {offsets = [0, 0, 80], sizes = [4, 64, 8], strides = [1, 1, 1]} : vector<4x64x96xbf16> to vector<4x64x8xbf16>
    "tpu.trace_start"() <{level = 10 : i32, message = "bnd,bmd->bnm"}> : () -> ()
    %cst_23 = arith.constant dense<0.000000e+00> : vector<4x64x64xf32>
    %56 = tpu.matmul %53, %54, %cst_23 {dimension_numbers = #tpu.dot_dimension_numbers<[2], [2], [1], [1], [0, 0, 0, 1, 1, 1], [0], [0]>} : vector<4x64x8xbf16>, vector<4x64x8xbf16>, vector<4x64x64xf32> -> vector<4x64x64xf32>
    "tpu.trace_stop"() : () -> ()
    %57 = vector.extract_strided_slice %6 {offsets = [2, 0, 0], sizes = [1, 64, 64], strides = [1, 1, 1]} : vector<4x64x64xf32> to vector<1x64x64xf32>
    %58 = vector.shape_cast %57 : vector<1x64x64xf32> to vector<64x64xf32>
    %59 = vector.shape_cast %58 : vector<64x64xf32> to vector<1x64x64xf32>
    %60 = vector.broadcast %59 : vector<1x64x64xf32> to vector<4x64x64xf32>
    %61 = arith.addf %56, %60 : vector<4x64x64xf32>
    %cst_24 = arith.constant dense<0xFF800000> : vector<4x64xf32>
    %62 = vector.multi_reduction <maximumf>, %61, %cst_24 [2] : vector<4x64x64xf32> to vector<4x64xf32>
    %63 = vector.shape_cast %62 : vector<4x64xf32> to vector<4x64x1xf32>
    %64 = vector.broadcast %63 : vector<4x64x1xf32> to vector<4x64x64xf32>
    %65 = arith.subf %61, %64 : vector<4x64x64xf32>
    %66 = math.exp %65 : vector<4x64x64xf32>
    %cst_25 = arith.constant dense<0.000000e+00> : vector<4x64xf32>
    %67 = vector.multi_reduction <add>, %66, %cst_25 [2] : vector<4x64x64xf32> to vector<4x64xf32>
    %68 = vector.shape_cast %67 : vector<4x64xf32> to vector<4x64x1xf32>
    %69 = tpu.reciprocal %68 {approx = true} : vector<4x64x1xf32> -> vector<4x64x1xf32>
    %70 = vector.broadcast %69 : vector<4x64x1xf32> to vector<4x64x64xf32>
    %71 = arith.mulf %66, %70 : vector<4x64x64xf32>
    %72 = arith.truncf %71 : vector<4x64x64xf32> to vector<4x64x64xbf16>
    "tpu.trace_start"() <{level = 10 : i32, message = "bnm,bmd->bnd"}> : () -> ()
    %cst_26 = arith.constant dense<0.000000e+00> : vector<4x64x8xf32>
    %73 = tpu.matmul %72, %55, %cst_26 {dimension_numbers = #tpu.dot_dimension_numbers<[2], [1], [1], [2], [0, 0, 0, 1, 1, 2], [0], [0]>} : vector<4x64x64xbf16>, vector<4x64x8xbf16>, vector<4x64x8xf32> -> vector<4x64x8xf32>
    "tpu.trace_stop"() : () -> ()
    %74 = vector.shape_cast %73 : vector<4x64x8xf32> to vector<1x32x8x8xf32>
    %c0_27 = arith.constant 0 : index
    %c0_28 = arith.constant 0 : index
    %c0_29 = arith.constant 0 : index
    %c16 = arith.constant 16 : index
    %75 = vector.load %arg6[%c0_27, %c0_28, %c0_29, %c16] : memref<1x32x8x32xf32, #tpu.memory_space<vmem>>, vector<1x32x8x8xf32>
    tpu.vector_store %arg6[%c0_27, %c0_28, %c0_29, %c16], %74 {strides = array<i32>} : memref<1x32x8x32xf32, #tpu.memory_space<vmem>>, vector<1x32x8x8xf32>,
    %76 = vector.extract_strided_slice %5 {offsets = [0, 0, 24], sizes = [4, 64, 8], strides = [1, 1, 1]} : vector<4x64x96xbf16> to vector<4x64x8xbf16>
    %77 = vector.extract_strided_slice %5 {offsets = [0, 0, 56], sizes = [4, 64, 8], strides = [1, 1, 1]} : vector<4x64x96xbf16> to vector<4x64x8xbf16>
    %78 = vector.extract_strided_slice %5 {offsets = [0, 0, 88], sizes = [4, 64, 8], strides = [1, 1, 1]} : vector<4x64x96xbf16> to vector<4x64x8xbf16>
    "tpu.trace_start"() <{level = 10 : i32, message = "bnd,bmd->bnm"}> : () -> ()
    %cst_30 = arith.constant dense<0.000000e+00> : vector<4x64x64xf32>
    %79 = tpu.matmul %76, %77, %cst_30 {dimension_numbers = #tpu.dot_dimension_numbers<[2], [2], [1], [1], [0, 0, 0, 1, 1, 1], [0], [0]>} : vector<4x64x8xbf16>, vector<4x64x8xbf16>, vector<4x64x64xf32> -> vector<4x64x64xf32>
    "tpu.trace_stop"() : () -> ()
    %80 = vector.extract_strided_slice %6 {offsets = [3, 0, 0], sizes = [1, 64, 64], strides = [1, 1, 1]} : vector<4x64x64xf32> to vector<1x64x64xf32>
    %81 = vector.shape_cast %80 : vector<1x64x64xf32> to vector<64x64xf32>
    %82 = vector.shape_cast %81 : vector<64x64xf32> to vector<1x64x64xf32>
    %83 = vector.broadcast %82 : vector<1x64x64xf32> to vector<4x64x64xf32>
    %84 = arith.addf %79, %83 : vector<4x64x64xf32>
    %cst_31 = arith.constant dense<0xFF800000> : vector<4x64xf32>
    %85 = vector.multi_reduction <maximumf>, %84, %cst_31 [2] : vector<4x64x64xf32> to vector<4x64xf32>
    %86 = vector.shape_cast %85 : vector<4x64xf32> to vector<4x64x1xf32>
    %87 = vector.broadcast %86 : vector<4x64x1xf32> to vector<4x64x64xf32>
    %88 = arith.subf %84, %87 : vector<4x64x64xf32>
    %89 = math.exp %88 : vector<4x64x64xf32>
    %cst_32 = arith.constant dense<0.000000e+00> : vector<4x64xf32>
    %90 = vector.multi_reduction <add>, %89, %cst_32 [2] : vector<4x64x64xf32> to vector<4x64xf32>
    %91 = vector.shape_cast %90 : vector<4x64xf32> to vector<4x64x1xf32>
    %92 = tpu.reciprocal %91 {approx = true} : vector<4x64x1xf32> -> vector<4x64x1xf32>
    %93 = vector.broadcast %92 : vector<4x64x1xf32> to vector<4x64x64xf32>
    %94 = arith.mulf %89, %93 : vector<4x64x64xf32>
    %95 = arith.truncf %94 : vector<4x64x64xf32> to vector<4x64x64xbf16>
    "tpu.trace_start"() <{level = 10 : i32, message = "bnm,bmd->bnd"}> : () -> ()
    %cst_33 = arith.constant dense<0.000000e+00> : vector<4x64x8xf32>
    %96 = tpu.matmul %95, %78, %cst_33 {dimension_numbers = #tpu.dot_dimension_numbers<[2], [1], [1], [2], [0, 0, 0, 1, 1, 2], [0], [0]>} : vector<4x64x64xbf16>, vector<4x64x8xbf16>, vector<4x64x8xf32> -> vector<4x64x8xf32>
    "tpu.trace_stop"() : () -> ()
    %97 = vector.shape_cast %96 : vector<4x64x8xf32> to vector<1x32x8x8xf32>
    %c0_34 = arith.constant 0 : index
    %c0_35 = arith.constant 0 : index
    %c0_36 = arith.constant 0 : index
    %c24 = arith.constant 24 : index
    %98 = vector.load %arg6[%c0_34, %c0_35, %c0_36, %c24] : memref<1x32x8x32xf32, #tpu.memory_space<vmem>>, vector<1x32x8x8xf32>
    tpu.vector_store %arg6[%c0_34, %c0_35, %c0_36, %c24], %97 {strides = array<i32>} : memref<1x32x8x32xf32, #tpu.memory_space<vmem>>, vector<1x32x8x8xf32>,
    return
  }
  func.func @transform_0(%arg0: i32, %arg1: i32, %arg2: i32) -> (i32, i32, i32, i32) {
    %c0_i32 = arith.constant 0 : i32
    %c0_i32_0 = arith.constant 0 : i32
    return %arg0, %arg1, %arg2, %c0_i32 : i32, i32, i32, i32
  }
  func.func @transform_1(%arg0: i32, %arg1: i32, %arg2: i32) -> (i32, i32) {
    %c0_i32 = arith.constant 0 : i32
    %c0_i32_0 = arith.constant 0 : i32
    %c0_i32_1 = arith.constant 0 : i32
    return %c0_i32, %c0_i32_0 : i32, i32
  }
  func.func @transform_2(%arg0: i32, %arg1: i32, %arg2: i32) -> (i32, i32, i32) {
    %c0_i32 = arith.constant 0 : i32
    %c0_i32_0 = arith.constant 0 : i32
    %c0_i32_1 = arith.constant 0 : i32
    %c0_i32_2 = arith.constant 0 : i32
    return %c0_i32, %c0_i32_0, %c0_i32_1 : i32, i32, i32
  }
  func.func @transform_3(%arg0: i32, %arg1: i32, %arg2: i32) -> (i32, i32, i32, i32) {
    %c0_i32 = arith.constant 0 : i32
    %c0_i32_0 = arith.constant 0 : i32
    return %arg0, %arg1, %arg2, %c0_i32 : i32, i32, i32, i32
  }
}

module attributes {stable_mosaic.version = 11 : i64} {
  func.func @kernel(%arg0: i32, %arg1: memref<1024x32xbf16, #tpu.memory_space<vmem>>, %arg2: memref<32x32xbf16, #tpu.memory_space<vmem>>, %arg3: memref<1x32xf32, #tpu.memory_space<vmem>>, %arg4: memref<1024x32xf32, #tpu.memory_space<vmem>>) attributes {dimension_semantics = [#tpu.dimension_semantics<parallel>], iteration_bounds = array<i64: 2>, scalar_prefetch = 0 : i64, scratch_operands = 0 : i64, tpu.core_type = #tpu.core_type<tc>, window_params = [{transform_indices = @transform_0, window_bounds = array<i64: 1024, 32>}, {pipeline_mode = #tpu.pipeline_mode<synchronous>, transform_indices = @transform_1, window_bounds = array<i64: 32, 32>}, {pipeline_mode = #tpu.pipeline_mode<synchronous>, transform_indices = @transform_2, window_bounds = array<i64: 1, 32>}, {transform_indices = @transform_3, window_bounds = array<i64: 1024, 32>}]} {
    %c0 = arith.constant 0 : index
    %c0_0 = arith.constant 0 : index
    %0 = vector.load %arg1[%c0, %c0_0] : memref<1024x32xbf16, #tpu.memory_space<vmem>>, vector<1024x32xbf16>
    %c0_1 = arith.constant 0 : index
    %c0_2 = arith.constant 0 : index
    %1 = vector.load %arg2[%c0_1, %c0_2] : memref<32x32xbf16, #tpu.memory_space<vmem>>, vector<32x32xbf16>
    %cst = arith.constant dense<0.000000e+00> : vector<1024x32xf32>
    %2 = tpu.matmul %0, %1, %cst {dimension_numbers = #tpu.dot_dimension_numbers<[1], [0], [0], [1], [0, 0, 1, 1], [], []>} : vector<1024x32xbf16>, vector<32x32xbf16>, vector<1024x32xf32> -> vector<1024x32xf32>
    %c0_3 = arith.constant 0 : index
    %c0_4 = arith.constant 0 : index
    %3 = vector.load %arg3[%c0_3, %c0_4] : memref<1x32xf32, #tpu.memory_space<vmem>>, vector<1x32xf32>
    %4 = vector.broadcast %3 : vector<1x32xf32> to vector<1024x32xf32>
    %5 = arith.addf %2, %4 : vector<1024x32xf32>
    %c0_5 = arith.constant 0 : index
    %c0_6 = arith.constant 0 : index
    %6 = vector.load %arg4[%c0_5, %c0_6] : memref<1024x32xf32, #tpu.memory_space<vmem>>, vector<1024x32xf32>
    tpu.vector_store %arg4[%c0_5, %c0_6], %5 {strides = array<i32>} : memref<1024x32xf32, #tpu.memory_space<vmem>>, vector<1024x32xf32>,
    return
  }
  func.func @transform_0(%arg0: i32) -> (i32, i32) {
    %c0_i32 = arith.constant 0 : i32
    %c0_i32_0 = arith.constant 0 : i32
    return %arg0, %c0_i32 : i32, i32
  }
  func.func @transform_1(%arg0: i32) -> (i32, i32) {
    %c0_i32 = arith.constant 0 : i32
    %c0_i32_0 = arith.constant 0 : i32
    %c0_i32_1 = arith.constant 0 : i32
    return %c0_i32, %c0_i32_0 : i32, i32
  }
  func.func @transform_2(%arg0: i32) -> (i32, i32) {
    %c0_i32 = arith.constant 0 : i32
    %c0_i32_0 = arith.constant 0 : i32
    %c0_i32_1 = arith.constant 0 : i32
    return %c0_i32, %c0_i32_0 : i32, i32
  }
  func.func @transform_3(%arg0: i32) -> (i32, i32) {
    %c0_i32 = arith.constant 0 : i32
    %c0_i32_0 = arith.constant 0 : i32
    return %arg0, %c0_i32 : i32, i32
  }
}

</mosaic_0001>

<llo_original>
// kernel: global_attention_forward.2
$region0: #{global_attention_forward.2}
  #allocation0 [shape = 'u32[]', space=smem, size = 0x4, offset = 0x4, fixed_abs, tag = 'smem constant byte address 0x4 - core index']
  #allocation1 [shape = 'u32[72,128]{1,0:T(1,128)}', space=vmem, size = 0x9000, scoped, tag = 'internal scratch']
  %s0 = inlined_call_operand.vmem [shape: bf16[2,32,32,32], index: 0, kind: input, shape index: {}]
  %s1 = inlined_call_operand.vmem [shape: bf16[32,96], index: 1, kind: input, shape index: {}]
  %s2 = inlined_call_operand.vmem [shape: f32[4,64,64], index: 2, kind: input, shape index: {}]
  %s3 = inlined_call_operand.vmem [shape: f32[2,32,32,32], index: 3, kind: output, shape index: {}]
  %s4 = sld [smem:[#allocation0]]
  $region120: #{global_attention_forward.2} parent=0
    _
  %s6 = ssub.s32 1, %s4
  %s7 = scalar_select 0, %s6, %s4
  $region1: #{global_attention_forward.2} parent=0
    #allocation2 [shape = 'u8[131072]{0}', space=vmem, size = 0x20000, scoped, tag = 'input window, operand 0']
    #allocation3 [shape = 'u8[262144]{0}', space=vmem, size = 0x40000, scoped, tag = 'output window, operand 0']
    loop: start=0, step=1, limit=10
    $region2: #{global_attention_forward.2} parent=1 // loop_pre_header
      _
    $region3: #{global_attention_forward.2} parent=1 // loop_header
      %s9 = sphi 0, %s13
      %p10 = scmp.ge.s32.totalorder %s9, 10
      %s16 = sphi 0, %s35
      %s17 = sphi 0, %s31
      %s18 = sphi 0, %s27
      %s19 = sphi 0, %s16
      %s20 = sphi 0, %s17
      %s21 = sphi 0, %s18
      %s22 = sphi 0, %s19
      %s23 = sphi 0, %s20
      %s24 = sphi 0, %s21
      %s42 = sphi 0, %s44
      %s45 = sphi 0, %s42
      %s46 = sphi 0, %s45
      %s62 = sphi 0, %s46
      %s66 = sphi 0, %s66
      %s68 = sphi 0, %s66
      %s69 = sphi 0, %s68
      %s83 = sphi 0, %s69
      %s87 = sphi 0, %s87
      %s89 = sphi 0, %s87
      %s90 = sphi 0, %s89
      %s104 = sphi 0, %s90
      %s114 = sphi 0, %s116
      %s117 = sphi 0, %s114
      %s118 = sphi 0, %s117
      %s134 = sphi 0, %s118
    $region4: #{global_attention_forward.2} parent=1 // loop_header_branch
      %12 = sbr.rel (%p10) target = $region8
    $region5: #{global_attention_forward.2} parent=1 // loop_body
      %s14 = ssub.s32 %s9, 1
      %s15 = ssub.s32 %s9, 2
      %s25 = sadd.s32 1, %s18
      %p26 = scmp.ge.s32.totalorder %s25, 4
      %s27 = scalar_select %p26, 0, %s25
      %s28 = sadd.s32 1, %s17
      %s29 = scalar_select %p26, %s28, %s17
      %p30 = scmp.ge.s32.totalorder %s29, 1
      %s31 = scalar_select %p30, 0, %s29
      %s32 = sadd.s32 1, %s16
      %s33 = scalar_select %p30, %s32, %s16
      %p34 = scmp.ge.s32.totalorder %s33, 2
      %s35 = scalar_select %p34, 0, %s33
      %s36 = ssub.s32 %s16, %s35
      %s37 = ssub.s32 %s17, %s31
      %s38 = sor.u32 %s36, %s37
      %s39 = ssub.s32 %s18, %s27
      %s40 = sor.u32 %s38, %s39
      %p41 = scmp.eq.s32.totalorder %s40, 0
      %s43 = sadd.s32 %s42, 1
      %s44 = scalar_select %p41, %s42, %s43
      %p47 = pneg %p41
      %p48 = scmp.eq.s32.totalorder %s9, 7
      %p49 = por %p47, %p48
      %p50 = scmp.ne.s32.totalorder %s42, %s45
      %p51 = scmp.eq.s32.totalorder %s9, 0
      %p52 = por %p50, %p51
      %p53 = scmp.ne.s32.totalorder %s42, %s45
      %p54 = scmp.eq.s32.totalorder %s14, 7
      %p55 = por %p53, %p54
      %p56 = scmp.ne.s32.totalorder %s45, %s46
      %p57 = scmp.eq.s32.totalorder %s14, 0
      %p58 = por %p56, %p57
      %p59 = scmp.ne.s32.totalorder %s45, %s46
      %p60 = scmp.eq.s32.totalorder %s15, 7
      %p61 = por %p59, %p60
      %p63 = scmp.ne.s32.totalorder %s46, %s62
      %p64 = scmp.eq.s32.totalorder %s15, 0
      %p65 = por %p63, %p64
      %s67 = sadd.s32 %s66, 1
      %p70 = scmp.eq.s32.totalorder %s9, 7
      %p71 = scmp.ne.s32.totalorder %s66, %s68
      %p72 = scmp.eq.s32.totalorder %s9, 0
      %p73 = por %p71, %p72
      %p74 = scmp.ne.s32.totalorder %s66, %s68
      %p75 = scmp.eq.s32.totalorder %s14, 7
      %p76 = por %p74, %p75
      %p77 = scmp.ne.s32.totalorder %s68, %s69
      %p78 = scmp.eq.s32.totalorder %s14, 0
      %p79 = por %p77, %p78
      %p80 = scmp.ne.s32.totalorder %s68, %s69
      %p81 = scmp.eq.s32.totalorder %s15, 7
      %p82 = por %p80, %p81
      %p84 = scmp.ne.s32.totalorder %s69, %s83
      %p85 = scmp.eq.s32.totalorder %s15, 0
      %p86 = por %p84, %p85
      %s88 = sadd.s32 %s87, 1
      %p91 = scmp.eq.s32.totalorder %s9, 7
      %p92 = scmp.ne.s32.totalorder %s87, %s89
      %p93 = scmp.eq.s32.totalorder %s9, 0
      %p94 = por %p92, %p93
      %p95 = scmp.ne.s32.totalorder %s87, %s89
      %p96 = scmp.eq.s32.totalorder %s14, 7
      %p97 = por %p95, %p96
      %p98 = scmp.ne.s32.totalorder %s89, %s90
      %p99 = scmp.eq.s32.totalorder %s14, 0
      %p100 = por %p98, %p99
      %p101 = scmp.ne.s32.totalorder %s89, %s90
      %p102 = scmp.eq.s32.totalorder %s15, 7
      %p103 = por %p101, %p102
      %p105 = scmp.ne.s32.totalorder %s90, %s104
      %p106 = scmp.eq.s32.totalorder %s15, 0
      %p107 = por %p105, %p106
      %s108 = ssub.s32 %s16, %s35
      %s109 = ssub.s32 %s17, %s31
      %s110 = sor.u32 %s108, %s109
      %s111 = ssub.s32 %s18, %s27
      %s112 = sor.u32 %s110, %s111
      %p113 = scmp.eq.s32.totalorder %s112, 0
      %s115 = sadd.s32 %s114, 1
      %s116 = scalar_select %p113, %s114, %s115
      %p119 = pneg %p113
      %p120 = scmp.eq.s32.totalorder %s9, 7
      %p121 = por %p119, %p120
      %p122 = scmp.ne.s32.totalorder %s114, %s117
      %p123 = scmp.eq.s32.totalorder %s9, 0
      %p124 = por %p122, %p123
      %p125 = scmp.ne.s32.totalorder %s114, %s117
      %p126 = scmp.eq.s32.totalorder %s14, 7
      %p127 = por %p125, %p126
      %p128 = scmp.ne.s32.totalorder %s117, %s118
      %p129 = scmp.eq.s32.totalorder %s14, 0
      %p130 = por %p128, %p129
      %p131 = scmp.ne.s32.totalorder %s117, %s118
      %p132 = scmp.eq.s32.totalorder %s15, 7
      %p133 = por %p131, %p132
      %p135 = scmp.ne.s32.totalorder %s118, %s134
      %p136 = scmp.eq.s32.totalorder %s15, 0
      %p137 = por %p135, %p136
      %p138 = scmp.le.s32.totalorder 1, %s9
      %p139 = scmp.lt.s32.totalorder %s9, 9
      %p140 = pnand %p138, %p139
      %p141 = pneg %p140
      // Predicated region
      $region9: #{global_attention_forward.2} parent=5 // pred_check
        _
      $region10: #{global_attention_forward.2} parent=5 // pred_check_branch
        %143 = sbr.rel (%p140) target = $region12
      $region11: #{global_attention_forward.2} parent=5 // pred_region
        %s144 = ssub.s32 %s9, 1
        // Predicated region
        $region13: #{global_attention_forward.2} parent=11 // pred_check
          %p145 = pneg %p79
        $region14: #{global_attention_forward.2} parent=11 // pred_check_branch
          %147 = sbr.rel (%p145) target = $region16
        $region15: #{global_attention_forward.2} parent=11 // pred_region
          _
        $region16: #{global_attention_forward.2} parent=11 // pred_fallthru
          _
        // Predicated region
        $region17: #{global_attention_forward.2} parent=11 // pred_check
          %p148 = pneg %p100
        $region18: #{global_attention_forward.2} parent=11 // pred_check_branch
          %150 = sbr.rel (%p148) target = $region20
        $region19: #{global_attention_forward.2} parent=11 // pred_region
          _
        $region20: #{global_attention_forward.2} parent=11 // pred_fallthru
          _
      $region12: #{global_attention_forward.2} parent=5 // pred_fallthru
        _
      %p151 = scmp.lt.s32.totalorder %s9, 8
      // Predicated region
      $region21: #{global_attention_forward.2} parent=5 // pred_check
        %p152 = pneg %p151
      $region22: #{global_attention_forward.2} parent=5 // pred_check_branch
        %154 = sbr.rel (%p152) target = $region24
      $region23: #{global_attention_forward.2} parent=5 // pred_region
        // Predicated region
        $region25: #{global_attention_forward.2} parent=23 // pred_check
          %p155 = pneg %p52
        $region26: #{global_attention_forward.2} parent=23 // pred_check_branch
          %157 = sbr.rel (%p155) target = $region28
        $region27: #{global_attention_forward.2} parent=23 // pred_region
          %s158 = sand.u32 %s42, 1
          %s159 = sand.u32 %s42, 1
          %s160 = smul.addr %s159, 128
          %s161 = scalar_lea.vmem [#allocation2], %s160
          %s162 = smul.u32 32, %s17
          %s163 = smul.addr %s162, 4
          %s164 = sadd.s32 %s18, %s163
          %s165 = smul.addr %s16, 128
          %s166 = sadd.s32 %s164, %s165
          %s167 = smul.addr %s166, 4
          %s168 = scalar_lea.vmem %s0, %s167
          // Predicated region
          $region29: #{global_attention_forward.2} parent=27 // pred_check
            _
          $region30: #{global_attention_forward.2} parent=27 // pred_check_branch
            %170 = sbr.rel (0) target = $region32
          $region31: #{global_attention_forward.2} parent=27 // pred_region
            // Predicated region
            $region33: #{global_attention_forward.2} parent=31 // pred_check
              _
            $region34: #{global_attention_forward.2} parent=31 // pred_check_branch
              %172 = sbr.rel target = $region36
            $region35: #{global_attention_forward.2} parent=31 // pred_region
              // Predicated region
              $region48: #{global_attention_forward.2} parent=35 // pred_check
                _
              $region49: #{global_attention_forward.2} parent=35 // pred_check_branch
                %250 = sbr.rel (0) target = $region51
              $region50: #{global_attention_forward.2} parent=35 // pred_region
                loop: start=0, step=1, limit=1
                $region52: #{global_attention_forward.2} parent=50 // loop_pre_header
                  _
                $region53: #{global_attention_forward.2} parent=50 // loop_header
                  %s252 = sphi 0, %s256
                  %p253 = scmp.ge.s32.totalorder %s252, 1
                  %s257 = sphi %s168, %s168
                  %s258 = sphi %s161, %s161
                $region54: #{global_attention_forward.2} parent=50 // loop_header_branch
                  %255 = sbr.rel (%p253) target = $region58
                $region55: #{global_attention_forward.2} parent=50 // loop_body
                  _
                $region56: #{global_attention_forward.2} parent=50 // loop_footer
                  %s256 = sadd.s32 1, %s252
                $region57: #{global_attention_forward.2} parent=50 // loop_footer_branch
                  %251 = sbr.rel target = $region53
                $region58: #{global_attention_forward.2} parent=50 // loop_exit
                  _
                %s260 = ssub.s32 16, 1
                loop: start=0, step=1, limit=1
                $region59: #{global_attention_forward.2} parent=50 // loop_pre_header
                  _
                $region60: #{global_attention_forward.2} parent=50 // loop_header
                  %s262 = sphi 0, %s266
                  %p263 = scmp.ge.s32.totalorder %s262, 1
                  %s267 = sphi %s168, %s168
                  %s268 = sphi %s161, %s161
                $region61: #{global_attention_forward.2} parent=50 // loop_header_branch
                  %265 = sbr.rel (%p263) target = $region65
                $region62: #{global_attention_forward.2} parent=50 // loop_body
                  %v269 = vld [vmem:[%s267] sm:%s260]
                  %270 = vst [vmem:[%s268] sm:%s260] %v269
                  %v271 = vld [vmem:[%s267 + $0x10] sm:%s260]
                  %272 = vst [vmem:[%s268 + $0x4] sm:%s260] %v271
                  %v273 = vld [vmem:[%s267 + $0x20] sm:%s260]
                  %274 = vst [vmem:[%s268 + $0x8] sm:%s260] %v273
                  %v275 = vld [vmem:[%s267 + $0x30] sm:%s260]
                  %276 = vst [vmem:[%s268 + $0xc] sm:%s260] %v275
                  %v277 = vld [vmem:[%s267 + $0x40] sm:%s260]
                  %278 = vst [vmem:[%s268 + $0x10] sm:%s260] %v277
                  %v279 = vld [vmem:[%s267 + $0x50] sm:%s260]
                  %280 = vst [vmem:[%s268 + $0x14] sm:%s260] %v279
                  %v281 = vld [vmem:[%s267 + $0x60] sm:%s260]
                  %282 = vst [vmem:[%s268 + $0x18] sm:%s260] %v281
                  %v283 = vld [vmem:[%s267 + $0x70] sm:%s260]
                  %284 = vst [vmem:[%s268 + $0x1c] sm:%s260] %v283
                  %v285 = vld [vmem:[%s267 + $0x80] sm:%s260]
                  %286 = vst [vmem:[%s268 + $0x20] sm:%s260] %v285
                  %v287 = vld [vmem:[%s267 + $0x90] sm:%s260]
                  %288 = vst [vmem:[%s268 + $0x24] sm:%s260] %v287
                  %v289 = vld [vmem:[%s267 + $0xa0] sm:%s260]
                  %290 = vst [vmem:[%s268 + $0x28] sm:%s260] %v289
                  %v291 = vld [vmem:[%s267 + $0xb0] sm:%s260]
                  %292 = vst [vmem:[%s268 + $0x2c] sm:%s260] %v291
                  %v293 = vld [vmem:[%s267 + $0xc0] sm:%s260]
                  %294 = vst [vmem:[%s268 + $0x30] sm:%s260] %v293
                  %v295 = vld [vmem:[%s267 + $0xd0] sm:%s260]
                  %296 = vst [vmem:[%s268 + $0x34] sm:%s260] %v295
                  %v297 = vld [vmem:[%s267 + $0xe0] sm:%s260]
                  %298 = vst [vmem:[%s268 + $0x38] sm:%s260] %v297
                  %v299 = vld [vmem:[%s267 + $0xf0] sm:%s260]
                  %300 = vst [vmem:[%s268 + $0x3c] sm:%s260] %v299
                  %v301 = vld [vmem:[%s267 + $0x100] sm:%s260]
                  %302 = vst [vmem:[%s268 + $0x40] sm:%s260] %v301
                  %v303 = vld [vmem:[%s267 + $0x110] sm:%s260]
                  %304 = vst [vmem:[%s268 + $0x44] sm:%s260] %v303
                  %v305 = vld [vmem:[%s267 + $0x120] sm:%s260]
                  %306 = vst [vmem:[%s268 + $0x48] sm:%s260] %v305
                  %v307 = vld [vmem:[%s267 + $0x130] sm:%s260]
                  %308 = vst [vmem:[%s268 + $0x4c] sm:%s260] %v307
                  %v309 = vld [vmem:[%s267 + $0x140] sm:%s260]
                  %310 = vst [vmem:[%s268 + $0x50] sm:%s260] %v309
                  %v311 = vld [vmem:[%s267 + $0x150] sm:%s260]
                  %312 = vst [vmem:[%s268 + $0x54] sm:%s260] %v311
                  %v313 = vld [vmem:[%s267 + $0x160] sm:%s260]
                  %314 = vst [vmem:[%s268 + $0x58] sm:%s260] %v313
                  %v315 = vld [vmem:[%s267 + $0x170] sm:%s260]
                  %316 = vst [vmem:[%s268 + $0x5c] sm:%s260] %v315
                  %v317 = vld [vmem:[%s267 + $0x180] sm:%s260]
                  %318 = vst [vmem:[%s268 + $0x60] sm:%s260] %v317
                  %v319 = vld [vmem:[%s267 + $0x190] sm:%s260]
                  %320 = vst [vmem:[%s268 + $0x64] sm:%s260] %v319
                  %v321 = vld [vmem:[%s267 + $0x1a0] sm:%s260]
                  %322 = vst [vmem:[%s268 + $0x68] sm:%s260] %v321
                  %v323 = vld [vmem:[%s267 + $0x1b0] sm:%s260]
                  %324 = vst [vmem:[%s268 + $0x6c] sm:%s260] %v323
                  %v325 = vld [vmem:[%s267 + $0x1c0] sm:%s260]
                  %326 = vst [vmem:[%s268 + $0x70] sm:%s260] %v325
                  %v327 = vld [vmem:[%s267 + $0x1d0] sm:%s260]
                  %328 = vst [vmem:[%s268 + $0x74] sm:%s260] %v327
                  %v329 = vld [vmem:[%s267 + $0x1e0] sm:%s260]
                  %330 = vst [vmem:[%s268 + $0x78] sm:%s260] %v329
                  %v331 = vld [vmem:[%s267 + $0x1f0] sm:%s260]
                  %332 = vst [vmem:[%s268 + $0x7c] sm:%s260] %v331
                $region63: #{global_attention_forward.2} parent=50 // loop_footer
                  %s266 = sadd.s32 1, %s262
                $region64: #{global_attention_forward.2} parent=50 // loop_footer_branch
                  %261 = sbr.rel target = $region60
                $region65: #{global_attention_forward.2} parent=50 // loop_exit
                  _
              $region51: #{global_attention_forward.2} parent=35 // pred_fallthru
                _
            $region36: #{global_attention_forward.2} parent=31 // pred_fallthru
              _
            // Predicated region
            $region37: #{global_attention_forward.2} parent=31 // pred_check
              _
            $region38: #{global_attention_forward.2} parent=31 // pred_check_branch
              %174 = sbr.rel (0) target = $region40
            $region39: #{global_attention_forward.2} parent=31 // pred_region
              %s176 = ssub.s32 16, 1
              loop: start=0, step=1, limit=1
              $region41: #{global_attention_forward.2} parent=39 // loop_pre_header
                _
              $region42: #{global_attention_forward.2} parent=39 // loop_header
                %s178 = sphi 0, %s182
                %p179 = scmp.ge.s32.totalorder %s178, 1
                %s183 = sphi %s168, %s168
                %s184 = sphi %s161, %s161
              $region43: #{global_attention_forward.2} parent=39 // loop_header_branch
                %181 = sbr.rel (%p179) target = $region47
              $region44: #{global_attention_forward.2} parent=39 // loop_body
                %v185 = vld [vmem:[%s183] sm:%s176]
                %186 = vst [vmem:[%s184] sm:%s176] %v185
                %v187 = vld [vmem:[%s183 + $0x10] sm:%s176]
                %188 = vst [vmem:[%s184 + $0x4] sm:%s176] %v187
                %v189 = vld [vmem:[%s183 + $0x20] sm:%s176]
                %190 = vst [vmem:[%s184 + $0x8] sm:%s176] %v189
                %v191 = vld [vmem:[%s183 + $0x30] sm:%s176]
                %192 = vst [vmem:[%s184 + $0xc] sm:%s176] %v191
                %v193 = vld [vmem:[%s183 + $0x40] sm:%s176]
                %194 = vst [vmem:[%s184 + $0x10] sm:%s176] %v193
                %v195 = vld [vmem:[%s183 + $0x50] sm:%s176]
                %196 = vst [vmem:[%s184 + $0x14] sm:%s176] %v195
                %v197 = vld [vmem:[%s183 + $0x60] sm:%s176]
                %198 = vst [vmem:[%s184 + $0x18] sm:%s176] %v197
                %v199 = vld [vmem:[%s183 + $0x70] sm:%s176]
                %200 = vst [vmem:[%s184 + $0x1c] sm:%s176] %v199
                %v201 = vld [vmem:[%s183 + $0x80] sm:%s176]
                %202 = vst [vmem:[%s184 + $0x20] sm:%s176] %v201
                %v203 = vld [vmem:[%s183 + $0x90] sm:%s176]
                %204 = vst [vmem:[%s184 + $0x24] sm:%s176] %v203
                %v205 = vld [vmem:[%s183 + $0xa0] sm:%s176]
                %206 = vst [vmem:[%s184 + $0x28] sm:%s176] %v205
                %v207 = vld [vmem:[%s183 + $0xb0] sm:%s176]
                %208 = vst [vmem:[%s184 + $0x2c] sm:%s176] %v207
                %v209 = vld [vmem:[%s183 + $0xc0] sm:%s176]
                %210 = vst [vmem:[%s184 + $0x30] sm:%s176] %v209
                %v211 = vld [vmem:[%s183 + $0xd0] sm:%s176]
                %212 = vst [vmem:[%s184 + $0x34] sm:%s176] %v211
                %v213 = vld [vmem:[%s183 + $0xe0] sm:%s176]
                %214 = vst [vmem:[%s184 + $0x38] sm:%s176] %v213
                %v215 = vld [vmem:[%s183 + $0xf0] sm:%s176]
                %216 = vst [vmem:[%s184 + $0x3c] sm:%s176] %v215
                %v217 = vld [vmem:[%s183 + $0x100] sm:%s176]
                %218 = vst [vmem:[%s184 + $0x40] sm:%s176] %v217
                %v219 = vld [vmem:[%s183 + $0x110] sm:%s176]
                %220 = vst [vmem:[%s184 + $0x44] sm:%s176] %v219
                %v221 = vld [vmem:[%s183 + $0x120] sm:%s176]
                %222 = vst [vmem:[%s184 + $0x48] sm:%s176] %v221
                %v223 = vld [vmem:[%s183 + $0x130] sm:%s176]
                %224 = vst [vmem:[%s184 + $0x4c] sm:%s176] %v223
                %v225 = vld [vmem:[%s183 + $0x140] sm:%s176]
                %226 = vst [vmem:[%s184 + $0x50] sm:%s176] %v225
                %v227 = vld [vmem:[%s183 + $0x150] sm:%s176]
                %228 = vst [vmem:[%s184 + $0x54] sm:%s176] %v227
                %v229 = vld [vmem:[%s183 + $0x160] sm:%s176]
                %230 = vst [vmem:[%s184 + $0x58] sm:%s176] %v229
                %v231 = vld [vmem:[%s183 + $0x170] sm:%s176]
                %232 = vst [vmem:[%s184 + $0x5c] sm:%s176] %v231
                %v233 = vld [vmem:[%s183 + $0x180] sm:%s176]
                %234 = vst [vmem:[%s184 + $0x60] sm:%s176] %v233
                %v235 = vld [vmem:[%s183 + $0x190] sm:%s176]
                %236 = vst [vmem:[%s184 + $0x64] sm:%s176] %v235
                %v237 = vld [vmem:[%s183 + $0x1a0] sm:%s176]
                %238 = vst [vmem:[%s184 + $0x68] sm:%s176] %v237
                %v239 = vld [vmem:[%s183 + $0x1b0] sm:%s176]
                %240 = vst [vmem:[%s184 + $0x6c] sm:%s176] %v239
                %v241 = vld [vmem:[%s183 + $0x1c0] sm:%s176]
                %242 = vst [vmem:[%s184 + $0x70] sm:%s176] %v241
                %v243 = vld [vmem:[%s183 + $0x1d0] sm:%s176]
                %244 = vst [vmem:[%s184 + $0x74] sm:%s176] %v243
                %v245 = vld [vmem:[%s183 + $0x1e0] sm:%s176]
                %246 = vst [vmem:[%s184 + $0x78] sm:%s176] %v245
                %v247 = vld [vmem:[%s183 + $0x1f0] sm:%s176]
                %248 = vst [vmem:[%s184 + $0x7c] sm:%s176] %v247
              $region45: #{global_attention_forward.2} parent=39 // loop_footer
                %s182 = sadd.s32 1, %s178
              $region46: #{global_attention_forward.2} parent=39 // loop_footer_branch
                %177 = sbr.rel target = $region42
              $region47: #{global_attention_forward.2} parent=39 // loop_exit
                _
            $region40: #{global_attention_forward.2} parent=31 // pred_fallthru
              _
          $region32: #{global_attention_forward.2} parent=27 // pred_fallthru
            _
          %333 = vnop
        $region28: #{global_attention_forward.2} parent=23 // pred_fallthru
          _
      $region24: #{global_attention_forward.2} parent=5 // pred_fallthru
        _
      %p334 = scmp.le.s32.totalorder 1, %s9
      %p335 = scmp.lt.s32.totalorder %s9, 9
      %p336 = pnand %p334, %p335
      %p337 = pneg %p336
      // Predicated region
      $region66: #{global_attention_forward.2} parent=5 // pred_check
        _
      $region67: #{global_attention_forward.2} parent=5 // pred_check_branch
        %339 = sbr.rel (%p336) target = $region69
      $region68: #{global_attention_forward.2} parent=5 // pred_region
        %s340 = ssub.s32 %s9, 1
        %s341 = sand.u32 %s45, 1
        %s342 = sand.u32 %s45, 1
        %s343 = smul.addr %s342, 128
        %s344 = scalar_lea.vmem [#allocation2], %s343
        // Predicated region
        $region70: #{global_attention_forward.2} parent=68 // pred_check
          %p345 = pneg %p58
        $region71: #{global_attention_forward.2} parent=68 // pred_check_branch
          %347 = sbr.rel (%p345) target = $region73
        $region72: #{global_attention_forward.2} parent=68 // pred_region
          _
        $region73: #{global_attention_forward.2} parent=68 // pred_fallthru
          _
        %s348 = sand.u32 %s45, 1
        %s349 = sand.u32 %s45, 1
        %s350 = smul.addr %s349, 128
        %s351 = scalar_lea.vmem [#allocation2], %s350
        %p352 = pneg %p58
        %p353 = pneg %p55
        %p354 = pneg %p79
        %p355 = pneg %p76
        %p356 = pneg %p100
        %p357 = pneg %p97
        %p358 = pneg %p130
        %p359 = pneg %p127
        %s360 = sand.u32 %s117, 1
        %s361 = sand.u32 %s117, 1
        %s362 = smul.addr %s361, 256
        %s363 = scalar_lea.vmem [#allocation3], %s362
        %s364 = smul.u32 32, %s20
        %s365 = smul.u32 32, %s20
        %v367 = vld [vmem:[%s344] sm:$0xf]
        %v368 = vld [vmem:[%s344 + $0x4] sm:$0xf]
        %v369 = vld [vmem:[%s344 + $0x8] sm:$0xf]
        %v370 = vld [vmem:[%s344 + $0xc] sm:$0xf]
        %v371 = vld [vmem:[%s344 + $0x10] sm:$0xf]
        %v372 = vld [vmem:[%s344 + $0x14] sm:$0xf]
        %v373 = vld [vmem:[%s344 + $0x18] sm:$0xf]
        %v374 = vld [vmem:[%s344 + $0x1c] sm:$0xf]
        %v375 = vld [vmem:[%s344 + $0x20] sm:$0xf]
        %v376 = vld [vmem:[%s344 + $0x24] sm:$0xf]
        %v377 = vld [vmem:[%s344 + $0x28] sm:$0xf]
        %v378 = vld [vmem:[%s344 + $0x2c] sm:$0xf]
        %v379 = vld [vmem:[%s344 + $0x30] sm:$0xf]
        %v380 = vld [vmem:[%s344 + $0x34] sm:$0xf]
        %v381 = vld [vmem:[%s344 + $0x38] sm:$0xf]
        %v382 = vld [vmem:[%s344 + $0x3c] sm:$0xf]
        %v383 = vld [vmem:[%s344 + $0x40] sm:$0xf]
        %v384 = vld [vmem:[%s344 + $0x44] sm:$0xf]
        %v385 = vld [vmem:[%s344 + $0x48] sm:$0xf]
        %v386 = vld [vmem:[%s344 + $0x4c] sm:$0xf]
        %v387 = vld [vmem:[%s344 + $0x50] sm:$0xf]
        %v388 = vld [vmem:[%s344 + $0x54] sm:$0xf]
        %v389 = vld [vmem:[%s344 + $0x58] sm:$0xf]
        %v390 = vld [vmem:[%s344 + $0x5c] sm:$0xf]
        %v391 = vld [vmem:[%s344 + $0x60] sm:$0xf]
        %v392 = vld [vmem:[%s344 + $0x64] sm:$0xf]
        %v393 = vld [vmem:[%s344 + $0x68] sm:$0xf]
        %v394 = vld [vmem:[%s344 + $0x6c] sm:$0xf]
        %v395 = vld [vmem:[%s344 + $0x70] sm:$0xf]
        %v396 = vld [vmem:[%s344 + $0x74] sm:$0xf]
        %v397 = vld [vmem:[%s344 + $0x78] sm:$0xf]
        %v398 = vld [vmem:[%s344 + $0x7c] sm:$0xf]
        %v399 = vld [vmem:[%s1] sm:$0xf]
        %v400 = vld [vmem:[%s1 + $0x4] sm:$0xf]
        %v401 = vld [vmem:[%s1 + $0x8] sm:$0xf]
        %v402 = vld [vmem:[%s1 + $0xc] sm:$0xf]
        %v435 = vunpack.c.l.b16 %v367
        %v436 = vunpack.c.l.b16 %v368
        %v437 = vunpack.c.l.b16 %v369
        %v438 = vunpack.c.l.b16 %v370
        %v439 = vunpack.c.l.b16 %v371
        %v440 = vunpack.c.l.b16 %v372
        %v441 = vunpack.c.l.b16 %v373
        %v442 = vunpack.c.l.b16 %v374
        %v443 = vunpack.c.l.b16 %v375
        %v444 = vunpack.c.l.b16 %v376
        %v445 = vunpack.c.l.b16 %v377
        %v446 = vunpack.c.l.b16 %v378
        %v447 = vunpack.c.l.b16 %v379
        %v448 = vunpack.c.l.b16 %v380
        %v449 = vunpack.c.l.b16 %v381
        %v450 = vunpack.c.l.b16 %v382
        %v451 = vunpack.c.l.b16 %v383
        %v452 = vunpack.c.l.b16 %v384
        %v453 = vunpack.c.l.b16 %v385
        %v454 = vunpack.c.l.b16 %v386
        %v455 = vunpack.c.l.b16 %v387
        %v456 = vunpack.c.l.b16 %v388
        %v457 = vunpack.c.l.b16 %v389
        %v458 = vunpack.c.l.b16 %v390
        %v459 = vunpack.c.l.b16 %v391
        %v460 = vunpack.c.l.b16 %v392
        %v461 = vunpack.c.l.b16 %v393
        %v462 = vunpack.c.l.b16 %v394
        %v463 = vunpack.c.l.b16 %v395
        %v464 = vunpack.c.l.b16 %v396
        %v465 = vunpack.c.l.b16 %v397
        %v466 = vunpack.c.l.b16 %v398
        %v467 = vpack.c.b16 %v436, %v435
        %v468 = vpack.c.b16 %v438, %v437
        %v469 = vpack.c.b16 %v440, %v439
        %v470 = vpack.c.b16 %v442, %v441
        %v471 = vpack.c.b16 %v444, %v443
        %v472 = vpack.c.b16 %v446, %v445
        %v473 = vpack.c.b16 %v448, %v447
        %v474 = vpack.c.b16 %v450, %v449
        %v475 = vpack.c.b16 %v452, %v451
        %v476 = vpack.c.b16 %v454, %v453
        %v477 = vpack.c.b16 %v456, %v455
        %v478 = vpack.c.b16 %v458, %v457
        %v479 = vpack.c.b16 %v460, %v459
        %v480 = vpack.c.b16 %v462, %v461
        %v481 = vpack.c.b16 %v464, %v463
        %v482 = vpack.c.b16 %v466, %v465
        %v487 = vunpack.c.l.b16 %v399
        %v488 = vunpack.c.l.b16 %v400
        %v489 = vunpack.c.l.b16 %v401
        %v490 = vunpack.c.l.b16 %v402
        %v491 = vpack.c.b16 %v488, %v487
        %v492 = vpack.c.b16 %v490, %v489
        %vm495 = vcmask 261120
        %v497 = vsel %vm495, %v467, 0
        %v500 = vsel %vm495, %v468, 0
        %v503 = vsel %vm495, %v469, 0
        %v506 = vsel %vm495, %v470, 0
        %v509 = vsel %vm495, %v471, 0
        %v512 = vsel %vm495, %v472, 0
        %v515 = vsel %vm495, %v473, 0
        %v518 = vsel %vm495, %v474, 0
        %v521 = vsel %vm495, %v475, 0
        %v524 = vsel %vm495, %v476, 0
        %v527 = vsel %vm495, %v477, 0
        %v530 = vsel %vm495, %v478, 0
        %v533 = vsel %vm495, %v479, 0
        %v536 = vsel %vm495, %v480, 0
        %v539 = vsel %vm495, %v481, 0
        %v542 = vsel %vm495, %v482, 0
        %544 = vmatpush.bf16.msra.mxu0 0
        %545 = vmatpush.bf16.msra.mxu0 0
        %546 = vmatpush.bf16.msra.mxu0 0
        %547 = vmatpush.bf16.msra.mxu0 0
        %548 = vmatpush.bf16.msra.mxu0 0
        %549 = vmatpush.bf16.msra.mxu0 0
        %550 = vmatpush.bf16.msra.mxu0 %v492
        %551 = vmatpush.bf16.msra.mxu0 %v491
        %552 = vmatmul.bf16.gmra.mxu0 %v497
        %v553 = vpop.f32.mrf.mxu0
        %v554 = vadd.f32 0.0, %v553
        %v555 = vpop.f32.mrf.mxu0
        %v556 = vadd.f32 0.0, %v555
        %557 = vmatmul.bf16.gmra.mxu0 %v500
        %v558 = vpop.f32.mrf.mxu0
        %v559 = vadd.f32 0.0, %v558
        %v560 = vpop.f32.mrf.mxu0
        %v561 = vadd.f32 0.0, %v560
        %562 = vmatmul.bf16.gmra.mxu0 %v503
        %v563 = vpop.f32.mrf.mxu0
        %v564 = vadd.f32 0.0, %v563
        %v565 = vpop.f32.mrf.mxu0
        %v566 = vadd.f32 0.0, %v565
        %567 = vmatmul.bf16.gmra.mxu0 %v506
        %v568 = vpop.f32.mrf.mxu0
        %v569 = vadd.f32 0.0, %v568
        %v570 = vpop.f32.mrf.mxu0
        %v571 = vadd.f32 0.0, %v570
        %572 = vmatmul.bf16.gmra.mxu0 %v509
        %v573 = vpop.f32.mrf.mxu0
        %v574 = vadd.f32 0.0, %v573
        %v575 = vpop.f32.mrf.mxu0
        %v576 = vadd.f32 0.0, %v575
        %577 = vmatmul.bf16.gmra.mxu0 %v512
        %v578 = vpop.f32.mrf.mxu0
        %v579 = vadd.f32 0.0, %v578
        %v580 = vpop.f32.mrf.mxu0
        %v581 = vadd.f32 0.0, %v580
        %582 = vmatmul.bf16.gmra.mxu0 %v515
        %v583 = vpop.f32.mrf.mxu0
        %v584 = vadd.f32 0.0, %v583
        %v585 = vpop.f32.mrf.mxu0
        %v586 = vadd.f32 0.0, %v585
        %587 = vmatmul.bf16.gmra.mxu0 %v518
        %v588 = vpop.f32.mrf.mxu0
        %v589 = vadd.f32 0.0, %v588
        %v590 = vpop.f32.mrf.mxu0
        %v591 = vadd.f32 0.0, %v590
        %592 = vmatmul.bf16.gmra.mxu0 %v521
        %v593 = vpop.f32.mrf.mxu0
        %v594 = vadd.f32 0.0, %v593
        %v595 = vpop.f32.mrf.mxu0
        %v596 = vadd.f32 0.0, %v595
        %597 = vmatmul.bf16.gmra.mxu0 %v524
        %v598 = vpop.f32.mrf.mxu0
        %v599 = vadd.f32 0.0, %v598
        %v600 = vpop.f32.mrf.mxu0
        %v601 = vadd.f32 0.0, %v600
        %602 = vmatmul.bf16.gmra.mxu0 %v527
        %v603 = vpop.f32.mrf.mxu0
        %v604 = vadd.f32 0.0, %v603
        %v605 = vpop.f32.mrf.mxu0
        %v606 = vadd.f32 0.0, %v605
        %607 = vmatmul.bf16.gmra.mxu0 %v530
        %v608 = vpop.f32.mrf.mxu0
        %v609 = vadd.f32 0.0, %v608
        %v610 = vpop.f32.mrf.mxu0
        %v611 = vadd.f32 0.0, %v610
        %612 = vmatmul.bf16.gmra.mxu0 %v533
        %v613 = vpop.f32.mrf.mxu0
        %v614 = vadd.f32 0.0, %v613
        %v615 = vpop.f32.mrf.mxu0
        %v616 = vadd.f32 0.0, %v615
        %617 = vmatmul.bf16.gmra.mxu0 %v536
        %v618 = vpop.f32.mrf.mxu0
        %v619 = vadd.f32 0.0, %v618
        %v620 = vpop.f32.mrf.mxu0
        %v621 = vadd.f32 0.0, %v620
        %622 = vmatmul.bf16.gmra.mxu0 %v539
        %v623 = vpop.f32.mrf.mxu0
        %v624 = vadd.f32 0.0, %v623
        %v625 = vpop.f32.mrf.mxu0
        %v626 = vadd.f32 0.0, %v625
        %627 = vmatmul.bf16.gmra.mxu0 %v542
        %v628 = vpop.f32.mrf.mxu0
        %v629 = vadd.f32 0.0, %v628
        %v630 = vpop.f32.mrf.mxu0
        %v631 = vadd.f32 0.0, %v630
        %632 = vdwg.mxu0
        %v633 = vpack.c.bf16 %v554, %v554
        %v634 = vpack.c.bf16 %v556, %v556
        %v635 = vpack.c.bf16 %v559, %v559
        %v636 = vpack.c.bf16 %v561, %v561
        %v637 = vpack.c.bf16 %v564, %v564
        %v638 = vpack.c.bf16 %v566, %v566
        %v639 = vpack.c.bf16 %v569, %v569
        %v640 = vpack.c.bf16 %v571, %v571
        %v641 = vpack.c.bf16 %v574, %v574
        %v642 = vpack.c.bf16 %v576, %v576
        %v643 = vpack.c.bf16 %v579, %v579
        %v644 = vpack.c.bf16 %v581, %v581
        %v645 = vpack.c.bf16 %v584, %v584
        %v646 = vpack.c.bf16 %v586, %v586
        %v647 = vpack.c.bf16 %v589, %v589
        %v648 = vpack.c.bf16 %v591, %v591
        %v649 = vpack.c.bf16 %v594, %v594
        %v650 = vpack.c.bf16 %v596, %v596
        %v651 = vpack.c.bf16 %v599, %v599
        %v652 = vpack.c.bf16 %v601, %v601
        %v653 = vpack.c.bf16 %v604, %v604
        %v654 = vpack.c.bf16 %v606, %v606
        %v655 = vpack.c.bf16 %v609, %v609
        %v656 = vpack.c.bf16 %v611, %v611
        %v657 = vpack.c.bf16 %v614, %v614
        %v658 = vpack.c.bf16 %v616, %v616
        %v659 = vpack.c.bf16 %v619, %v619
        %v660 = vpack.c.bf16 %v621, %v621
        %v661 = vpack.c.bf16 %v624, %v624
        %v662 = vpack.c.bf16 %v626, %v626
        %v663 = vpack.c.bf16 %v629, %v629
        %v664 = vpack.c.bf16 %v631, %v631
        %v665 = vld [vmem:[%s2] sm:$0xff]
        %v666 = vld [vmem:[%s2 + $0x8] sm:$0xff]
        %v667 = vld [vmem:[%s2 + $0x10] sm:$0xff]
        %v668 = vld [vmem:[%s2 + $0x18] sm:$0xff]
        %v669 = vld [vmem:[%s2 + $0x20] sm:$0xff]
        %v670 = vld [vmem:[%s2 + $0x28] sm:$0xff]
        %v671 = vld [vmem:[%s2 + $0x30] sm:$0xff]
        %v672 = vld [vmem:[%s2 + $0x38] sm:$0xff]
        %v673 = vld [vmem:[%s2 + $0x40] sm:$0xff]
        %v674 = vld [vmem:[%s2 + $0x48] sm:$0xff]
        %v675 = vld [vmem:[%s2 + $0x50] sm:$0xff]
        %v676 = vld [vmem:[%s2 + $0x58] sm:$0xff]
        %v677 = vld [vmem:[%s2 + $0x60] sm:$0xff]
        %v678 = vld [vmem:[%s2 + $0x68] sm:$0xff]
        %v679 = vld [vmem:[%s2 + $0x70] sm:$0xff]
        %v680 = vld [vmem:[%s2 + $0x78] sm:$0xff]
        %v681 = vld [vmem:[%s2 + $0x80] sm:$0xff]
        %v682 = vld [vmem:[%s2 + $0x88] sm:$0xff]
        %v683 = vld [vmem:[%s2 + $0x90] sm:$0xff]
        %v684 = vld [vmem:[%s2 + $0x98] sm:$0xff]
        %v685 = vld [vmem:[%s2 + $0xa0] sm:$0xff]
        %v686 = vld [vmem:[%s2 + $0xa8] sm:$0xff]
        %v687 = vld [vmem:[%s2 + $0xb0] sm:$0xff]
        %v688 = vld [vmem:[%s2 + $0xb8] sm:$0xff]
        %v689 = vld [vmem:[%s2 + $0xc0] sm:$0xff]
        %v690 = vld [vmem:[%s2 + $0xc8] sm:$0xff]
        %v691 = vld [vmem:[%s2 + $0xd0] sm:$0xff]
        %v692 = vld [vmem:[%s2 + $0xd8] sm:$0xff]
        %v693 = vld [vmem:[%s2 + $0xe0] sm:$0xff]
        %v694 = vld [vmem:[%s2 + $0xe8] sm:$0xff]
        %v695 = vld [vmem:[%s2 + $0xf0] sm:$0xff]
        %v696 = vld [vmem:[%s2 + $0xf8] sm:$0xff]
        %v705 = vunpack.c.l.b16 %v633
        %v706 = vunpack.c.l.b16 %v634
        %v707 = vunpack.c.l.b16 %v635
        %v708 = vunpack.c.l.b16 %v636
        %v709 = vunpack.c.l.b16 %v637
        %v710 = vunpack.c.l.b16 %v638
        %v711 = vunpack.c.l.b16 %v639
        %v712 = vunpack.c.l.b16 %v640
        %v713 = vpack.c.b16 %v706, %v705
        %v714 = vpack.c.b16 %v708, %v707
        %v715 = vpack.c.b16 %v710, %v709
        %v716 = vpack.c.b16 %v712, %v711
        %717 = vrot.lane.b32.xlu0 %v713, 96
        %v718 = vpop.permute.xlu0 %717
        %719 = vrot.lane.b32.xlu0 %v714, 96
        %v720 = vpop.permute.xlu0 %719
        %721 = vrot.lane.b32.xlu0 %v715, 96
        %v722 = vpop.permute.xlu0 %721
        %723 = vrot.lane.b32.xlu0 %v716, 96
        %v724 = vpop.permute.xlu0 %723
        %vm725 = vcmask 64512
        %v727 = vsel %vm725, %v713, 0
        %v730 = vsel %vm725, %v714, 0
        %v733 = vsel %vm725, %v715, 0
        %v736 = vsel %vm725, %v716, 0
        %v739 = vsel %vm725, %v718, 0
        %v742 = vsel %vm725, %v720, 0
        %v745 = vsel %vm725, %v722, 0
        %v748 = vsel %vm725, %v724, 0
        %750 = vmatpush.bf16.xpose.msra.mxu0 0
        %751 = vmatpush.bf16.xpose.msra.mxu0 0
        %752 = vmatpush.bf16.xpose.msra.mxu0 0
        %753 = vmatpush.bf16.xpose.msra.mxu0 0
        %754 = vmatpush.bf16.xpose.msra.mxu0 %v748
        %755 = vmatpush.bf16.xpose.msra.mxu0 %v745
        %756 = vmatpush.bf16.xpose.msra.mxu0 %v742
        %757 = vmatpush.bf16.xpose.msra.mxu0 %v739
        %758 = vmatmul.bf16.gmra.mxu0 %v727
        %v759 = vpop.f32.mrf.mxu0
        %v760 = vadd.f32 %v665, %v759
        %v761 = vpop.f32.mrf.mxu0
        %v762 = vadd.f32 %v666, %v761
        %763 = vmatmul.bf16.gmra.mxu0 %v730
        %v764 = vpop.f32.mrf.mxu0
        %v765 = vadd.f32 %v667, %v764
        %v766 = vpop.f32.mrf.mxu0
        %v767 = vadd.f32 %v668, %v766
        %768 = vmatmul.bf16.gmra.mxu0 %v733
        %v769 = vpop.f32.mrf.mxu0
        %v770 = vadd.f32 %v669, %v769
        %v771 = vpop.f32.mrf.mxu0
        %v772 = vadd.f32 %v670, %v771
        %773 = vmatmul.bf16.gmra.mxu0 %v736
        %v774 = vpop.f32.mrf.mxu0
        %v775 = vadd.f32 %v671, %v774
        %v776 = vpop.f32.mrf.mxu0
        %v777 = vadd.f32 %v672, %v776
        %778 = vdwg.mxu0
        %v787 = vunpack.c.l.b16 %v641
        %v788 = vunpack.c.l.b16 %v642
        %v789 = vunpack.c.l.b16 %v643
        %v790 = vunpack.c.l.b16 %v644
        %v791 = vunpack.c.l.b16 %v645
        %v792 = vunpack.c.l.b16 %v646
        %v793 = vunpack.c.l.b16 %v647
        %v794 = vunpack.c.l.b16 %v648
        %v795 = vpack.c.b16 %v788, %v787
        %v796 = vpack.c.b16 %v790, %v789
        %v797 = vpack.c.b16 %v792, %v791
        %v798 = vpack.c.b16 %v794, %v793
        %799 = vrot.lane.b32.xlu0 %v795, 96
        %v800 = vpop.permute.xlu0 %799
        %801 = vrot.lane.b32.xlu0 %v796, 96
        %v802 = vpop.permute.xlu0 %801
        %803 = vrot.lane.b32.xlu0 %v797, 96
        %v804 = vpop.permute.xlu0 %803
        %805 = vrot.lane.b32.xlu0 %v798, 96
        %v806 = vpop.permute.xlu0 %805
        %v808 = vsel %vm725, %v795, 0
        %v811 = vsel %vm725, %v796, 0
        %v814 = vsel %vm725, %v797, 0
        %v817 = vsel %vm725, %v798, 0
        %v820 = vsel %vm725, %v800, 0
        %v823 = vsel %vm725, %v802, 0
        %v826 = vsel %vm725, %v804, 0
        %v829 = vsel %vm725, %v806, 0
        %831 = vmatpush.bf16.xpose.msra.mxu0 0
        %832 = vmatpush.bf16.xpose.msra.mxu0 0
        %833 = vmatpush.bf16.xpose.msra.mxu0 0
        %834 = vmatpush.bf16.xpose.msra.mxu0 0
        %835 = vmatpush.bf16.xpose.msra.mxu0 %v829
        %836 = vmatpush.bf16.xpose.msra.mxu0 %v826
        %837 = vmatpush.bf16.xpose.msra.mxu0 %v823
        %838 = vmatpush.bf16.xpose.msra.mxu0 %v820
        %839 = vmatmul.bf16.gmra.mxu0 %v808
        %v840 = vpop.f32.mrf.mxu0
        %v841 = vadd.f32 %v665, %v840
        %v842 = vpop.f32.mrf.mxu0
        %v843 = vadd.f32 %v666, %v842
        %844 = vmatmul.bf16.gmra.mxu0 %v811
        %v845 = vpop.f32.mrf.mxu0
        %v846 = vadd.f32 %v667, %v845
        %v847 = vpop.f32.mrf.mxu0
        %v848 = vadd.f32 %v668, %v847
        %849 = vmatmul.bf16.gmra.mxu0 %v814
        %v850 = vpop.f32.mrf.mxu0
        %v851 = vadd.f32 %v669, %v850
        %v852 = vpop.f32.mrf.mxu0
        %v853 = vadd.f32 %v670, %v852
        %854 = vmatmul.bf16.gmra.mxu0 %v817
        %v855 = vpop.f32.mrf.mxu0
        %v856 = vadd.f32 %v671, %v855
        %v857 = vpop.f32.mrf.mxu0
        %v858 = vadd.f32 %v672, %v857
        %859 = vdwg.mxu0
        %v868 = vunpack.c.l.b16 %v649
        %v869 = vunpack.c.l.b16 %v650
        %v870 = vunpack.c.l.b16 %v651
        %v871 = vunpack.c.l.b16 %v652
        %v872 = vunpack.c.l.b16 %v653
        %v873 = vunpack.c.l.b16 %v654
        %v874 = vunpack.c.l.b16 %v655
        %v875 = vunpack.c.l.b16 %v656
        %v876 = vpack.c.b16 %v869, %v868
        %v877 = vpack.c.b16 %v871, %v870
        %v878 = vpack.c.b16 %v873, %v872
        %v879 = vpack.c.b16 %v875, %v874
        %880 = vrot.lane.b32.xlu0 %v876, 96
        %v881 = vpop.permute.xlu0 %880
        %882 = vrot.lane.b32.xlu0 %v877, 96
        %v883 = vpop.permute.xlu0 %882
        %884 = vrot.lane.b32.xlu0 %v878, 96
        %v885 = vpop.permute.xlu0 %884
        %886 = vrot.lane.b32.xlu0 %v879, 96
        %v887 = vpop.permute.xlu0 %886
        %v889 = vsel %vm725, %v876, 0
        %v892 = vsel %vm725, %v877, 0
        %v895 = vsel %vm725, %v878, 0
        %v898 = vsel %vm725, %v879, 0
        %v901 = vsel %vm725, %v881, 0
        %v904 = vsel %vm725, %v883, 0
        %v907 = vsel %vm725, %v885, 0
        %v910 = vsel %vm725, %v887, 0
        %912 = vmatpush.bf16.xpose.msra.mxu0 0
        %913 = vmatpush.bf16.xpose.msra.mxu0 0
        %914 = vmatpush.bf16.xpose.msra.mxu0 0
        %915 = vmatpush.bf16.xpose.msra.mxu0 0
        %916 = vmatpush.bf16.xpose.msra.mxu0 %v910
        %917 = vmatpush.bf16.xpose.msra.mxu0 %v907
        %918 = vmatpush.bf16.xpose.msra.mxu0 %v904
        %919 = vmatpush.bf16.xpose.msra.mxu0 %v901
        %920 = vmatmul.bf16.gmra.mxu0 %v889
        %v921 = vpop.f32.mrf.mxu0
        %v922 = vadd.f32 %v665, %v921
        %v923 = vpop.f32.mrf.mxu0
        %v924 = vadd.f32 %v666, %v923
        %925 = vmatmul.bf16.gmra.mxu0 %v892
        %v926 = vpop.f32.mrf.mxu0
        %v927 = vadd.f32 %v667, %v926
        %v928 = vpop.f32.mrf.mxu0
        %v929 = vadd.f32 %v668, %v928
        %930 = vmatmul.bf16.gmra.mxu0 %v895
        %v931 = vpop.f32.mrf.mxu0
        %v932 = vadd.f32 %v669, %v931
        %v933 = vpop.f32.mrf.mxu0
        %v934 = vadd.f32 %v670, %v933
        %935 = vmatmul.bf16.gmra.mxu0 %v898
        %v936 = vpop.f32.mrf.mxu0
        %v937 = vadd.f32 %v671, %v936
        %v938 = vpop.f32.mrf.mxu0
        %v939 = vadd.f32 %v672, %v938
        %940 = vdwg.mxu0
        %v949 = vunpack.c.l.b16 %v657
        %v950 = vunpack.c.l.b16 %v658
        %v951 = vunpack.c.l.b16 %v659
        %v952 = vunpack.c.l.b16 %v660
        %v953 = vunpack.c.l.b16 %v661
        %v954 = vunpack.c.l.b16 %v662
        %v955 = vunpack.c.l.b16 %v663
        %v956 = vunpack.c.l.b16 %v664
        %v957 = vpack.c.b16 %v950, %v949
        %v958 = vpack.c.b16 %v952, %v951
        %v959 = vpack.c.b16 %v954, %v953
        %v960 = vpack.c.b16 %v956, %v955
        %961 = vrot.lane.b32.xlu0 %v957, 96
        %v962 = vpop.permute.xlu0 %961
        %963 = vrot.lane.b32.xlu0 %v958, 96
        %v964 = vpop.permute.xlu0 %963
        %965 = vrot.lane.b32.xlu0 %v959, 96
        %v966 = vpop.permute.xlu0 %965
        %967 = vrot.lane.b32.xlu0 %v960, 96
        %v968 = vpop.permute.xlu0 %967
        %v970 = vsel %vm725, %v957, 0
        %v973 = vsel %vm725, %v958, 0
        %v976 = vsel %vm725, %v959, 0
        %v979 = vsel %vm725, %v960, 0
        %v982 = vsel %vm725, %v962, 0
        %v985 = vsel %vm725, %v964, 0
        %v988 = vsel %vm725, %v966, 0
        %v991 = vsel %vm725, %v968, 0
        %993 = vmatpush.bf16.xpose.msra.mxu0 0
        %994 = vmatpush.bf16.xpose.msra.mxu0 0
        %995 = vmatpush.bf16.xpose.msra.mxu0 0
        %996 = vmatpush.bf16.xpose.msra.mxu0 0
        %997 = vmatpush.bf16.xpose.msra.mxu0 %v991
        %998 = vmatpush.bf16.xpose.msra.mxu0 %v988
        %999 = vmatpush.bf16.xpose.msra.mxu0 %v985
        %1000 = vmatpush.bf16.xpose.msra.mxu0 %v982
        %1001 = vmatmul.bf16.gmra.mxu0 %v970
        %v1002 = vpop.f32.mrf.mxu0
        %v1003 = vadd.f32 %v665, %v1002
        %v1004 = vpop.f32.mrf.mxu0
        %v1005 = vadd.f32 %v666, %v1004
        %1006 = vmatmul.bf16.gmra.mxu0 %v973
        %v1007 = vpop.f32.mrf.mxu0
        %v1008 = vadd.f32 %v667, %v1007
        %v1009 = vpop.f32.mrf.mxu0
        %v1010 = vadd.f32 %v668, %v1009
        %1011 = vmatmul.bf16.gmra.mxu0 %v976
        %v1012 = vpop.f32.mrf.mxu0
        %v1013 = vadd.f32 %v669, %v1012
        %v1014 = vpop.f32.mrf.mxu0
        %v1015 = vadd.f32 %v670, %v1014
        %1016 = vmatmul.bf16.gmra.mxu0 %v979
        %v1017 = vpop.f32.mrf.mxu0
        %v1018 = vadd.f32 %v671, %v1017
        %v1019 = vpop.f32.mrf.mxu0
        %v1020 = vadd.f32 %v672, %v1019
        %1021 = vdwg.mxu0
        %vm1022 = vcmask 523264
        %v1023 = vsel %vm1022, %v760, -inf
        %1024 = vmax.xlane.f32.xlu0 %v1023
        %v1025 = vpop.xlane.xlu0 %1024
        %v1026 = vsel %vm1022, %v762, -inf
        %1027 = vmax.xlane.f32.xlu0 %v1026
        %v1028 = vpop.xlane.xlu0 %1027
        %v1029 = vsel %vm1022, %v765, -inf
        %1030 = vmax.xlane.f32.xlu0 %v1029
        %v1031 = vpop.xlane.xlu0 %1030
        %v1032 = vsel %vm1022, %v767, -inf
        %1033 = vmax.xlane.f32.xlu0 %v1032
        %v1034 = vpop.xlane.xlu0 %1033
        %v1035 = vsel %vm1022, %v770, -inf
        %1036 = vmax.xlane.f32.xlu0 %v1035
        %v1037 = vpop.xlane.xlu0 %1036
        %v1038 = vsel %vm1022, %v772, -inf
        %1039 = vmax.xlane.f32.xlu0 %v1038
        %v1040 = vpop.xlane.xlu0 %1039
        %v1041 = vsel %vm1022, %v775, -inf
        %1042 = vmax.xlane.f32.xlu0 %v1041
        %v1043 = vpop.xlane.xlu0 %1042
        %v1044 = vsel %vm1022, %v777, -inf
        %1045 = vmax.xlane.f32.xlu0 %v1044
        %v1046 = vpop.xlane.xlu0 %1045
        %v1047 = vsel %vm1022, %v841, -inf
        %1048 = vmax.xlane.f32.xlu0 %v1047
        %v1049 = vpop.xlane.xlu0 %1048
        %v1050 = vsel %vm1022, %v843, -inf
        %1051 = vmax.xlane.f32.xlu0 %v1050
        %v1052 = vpop.xlane.xlu0 %1051
        %v1053 = vsel %vm1022, %v846, -inf
        %1054 = vmax.xlane.f32.xlu0 %v1053
        %v1055 = vpop.xlane.xlu0 %1054
        %v1056 = vsel %vm1022, %v848, -inf
        %1057 = vmax.xlane.f32.xlu0 %v1056
        %v1058 = vpop.xlane.xlu0 %1057
        %v1059 = vsel %vm1022, %v851, -inf
        %1060 = vmax.xlane.f32.xlu0 %v1059
        %v1061 = vpop.xlane.xlu0 %1060
        %v1062 = vsel %vm1022, %v853, -inf
        %1063 = vmax.xlane.f32.xlu0 %v1062
        %v1064 = vpop.xlane.xlu0 %1063
        %v1065 = vsel %vm1022, %v856, -inf
        %1066 = vmax.xlane.f32.xlu0 %v1065
        %v1067 = vpop.xlane.xlu0 %1066
        %v1068 = vsel %vm1022, %v858, -inf
        %1069 = vmax.xlane.f32.xlu0 %v1068
        %v1070 = vpop.xlane.xlu0 %1069
        %v1071 = vsel %vm1022, %v922, -inf
        %1072 = vmax.xlane.f32.xlu0 %v1071
        %v1073 = vpop.xlane.xlu0 %1072
        %v1074 = vsel %vm1022, %v924, -inf
        %1075 = vmax.xlane.f32.xlu0 %v1074
        %v1076 = vpop.xlane.xlu0 %1075
        %v1077 = vsel %vm1022, %v927, -inf
        %1078 = vmax.xlane.f32.xlu0 %v1077
        %v1079 = vpop.xlane.xlu0 %1078
        %v1080 = vsel %vm1022, %v929, -inf
        %1081 = vmax.xlane.f32.xlu0 %v1080
        %v1082 = vpop.xlane.xlu0 %1081
        %v1083 = vsel %vm1022, %v932, -inf
        %1084 = vmax.xlane.f32.xlu0 %v1083
        %v1085 = vpop.xlane.xlu0 %1084
        %v1086 = vsel %vm1022, %v934, -inf
        %1087 = vmax.xlane.f32.xlu0 %v1086
        %v1088 = vpop.xlane.xlu0 %1087
        %v1089 = vsel %vm1022, %v937, -inf
        %1090 = vmax.xlane.f32.xlu0 %v1089
        %v1091 = vpop.xlane.xlu0 %1090
        %v1092 = vsel %vm1022, %v939, -inf
        %1093 = vmax.xlane.f32.xlu0 %v1092
        %v1094 = vpop.xlane.xlu0 %1093
        %v1095 = vsel %vm1022, %v1003, -inf
        %1096 = vmax.xlane.f32.xlu0 %v1095
        %v1097 = vpop.xlane.xlu0 %1096
        %v1098 = vsel %vm1022, %v1005, -inf
        %1099 = vmax.xlane.f32.xlu0 %v1098
        %v1100 = vpop.xlane.xlu0 %1099
        %v1101 = vsel %vm1022, %v1008, -inf
        %1102 = vmax.xlane.f32.xlu0 %v1101
        %v1103 = vpop.xlane.xlu0 %1102
        %v1104 = vsel %vm1022, %v1010, -inf
        %1105 = vmax.xlane.f32.xlu0 %v1104
        %v1106 = vpop.xlane.xlu0 %1105
        %v1107 = vsel %vm1022, %v1013, -inf
        %1108 = vmax.xlane.f32.xlu0 %v1107
        %v1109 = vpop.xlane.xlu0 %1108
        %v1110 = vsel %vm1022, %v1015, -inf
        %1111 = vmax.xlane.f32.xlu0 %v1110
        %v1112 = vpop.xlane.xlu0 %1111
        %v1113 = vsel %vm1022, %v1018, -inf
        %1114 = vmax.xlane.f32.xlu0 %v1113
        %v1115 = vpop.xlane.xlu0 %1114
        %v1116 = vsel %vm1022, %v1020, -inf
        %1117 = vmax.xlane.f32.xlu0 %v1116
        %v1118 = vpop.xlane.xlu0 %1117
        %v1119 = vsub.f32 %v760, %v1025
        %v1120 = vsub.f32 %v762, %v1028
        %v1121 = vsub.f32 %v765, %v1031
        %v1122 = vsub.f32 %v767, %v1034
        %v1123 = vsub.f32 %v770, %v1037
        %v1124 = vsub.f32 %v772, %v1040
        %v1125 = vsub.f32 %v775, %v1043
        %v1126 = vsub.f32 %v777, %v1046
        %v1127 = vsub.f32 %v841, %v1049
        %v1128 = vsub.f32 %v843, %v1052
        %v1129 = vsub.f32 %v846, %v1055
        %v1130 = vsub.f32 %v848, %v1058
        %v1131 = vsub.f32 %v851, %v1061
        %v1132 = vsub.f32 %v853, %v1064
        %v1133 = vsub.f32 %v856, %v1067
        %v1134 = vsub.f32 %v858, %v1070
        %v1135 = vsub.f32 %v922, %v1073
        %v1136 = vsub.f32 %v924, %v1076
        %v1137 = vsub.f32 %v927, %v1079
        %v1138 = vsub.f32 %v929, %v1082
        %v1139 = vsub.f32 %v932, %v1085
        %v1140 = vsub.f32 %v934, %v1088
        %v1141 = vsub.f32 %v937, %v1091
        %v1142 = vsub.f32 %v939, %v1094
        %v1143 = vsub.f32 %v1003, %v1097
        %v1144 = vsub.f32 %v1005, %v1100
        %v1145 = vsub.f32 %v1008, %v1103
        %v1146 = vsub.f32 %v1010, %v1106
        %v1147 = vsub.f32 %v1013, %v1109
        %v1148 = vsub.f32 %v1015, %v1112
        %v1149 = vsub.f32 %v1018, %v1115
        %v1150 = vsub.f32 %v1020, %v1118
        %v1151 = vmul.f32 %v1119, 1.442695
        %v1152 = vpow.pop %v1151
        %v1153 = vmul.f32 %v1120, 1.442695
        %v1154 = vpow.pop %v1153
        %v1155 = vmul.f32 %v1121, 1.442695
        %v1156 = vpow.pop %v1155
        %v1157 = vmul.f32 %v1122, 1.442695
        %v1158 = vpow.pop %v1157
        %v1159 = vmul.f32 %v1123, 1.442695
        %v1160 = vpow.pop %v1159
        %v1161 = vmul.f32 %v1124, 1.442695
        %v1162 = vpow.pop %v1161
        %v1163 = vmul.f32 %v1125, 1.442695
        %v1164 = vpow.pop %v1163
        %v1165 = vmul.f32 %v1126, 1.442695
        %v1166 = vpow.pop %v1165
        %v1167 = vmul.f32 %v1127, 1.442695
        %v1168 = vpow.pop %v1167
        %v1169 = vmul.f32 %v1128, 1.442695
        %v1170 = vpow.pop %v1169
        %v1171 = vmul.f32 %v1129, 1.442695
        %v1172 = vpow.pop %v1171
        %v1173 = vmul.f32 %v1130, 1.442695
        %v1174 = vpow.pop %v1173
        %v1175 = vmul.f32 %v1131, 1.442695
        %v1176 = vpow.pop %v1175
        %v1177 = vmul.f32 %v1132, 1.442695
        %v1178 = vpow.pop %v1177
        %v1179 = vmul.f32 %v1133, 1.442695
        %v1180 = vpow.pop %v1179
        %v1181 = vmul.f32 %v1134, 1.442695
        %v1182 = vpow.pop %v1181
        %v1183 = vmul.f32 %v1135, 1.442695
        %v1184 = vpow.pop %v1183
        %v1185 = vmul.f32 %v1136, 1.442695
        %v1186 = vpow.pop %v1185
        %v1187 = vmul.f32 %v1137, 1.442695
        %v1188 = vpow.pop %v1187
        %v1189 = vmul.f32 %v1138, 1.442695
        %v1190 = vpow.pop %v1189
        %v1191 = vmul.f32 %v1139, 1.442695
        %v1192 = vpow.pop %v1191
        %v1193 = vmul.f32 %v1140, 1.442695
        %v1194 = vpow.pop %v1193
        %v1195 = vmul.f32 %v1141, 1.442695
        %v1196 = vpow.pop %v1195
        %v1197 = vmul.f32 %v1142, 1.442695
        %v1198 = vpow.pop %v1197
        %v1199 = vmul.f32 %v1143, 1.442695
        %v1200 = vpow.pop %v1199
        %v1201 = vmul.f32 %v1144, 1.442695
        %v1202 = vpow.pop %v1201
        %v1203 = vmul.f32 %v1145, 1.442695
        %v1204 = vpow.pop %v1203
        %v1205 = vmul.f32 %v1146, 1.442695
        %v1206 = vpow.pop %v1205
        %v1207 = vmul.f32 %v1147, 1.442695
        %v1208 = vpow.pop %v1207
        %v1209 = vmul.f32 %v1148, 1.442695
        %v1210 = vpow.pop %v1209
        %v1211 = vmul.f32 %v1149, 1.442695
        %v1212 = vpow.pop %v1211
        %v1213 = vmul.f32 %v1150, 1.442695
        %v1214 = vpow.pop %v1213
        %v1215 = vsel %vm1022, %v1152, 0.0
        %1216 = vadd.xlane.f32.xlu0 %v1215
        %v1217 = vpop.xlane.xlu0 %1216
        %v1218 = vsel %vm1022, %v1154, 0.0
        %1219 = vadd.xlane.f32.xlu0 %v1218
        %v1220 = vpop.xlane.xlu0 %1219
        %v1221 = vsel %vm1022, %v1156, 0.0
        %1222 = vadd.xlane.f32.xlu0 %v1221
        %v1223 = vpop.xlane.xlu0 %1222
        %v1224 = vsel %vm1022, %v1158, 0.0
        %1225 = vadd.xlane.f32.xlu0 %v1224
        %v1226 = vpop.xlane.xlu0 %1225
        %v1227 = vsel %vm1022, %v1160, 0.0
        %1228 = vadd.xlane.f32.xlu0 %v1227
        %v1229 = vpop.xlane.xlu0 %1228
        %v1230 = vsel %vm1022, %v1162, 0.0
        %1231 = vadd.xlane.f32.xlu0 %v1230
        %v1232 = vpop.xlane.xlu0 %1231
        %v1233 = vsel %vm1022, %v1164, 0.0
        %1234 = vadd.xlane.f32.xlu0 %v1233
        %v1235 = vpop.xlane.xlu0 %1234
        %v1236 = vsel %vm1022, %v1166, 0.0
        %1237 = vadd.xlane.f32.xlu0 %v1236
        %v1238 = vpop.xlane.xlu0 %1237
        %v1239 = vsel %vm1022, %v1168, 0.0
        %1240 = vadd.xlane.f32.xlu0 %v1239
        %v1241 = vpop.xlane.xlu0 %1240
        %v1242 = vsel %vm1022, %v1170, 0.0
        %1243 = vadd.xlane.f32.xlu0 %v1242
        %v1244 = vpop.xlane.xlu0 %1243
        %v1245 = vsel %vm1022, %v1172, 0.0
        %1246 = vadd.xlane.f32.xlu0 %v1245
        %v1247 = vpop.xlane.xlu0 %1246
        %v1248 = vsel %vm1022, %v1174, 0.0
        %1249 = vadd.xlane.f32.xlu0 %v1248
        %v1250 = vpop.xlane.xlu0 %1249
        %v1251 = vsel %vm1022, %v1176, 0.0
        %1252 = vadd.xlane.f32.xlu0 %v1251
        %v1253 = vpop.xlane.xlu0 %1252
        %v1254 = vsel %vm1022, %v1178, 0.0
        %1255 = vadd.xlane.f32.xlu0 %v1254
        %v1256 = vpop.xlane.xlu0 %1255
        %v1257 = vsel %vm1022, %v1180, 0.0
        %1258 = vadd.xlane.f32.xlu0 %v1257
        %v1259 = vpop.xlane.xlu0 %1258
        %v1260 = vsel %vm1022, %v1182, 0.0
        %1261 = vadd.xlane.f32.xlu0 %v1260
        %v1262 = vpop.xlane.xlu0 %1261
        %v1263 = vsel %vm1022, %v1184, 0.0
        %1264 = vadd.xlane.f32.xlu0 %v1263
        %v1265 = vpop.xlane.xlu0 %1264
        %v1266 = vsel %vm1022, %v1186, 0.0
        %1267 = vadd.xlane.f32.xlu0 %v1266
        %v1268 = vpop.xlane.xlu0 %1267
        %v1269 = vsel %vm1022, %v1188, 0.0
        %1270 = vadd.xlane.f32.xlu0 %v1269
        %v1271 = vpop.xlane.xlu0 %1270
        %v1272 = vsel %vm1022, %v1190, 0.0
        %1273 = vadd.xlane.f32.xlu0 %v1272
        %v1274 = vpop.xlane.xlu0 %1273
        %v1275 = vsel %vm1022, %v1192, 0.0
        %1276 = vadd.xlane.f32.xlu0 %v1275
        %v1277 = vpop.xlane.xlu0 %1276
        %v1278 = vsel %vm1022, %v1194, 0.0
        %1279 = vadd.xlane.f32.xlu0 %v1278
        %v1280 = vpop.xlane.xlu0 %1279
        %v1281 = vsel %vm1022, %v1196, 0.0
        %1282 = vadd.xlane.f32.xlu0 %v1281
        %v1283 = vpop.xlane.xlu0 %1282
        %v1284 = vsel %vm1022, %v1198, 0.0
        %1285 = vadd.xlane.f32.xlu0 %v1284
        %v1286 = vpop.xlane.xlu0 %1285
        %v1287 = vsel %vm1022, %v1200, 0.0
        %1288 = vadd.xlane.f32.xlu0 %v1287
        %v1289 = vpop.xlane.xlu0 %1288
        %v1290 = vsel %vm1022, %v1202, 0.0
        %1291 = vadd.xlane.f32.xlu0 %v1290
        %v1292 = vpop.xlane.xlu0 %1291
        %v1293 = vsel %vm1022, %v1204, 0.0
        %1294 = vadd.xlane.f32.xlu0 %v1293
        %v1295 = vpop.xlane.xlu0 %1294
        %v1296 = vsel %vm1022, %v1206, 0.0
        %1297 = vadd.xlane.f32.xlu0 %v1296
        %v1298 = vpop.xlane.xlu0 %1297
        %v1299 = vsel %vm1022, %v1208, 0.0
        %1300 = vadd.xlane.f32.xlu0 %v1299
        %v1301 = vpop.xlane.xlu0 %1300
        %v1302 = vsel %vm1022, %v1210, 0.0
        %1303 = vadd.xlane.f32.xlu0 %v1302
        %v1304 = vpop.xlane.xlu0 %1303
        %v1305 = vsel %vm1022, %v1212, 0.0
        %1306 = vadd.xlane.f32.xlu0 %v1305
        %v1307 = vpop.xlane.xlu0 %1306
        %v1308 = vsel %vm1022, %v1214, 0.0
        %1309 = vadd.xlane.f32.xlu0 %v1308
        %v1310 = vpop.xlane.xlu0 %1309
        %v1311 = vrcp.pop %v1217
        %v1312 = vrcp.pop %v1220
        %v1313 = vrcp.pop %v1223
        %v1314 = vrcp.pop %v1226
        %v1315 = vrcp.pop %v1229
        %v1316 = vrcp.pop %v1232
        %v1317 = vrcp.pop %v1235
        %v1318 = vrcp.pop %v1238
        %v1319 = vrcp.pop %v1241
        %v1320 = vrcp.pop %v1244
        %v1321 = vrcp.pop %v1247
        %v1322 = vrcp.pop %v1250
        %v1323 = vrcp.pop %v1253
        %v1324 = vrcp.pop %v1256
        %v1325 = vrcp.pop %v1259
        %v1326 = vrcp.pop %v1262
        %v1327 = vrcp.pop %v1265
        %v1328 = vrcp.pop %v1268
        %v1329 = vrcp.pop %v1271
        %v1330 = vrcp.pop %v1274
        %v1331 = vrcp.pop %v1277
        %v1332 = vrcp.pop %v1280
        %v1333 = vrcp.pop %v1283
        %v1334 = vrcp.pop %v1286
        %v1335 = vrcp.pop %v1289
        %v1336 = vrcp.pop %v1292
        %v1337 = vrcp.pop %v1295
        %v1338 = vrcp.pop %v1298
        %v1339 = vrcp.pop %v1301
        %v1340 = vrcp.pop %v1304
        %v1341 = vrcp.pop %v1307
        %v1342 = vrcp.pop %v1310
        %v1343 = vmul.f32 %v1152, %v1311
        %v1344 = vmul.f32 %v1154, %v1312
        %v1345 = vmul.f32 %v1156, %v1313
        %v1346 = vmul.f32 %v1158, %v1314
        %v1347 = vmul.f32 %v1160, %v1315
        %v1348 = vmul.f32 %v1162, %v1316
        %v1349 = vmul.f32 %v1164, %v1317
        %v1350 = vmul.f32 %v1166, %v1318
        %v1351 = vmul.f32 %v1168, %v1319
        %v1352 = vmul.f32 %v1170, %v1320
        %v1353 = vmul.f32 %v1172, %v1321
        %v1354 = vmul.f32 %v1174, %v1322
        %v1355 = vmul.f32 %v1176, %v1323
        %v1356 = vmul.f32 %v1178, %v1324
        %v1357 = vmul.f32 %v1180, %v1325
        %v1358 = vmul.f32 %v1182, %v1326
        %v1359 = vmul.f32 %v1184, %v1327
        %v1360 = vmul.f32 %v1186, %v1328
        %v1361 = vmul.f32 %v1188, %v1329
        %v1362 = vmul.f32 %v1190, %v1330
        %v1363 = vmul.f32 %v1192, %v1331
        %v1364 = vmul.f32 %v1194, %v1332
        %v1365 = vmul.f32 %v1196, %v1333
        %v1366 = vmul.f32 %v1198, %v1334
        %v1367 = vmul.f32 %v1200, %v1335
        %v1368 = vmul.f32 %v1202, %v1336
        %v1369 = vmul.f32 %v1204, %v1337
        %v1370 = vmul.f32 %v1206, %v1338
        %v1371 = vmul.f32 %v1208, %v1339
        %v1372 = vmul.f32 %v1210, %v1340
        %v1373 = vmul.f32 %v1212, %v1341
        %v1374 = vmul.f32 %v1214, %v1342
        %v1375 = vpack.c.bf16 %v1343, %v1343
        %v1376 = vpack.c.bf16 %v1344, %v1344
        %v1377 = vpack.c.bf16 %v1345, %v1345
        %v1378 = vpack.c.bf16 %v1346, %v1346
        %v1379 = vpack.c.bf16 %v1347, %v1347
        %v1380 = vpack.c.bf16 %v1348, %v1348
        %v1381 = vpack.c.bf16 %v1349, %v1349
        %v1382 = vpack.c.bf16 %v1350, %v1350
        %v1383 = vpack.c.bf16 %v1351, %v1351
        %v1384 = vpack.c.bf16 %v1352, %v1352
        %v1385 = vpack.c.bf16 %v1353, %v1353
        %v1386 = vpack.c.bf16 %v1354, %v1354
        %v1387 = vpack.c.bf16 %v1355, %v1355
        %v1388 = vpack.c.bf16 %v1356, %v1356
        %v1389 = vpack.c.bf16 %v1357, %v1357
        %v1390 = vpack.c.bf16 %v1358, %v1358
        %v1391 = vpack.c.bf16 %v1359, %v1359
        %v1392 = vpack.c.bf16 %v1360, %v1360
        %v1393 = vpack.c.bf16 %v1361, %v1361
        %v1394 = vpack.c.bf16 %v1362, %v1362
        %v1395 = vpack.c.bf16 %v1363, %v1363
        %v1396 = vpack.c.bf16 %v1364, %v1364
        %v1397 = vpack.c.bf16 %v1365, %v1365
        %v1398 = vpack.c.bf16 %v1366, %v1366
        %v1399 = vpack.c.bf16 %v1367, %v1367
        %v1400 = vpack.c.bf16 %v1368, %v1368
        %v1401 = vpack.c.bf16 %v1369, %v1369
        %v1402 = vpack.c.bf16 %v1370, %v1370
        %v1403 = vpack.c.bf16 %v1371, %v1371
        %v1404 = vpack.c.bf16 %v1372, %v1372
        %v1405 = vpack.c.bf16 %v1373, %v1373
        %v1406 = vpack.c.bf16 %v1374, %v1374
        %v1415 = vunpack.c.l.b16 %v1375
        %v1416 = vunpack.c.l.b16 %v1376
        %v1417 = vunpack.c.l.b16 %v1377
        %v1418 = vunpack.c.l.b16 %v1378
        %v1419 = vunpack.c.l.b16 %v1379
        %v1420 = vunpack.c.l.b16 %v1380
        %v1421 = vunpack.c.l.b16 %v1381
        %v1422 = vunpack.c.l.b16 %v1382
        %v1423 = vpack.c.b16 %v1416, %v1415
        %v1424 = vpack.c.b16 %v1418, %v1417
        %v1425 = vpack.c.b16 %v1420, %v1419
        %v1426 = vpack.c.b16 %v1422, %v1421
        %1427 = vrot.lane.b32.xlu0 %v713, 64
        %v1428 = vpop.permute.xlu0 %1427
        %1429 = vrot.lane.b32.xlu0 %v714, 64
        %v1430 = vpop.permute.xlu0 %1429
        %1431 = vrot.lane.b32.xlu0 %v715, 64
        %v1432 = vpop.permute.xlu0 %1431
        %1433 = vrot.lane.b32.xlu0 %v716, 64
        %v1434 = vpop.permute.xlu0 %1433
        %v1440 = vsel %vm1022, %v1423, 0
        %v1443 = vsel %vm1022, %v1424, 0
        %v1446 = vsel %vm1022, %v1425, 0
        %v1449 = vsel %vm1022, %v1426, 0
        %1451 = vmatpush.bf16.msra.mxu0 0
        %1452 = vmatpush.bf16.msra.mxu0 0
        %1453 = vmatpush.bf16.msra.mxu0 0
        %1454 = vmatpush.bf16.msra.mxu0 0
        %1455 = vmatpush.bf16.msra.mxu0 %v1434
        %1456 = vmatpush.bf16.msra.mxu0 %v1432
        %1457 = vmatpush.bf16.msra.mxu0 %v1430
        %1458 = vmatpush.bf16.msra.mxu0 %v1428
        %1459 = vmatmul.bf16.gmra.mxu0 %v1440
        %v1460 = vpop.f32.mrf.mxu0
        %v1461 = vadd.f32 0.0, %v1460
        %v1462 = vpop.f32.mrf.mxu0
        %v1463 = vadd.f32 0.0, %v1462
        %1464 = vmatmul.bf16.gmra.mxu0 %v1443
        %v1465 = vpop.f32.mrf.mxu0
        %v1466 = vadd.f32 0.0, %v1465
        %v1467 = vpop.f32.mrf.mxu0
        %v1468 = vadd.f32 0.0, %v1467
        %1469 = vmatmul.bf16.gmra.mxu0 %v1446
        %v1470 = vpop.f32.mrf.mxu0
        %v1471 = vadd.f32 0.0, %v1470
        %v1472 = vpop.f32.mrf.mxu0
        %v1473 = vadd.f32 0.0, %v1472
        %1474 = vmatmul.bf16.gmra.mxu0 %v1449
        %v1475 = vpop.f32.mrf.mxu0
        %v1476 = vadd.f32 0.0, %v1475
        %v1477 = vpop.f32.mrf.mxu0
        %v1478 = vadd.f32 0.0, %v1477
        %1479 = vdwg.mxu0
        %v1488 = vunpack.c.l.b16 %v1383
        %v1489 = vunpack.c.l.b16 %v1384
        %v1490 = vunpack.c.l.b16 %v1385
        %v1491 = vunpack.c.l.b16 %v1386
        %v1492 = vunpack.c.l.b16 %v1387
        %v1493 = vunpack.c.l.b16 %v1388
        %v1494 = vunpack.c.l.b16 %v1389
        %v1495 = vunpack.c.l.b16 %v1390
        %v1496 = vpack.c.b16 %v1489, %v1488
        %v1497 = vpack.c.b16 %v1491, %v1490
        %v1498 = vpack.c.b16 %v1493, %v1492
        %v1499 = vpack.c.b16 %v1495, %v1494
        %1500 = vrot.lane.b32.xlu0 %v795, 64
        %v1501 = vpop.permute.xlu0 %1500
        %1502 = vrot.lane.b32.xlu0 %v796, 64
        %v1503 = vpop.permute.xlu0 %1502
        %1504 = vrot.lane.b32.xlu0 %v797, 64
        %v1505 = vpop.permute.xlu0 %1504
        %1506 = vrot.lane.b32.xlu0 %v798, 64
        %v1507 = vpop.permute.xlu0 %1506
        %v1513 = vsel %vm1022, %v1496, 0
        %v1516 = vsel %vm1022, %v1497, 0
        %v1519 = vsel %vm1022, %v1498, 0
        %v1522 = vsel %vm1022, %v1499, 0
        %1524 = vmatpush.bf16.msra.mxu0 0
        %1525 = vmatpush.bf16.msra.mxu0 0
        %1526 = vmatpush.bf16.msra.mxu0 0
        %1527 = vmatpush.bf16.msra.mxu0 0
        %1528 = vmatpush.bf16.msra.mxu0 %v1507
        %1529 = vmatpush.bf16.msra.mxu0 %v1505
        %1530 = vmatpush.bf16.msra.mxu0 %v1503
        %1531 = vmatpush.bf16.msra.mxu0 %v1501
        %1532 = vmatmul.bf16.gmra.mxu0 %v1513
        %v1533 = vpop.f32.mrf.mxu0
        %v1534 = vadd.f32 0.0, %v1533
        %v1535 = vpop.f32.mrf.mxu0
        %v1536 = vadd.f32 0.0, %v1535
        %1537 = vmatmul.bf16.gmra.mxu0 %v1516
        %v1538 = vpop.f32.mrf.mxu0
        %v1539 = vadd.f32 0.0, %v1538
        %v1540 = vpop.f32.mrf.mxu0
        %v1541 = vadd.f32 0.0, %v1540
        %1542 = vmatmul.bf16.gmra.mxu0 %v1519
        %v1543 = vpop.f32.mrf.mxu0
        %v1544 = vadd.f32 0.0, %v1543
        %v1545 = vpop.f32.mrf.mxu0
        %v1546 = vadd.f32 0.0, %v1545
        %1547 = vmatmul.bf16.gmra.mxu0 %v1522
        %v1548 = vpop.f32.mrf.mxu0
        %v1549 = vadd.f32 0.0, %v1548
        %v1550 = vpop.f32.mrf.mxu0
        %v1551 = vadd.f32 0.0, %v1550
        %1552 = vdwg.mxu0
        %v1561 = vunpack.c.l.b16 %v1391
        %v1562 = vunpack.c.l.b16 %v1392
        %v1563 = vunpack.c.l.b16 %v1393
        %v1564 = vunpack.c.l.b16 %v1394
        %v1565 = vunpack.c.l.b16 %v1395
        %v1566 = vunpack.c.l.b16 %v1396
        %v1567 = vunpack.c.l.b16 %v1397
        %v1568 = vunpack.c.l.b16 %v1398
        %v1569 = vpack.c.b16 %v1562, %v1561
        %v1570 = vpack.c.b16 %v1564, %v1563
        %v1571 = vpack.c.b16 %v1566, %v1565
        %v1572 = vpack.c.b16 %v1568, %v1567
        %1573 = vrot.lane.b32.xlu0 %v876, 64
        %v1574 = vpop.permute.xlu0 %1573
        %1575 = vrot.lane.b32.xlu0 %v877, 64
        %v1576 = vpop.permute.xlu0 %1575
        %1577 = vrot.lane.b32.xlu0 %v878, 64
        %v1578 = vpop.permute.xlu0 %1577
        %1579 = vrot.lane.b32.xlu0 %v879, 64
        %v1580 = vpop.permute.xlu0 %1579
        %v1586 = vsel %vm1022, %v1569, 0
        %v1589 = vsel %vm1022, %v1570, 0
        %v1592 = vsel %vm1022, %v1571, 0
        %v1595 = vsel %vm1022, %v1572, 0
        %1597 = vmatpush.bf16.msra.mxu0 0
        %1598 = vmatpush.bf16.msra.mxu0 0
        %1599 = vmatpush.bf16.msra.mxu0 0
        %1600 = vmatpush.bf16.msra.mxu0 0
        %1601 = vmatpush.bf16.msra.mxu0 %v1580
        %1602 = vmatpush.bf16.msra.mxu0 %v1578
        %1603 = vmatpush.bf16.msra.mxu0 %v1576
        %1604 = vmatpush.bf16.msra.mxu0 %v1574
        %1605 = vmatmul.bf16.gmra.mxu0 %v1586
        %v1606 = vpop.f32.mrf.mxu0
        %v1607 = vadd.f32 0.0, %v1606
        %v1608 = vpop.f32.mrf.mxu0
        %v1609 = vadd.f32 0.0, %v1608
        %1610 = vmatmul.bf16.gmra.mxu0 %v1589
        %v1611 = vpop.f32.mrf.mxu0
        %v1612 = vadd.f32 0.0, %v1611
        %v1613 = vpop.f32.mrf.mxu0
        %v1614 = vadd.f32 0.0, %v1613
        %1615 = vmatmul.bf16.gmra.mxu0 %v1592
        %v1616 = vpop.f32.mrf.mxu0
        %v1617 = vadd.f32 0.0, %v1616
        %v1618 = vpop.f32.mrf.mxu0
        %v1619 = vadd.f32 0.0, %v1618
        %1620 = vmatmul.bf16.gmra.mxu0 %v1595
        %v1621 = vpop.f32.mrf.mxu0
        %v1622 = vadd.f32 0.0, %v1621
        %v1623 = vpop.f32.mrf.mxu0
        %v1624 = vadd.f32 0.0, %v1623
        %1625 = vdwg.mxu0
        %v1634 = vunpack.c.l.b16 %v1399
        %v1635 = vunpack.c.l.b16 %v1400
        %v1636 = vunpack.c.l.b16 %v1401
        %v1637 = vunpack.c.l.b16 %v1402
        %v1638 = vunpack.c.l.b16 %v1403
        %v1639 = vunpack.c.l.b16 %v1404
        %v1640 = vunpack.c.l.b16 %v1405
        %v1641 = vunpack.c.l.b16 %v1406
        %v1642 = vpack.c.b16 %v1635, %v1634
        %v1643 = vpack.c.b16 %v1637, %v1636
        %v1644 = vpack.c.b16 %v1639, %v1638
        %v1645 = vpack.c.b16 %v1641, %v1640
        %1646 = vrot.lane.b32.xlu0 %v957, 64
        %v1647 = vpop.permute.xlu0 %1646
        %1648 = vrot.lane.b32.xlu0 %v958, 64
        %v1649 = vpop.permute.xlu0 %1648
        %1650 = vrot.lane.b32.xlu0 %v959, 64
        %v1651 = vpop.permute.xlu0 %1650
        %1652 = vrot.lane.b32.xlu0 %v960, 64
        %v1653 = vpop.permute.xlu0 %1652
        %v1659 = vsel %vm1022, %v1642, 0
        %v1662 = vsel %vm1022, %v1643, 0
        %v1665 = vsel %vm1022, %v1644, 0
        %v1668 = vsel %vm1022, %v1645, 0
        %1670 = vmatpush.bf16.msra.mxu0 0
        %1671 = vmatpush.bf16.msra.mxu0 0
        %1672 = vmatpush.bf16.msra.mxu0 0
        %1673 = vmatpush.bf16.msra.mxu0 0
        %1674 = vmatpush.bf16.msra.mxu0 %v1653
        %1675 = vmatpush.bf16.msra.mxu0 %v1651
        %1676 = vmatpush.bf16.msra.mxu0 %v1649
        %1677 = vmatpush.bf16.msra.mxu0 %v1647
        %1678 = vmatmul.bf16.gmra.mxu0 %v1659
        %v1679 = vpop.f32.mrf.mxu0
        %v1680 = vadd.f32 0.0, %v1679
        %v1681 = vpop.f32.mrf.mxu0
        %v1682 = vadd.f32 0.0, %v1681
        %1683 = vmatmul.bf16.gmra.mxu0 %v1662
        %v1684 = vpop.f32.mrf.mxu0
        %v1685 = vadd.f32 0.0, %v1684
        %v1686 = vpop.f32.mrf.mxu0
        %v1687 = vadd.f32 0.0, %v1686
        %1688 = vmatmul.bf16.gmra.mxu0 %v1665
        %v1689 = vpop.f32.mrf.mxu0
        %v1690 = vadd.f32 0.0, %v1689
        %v1691 = vpop.f32.mrf.mxu0
        %v1692 = vadd.f32 0.0, %v1691
        %1693 = vmatmul.bf16.gmra.mxu0 %v1668
        %v1694 = vpop.f32.mrf.mxu0
        %v1695 = vadd.f32 0.0, %v1694
        %v1696 = vpop.f32.mrf.mxu0
        %v1697 = vadd.f32 0.0, %v1696
        %1698 = vdwg.mxu0
        %1699 = vst.msk [vmem:[%s363] sm:$0xff] %vm725, %v1461
        %1700 = vst.msk [vmem:[%s363 + $0x8] sm:$0xff] %vm725, %v1463
        %1701 = vst.msk [vmem:[%s363 + $0x10] sm:$0xff] %vm725, %v1466
        %1702 = vst.msk [vmem:[%s363 + $0x18] sm:$0xff] %vm725, %v1468
        %1703 = vst.msk [vmem:[%s363 + $0x20] sm:$0xff] %vm725, %v1471
        %1704 = vst.msk [vmem:[%s363 + $0x28] sm:$0xff] %vm725, %v1473
        %1705 = vst.msk [vmem:[%s363 + $0x30] sm:$0xff] %vm725, %v1476
        %1706 = vst.msk [vmem:[%s363 + $0x38] sm:$0xff] %vm725, %v1478
        %1707 = vst.msk [vmem:[%s363 + $0x40] sm:$0xff] %vm725, %v1534
        %1708 = vst.msk [vmem:[%s363 + $0x48] sm:$0xff] %vm725, %v1536
        %1709 = vst.msk [vmem:[%s363 + $0x50] sm:$0xff] %vm725, %v1539
        %1710 = vst.msk [vmem:[%s363 + $0x58] sm:$0xff] %vm725, %v1541
        %1711 = vst.msk [vmem:[%s363 + $0x60] sm:$0xff] %vm725, %v1544
        %1712 = vst.msk [vmem:[%s363 + $0x68] sm:$0xff] %vm725, %v1546
        %1713 = vst.msk [vmem:[%s363 + $0x70] sm:$0xff] %vm725, %v1549
        %1714 = vst.msk [vmem:[%s363 + $0x78] sm:$0xff] %vm725, %v1551
        %1715 = vst.msk [vmem:[%s363 + $0x80] sm:$0xff] %vm725, %v1607
        %1716 = vst.msk [vmem:[%s363 + $0x88] sm:$0xff] %vm725, %v1609
        %1717 = vst.msk [vmem:[%s363 + $0x90] sm:$0xff] %vm725, %v1612
        %1718 = vst.msk [vmem:[%s363 + $0x98] sm:$0xff] %vm725, %v1614
        %1719 = vst.msk [vmem:[%s363 + $0xa0] sm:$0xff] %vm725, %v1617
        %1720 = vst.msk [vmem:[%s363 + $0xa8] sm:$0xff] %vm725, %v1619
        %1721 = vst.msk [vmem:[%s363 + $0xb0] sm:$0xff] %vm725, %v1622
        %1722 = vst.msk [vmem:[%s363 + $0xb8] sm:$0xff] %vm725, %v1624
        %1723 = vst.msk [vmem:[%s363 + $0xc0] sm:$0xff] %vm725, %v1680
        %1724 = vst.msk [vmem:[%s363 + $0xc8] sm:$0xff] %vm725, %v1682
        %1725 = vst.msk [vmem:[%s363 + $0xd0] sm:$0xff] %vm725, %v1685
        %1726 = vst.msk [vmem:[%s363 + $0xd8] sm:$0xff] %vm725, %v1687
        %1727 = vst.msk [vmem:[%s363 + $0xe0] sm:$0xff] %vm725, %v1690
        %1728 = vst.msk [vmem:[%s363 + $0xe8] sm:$0xff] %vm725, %v1692
        %1729 = vst.msk [vmem:[%s363 + $0xf0] sm:$0xff] %vm725, %v1695
        %1730 = vst.msk [vmem:[%s363 + $0xf8] sm:$0xff] %vm725, %v1697
        %1731 = vrot.lane.b32.xlu0 %v713, 120
        %v1732 = vpop.permute.xlu0 %1731
        %1733 = vrot.lane.b32.xlu0 %v714, 120
        %v1734 = vpop.permute.xlu0 %1733
        %1735 = vrot.lane.b32.xlu0 %v715, 120
        %v1736 = vpop.permute.xlu0 %1735
        %1737 = vrot.lane.b32.xlu0 %v716, 120
        %v1738 = vpop.permute.xlu0 %1737
        %1739 = vrot.lane.b32.xlu0 %v713, 88
        %v1740 = vpop.permute.xlu0 %1739
        %1741 = vrot.lane.b32.xlu0 %v714, 88
        %v1742 = vpop.permute.xlu0 %1741
        %1743 = vrot.lane.b32.xlu0 %v715, 88
        %v1744 = vpop.permute.xlu0 %1743
        %1745 = vrot.lane.b32.xlu0 %v716, 88
        %v1746 = vpop.permute.xlu0 %1745
        %v1748 = vsel %vm725, %v1732, 0
        %v1751 = vsel %vm725, %v1734, 0
        %v1754 = vsel %vm725, %v1736, 0
        %v1757 = vsel %vm725, %v1738, 0
        %v1760 = vsel %vm725, %v1740, 0
        %v1763 = vsel %vm725, %v1742, 0
        %v1766 = vsel %vm725, %v1744, 0
        %v1769 = vsel %vm725, %v1746, 0
        %1771 = vmatpush.bf16.xpose.msra.mxu0 0
        %1772 = vmatpush.bf16.xpose.msra.mxu0 0
        %1773 = vmatpush.bf16.xpose.msra.mxu0 0
        %1774 = vmatpush.bf16.xpose.msra.mxu0 0
        %1775 = vmatpush.bf16.xpose.msra.mxu0 %v1769
        %1776 = vmatpush.bf16.xpose.msra.mxu0 %v1766
        %1777 = vmatpush.bf16.xpose.msra.mxu0 %v1763
        %1778 = vmatpush.bf16.xpose.msra.mxu0 %v1760
        %1779 = vmatmul.bf16.gmra.mxu0 %v1748
        %v1780 = vpop.f32.mrf.mxu0
        %v1781 = vadd.f32 %v673, %v1780
        %v1782 = vpop.f32.mrf.mxu0
        %v1783 = vadd.f32 %v674, %v1782
        %1784 = vmatmul.bf16.gmra.mxu0 %v1751
        %v1785 = vpop.f32.mrf.mxu0
        %v1786 = vadd.f32 %v675, %v1785
        %v1787 = vpop.f32.mrf.mxu0
        %v1788 = vadd.f32 %v676, %v1787
        %1789 = vmatmul.bf16.gmra.mxu0 %v1754
        %v1790 = vpop.f32.mrf.mxu0
        %v1791 = vadd.f32 %v677, %v1790
        %v1792 = vpop.f32.mrf.mxu0
        %v1793 = vadd.f32 %v678, %v1792
        %1794 = vmatmul.bf16.gmra.mxu0 %v1757
        %v1795 = vpop.f32.mrf.mxu0
        %v1796 = vadd.f32 %v679, %v1795
        %v1797 = vpop.f32.mrf.mxu0
        %v1798 = vadd.f32 %v680, %v1797
        %1799 = vdwg.mxu0
        %1800 = vrot.lane.b32.xlu0 %v795, 120
        %v1801 = vpop.permute.xlu0 %1800
        %1802 = vrot.lane.b32.xlu0 %v796, 120
        %v1803 = vpop.permute.xlu0 %1802
        %1804 = vrot.lane.b32.xlu0 %v797, 120
        %v1805 = vpop.permute.xlu0 %1804
        %1806 = vrot.lane.b32.xlu0 %v798, 120
        %v1807 = vpop.permute.xlu0 %1806
        %1808 = vrot.lane.b32.xlu0 %v795, 88
        %v1809 = vpop.permute.xlu0 %1808
        %1810 = vrot.lane.b32.xlu0 %v796, 88
        %v1811 = vpop.permute.xlu0 %1810
        %1812 = vrot.lane.b32.xlu0 %v797, 88
        %v1813 = vpop.permute.xlu0 %1812
        %1814 = vrot.lane.b32.xlu0 %v798, 88
        %v1815 = vpop.permute.xlu0 %1814
        %v1817 = vsel %vm725, %v1801, 0
        %v1820 = vsel %vm725, %v1803, 0
        %v1823 = vsel %vm725, %v1805, 0
        %v1826 = vsel %vm725, %v1807, 0
        %v1829 = vsel %vm725, %v1809, 0
        %v1832 = vsel %vm725, %v1811, 0
        %v1835 = vsel %vm725, %v1813, 0
        %v1838 = vsel %vm725, %v1815, 0
        %1840 = vmatpush.bf16.xpose.msra.mxu0 0
        %1841 = vmatpush.bf16.xpose.msra.mxu0 0
        %1842 = vmatpush.bf16.xpose.msra.mxu0 0
        %1843 = vmatpush.bf16.xpose.msra.mxu0 0
        %1844 = vmatpush.bf16.xpose.msra.mxu0 %v1838
        %1845 = vmatpush.bf16.xpose.msra.mxu0 %v1835
        %1846 = vmatpush.bf16.xpose.msra.mxu0 %v1832
        %1847 = vmatpush.bf16.xpose.msra.mxu0 %v1829
        %1848 = vmatmul.bf16.gmra.mxu0 %v1817
        %v1849 = vpop.f32.mrf.mxu0
        %v1850 = vadd.f32 %v673, %v1849
        %v1851 = vpop.f32.mrf.mxu0
        %v1852 = vadd.f32 %v674, %v1851
        %1853 = vmatmul.bf16.gmra.mxu0 %v1820
        %v1854 = vpop.f32.mrf.mxu0
        %v1855 = vadd.f32 %v675, %v1854
        %v1856 = vpop.f32.mrf.mxu0
        %v1857 = vadd.f32 %v676, %v1856
        %1858 = vmatmul.bf16.gmra.mxu0 %v1823
        %v1859 = vpop.f32.mrf.mxu0
        %v1860 = vadd.f32 %v677, %v1859
        %v1861 = vpop.f32.mrf.mxu0
        %v1862 = vadd.f32 %v678, %v1861
        %1863 = vmatmul.bf16.gmra.mxu0 %v1826
        %v1864 = vpop.f32.mrf.mxu0
        %v1865 = vadd.f32 %v679, %v1864
        %v1866 = vpop.f32.mrf.mxu0
        %v1867 = vadd.f32 %v680, %v1866
        %1868 = vdwg.mxu0
        %1869 = vrot.lane.b32.xlu0 %v876, 120
        %v1870 = vpop.permute.xlu0 %1869
        %1871 = vrot.lane.b32.xlu0 %v877, 120
        %v1872 = vpop.permute.xlu0 %1871
        %1873 = vrot.lane.b32.xlu0 %v878, 120
        %v1874 = vpop.permute.xlu0 %1873
        %1875 = vrot.lane.b32.xlu0 %v879, 120
        %v1876 = vpop.permute.xlu0 %1875
        %1877 = vrot.lane.b32.xlu0 %v876, 88
        %v1878 = vpop.permute.xlu0 %1877
        %1879 = vrot.lane.b32.xlu0 %v877, 88
        %v1880 = vpop.permute.xlu0 %1879
        %1881 = vrot.lane.b32.xlu0 %v878, 88
        %v1882 = vpop.permute.xlu0 %1881
        %1883 = vrot.lane.b32.xlu0 %v879, 88
        %v1884 = vpop.permute.xlu0 %1883
        %v1886 = vsel %vm725, %v1870, 0
        %v1889 = vsel %vm725, %v1872, 0
        %v1892 = vsel %vm725, %v1874, 0
        %v1895 = vsel %vm725, %v1876, 0
        %v1898 = vsel %vm725, %v1878, 0
        %v1901 = vsel %vm725, %v1880, 0
        %v1904 = vsel %vm725, %v1882, 0
        %v1907 = vsel %vm725, %v1884, 0
        %1909 = vmatpush.bf16.xpose.msra.mxu0 0
        %1910 = vmatpush.bf16.xpose.msra.mxu0 0
        %1911 = vmatpush.bf16.xpose.msra.mxu0 0
        %1912 = vmatpush.bf16.xpose.msra.mxu0 0
        %1913 = vmatpush.bf16.xpose.msra.mxu0 %v1907
        %1914 = vmatpush.bf16.xpose.msra.mxu0 %v1904
        %1915 = vmatpush.bf16.xpose.msra.mxu0 %v1901
        %1916 = vmatpush.bf16.xpose.msra.mxu0 %v1898
        %1917 = vmatmul.bf16.gmra.mxu0 %v1886
        %v1918 = vpop.f32.mrf.mxu0
        %v1919 = vadd.f32 %v673, %v1918
        %v1920 = vpop.f32.mrf.mxu0
        %v1921 = vadd.f32 %v674, %v1920
        %1922 = vmatmul.bf16.gmra.mxu0 %v1889
        %v1923 = vpop.f32.mrf.mxu0
        %v1924 = vadd.f32 %v675, %v1923
        %v1925 = vpop.f32.mrf.mxu0
        %v1926 = vadd.f32 %v676, %v1925
        %1927 = vmatmul.bf16.gmra.mxu0 %v1892
        %v1928 = vpop.f32.mrf.mxu0
        %v1929 = vadd.f32 %v677, %v1928
        %v1930 = vpop.f32.mrf.mxu0
        %v1931 = vadd.f32 %v678, %v1930
        %1932 = vmatmul.bf16.gmra.mxu0 %v1895
        %v1933 = vpop.f32.mrf.mxu0
        %v1934 = vadd.f32 %v679, %v1933
        %v1935 = vpop.f32.mrf.mxu0
        %v1936 = vadd.f32 %v680, %v1935
        %1937 = vdwg.mxu0
        %1938 = vrot.lane.b32.xlu0 %v957, 120
        %v1939 = vpop.permute.xlu0 %1938
        %1940 = vrot.lane.b32.xlu0 %v958, 120
        %v1941 = vpop.permute.xlu0 %1940
        %1942 = vrot.lane.b32.xlu0 %v959, 120
        %v1943 = vpop.permute.xlu0 %1942
        %1944 = vrot.lane.b32.xlu0 %v960, 120
        %v1945 = vpop.permute.xlu0 %1944
        %1946 = vrot.lane.b32.xlu0 %v957, 88
        %v1947 = vpop.permute.xlu0 %1946
        %1948 = vrot.lane.b32.xlu0 %v958, 88
        %v1949 = vpop.permute.xlu0 %1948
        %1950 = vrot.lane.b32.xlu0 %v959, 88
        %v1951 = vpop.permute.xlu0 %1950
        %1952 = vrot.lane.b32.xlu0 %v960, 88
        %v1953 = vpop.permute.xlu0 %1952
        %v1955 = vsel %vm725, %v1939, 0
        %v1958 = vsel %vm725, %v1941, 0
        %v1961 = vsel %vm725, %v1943, 0
        %v1964 = vsel %vm725, %v1945, 0
        %v1967 = vsel %vm725, %v1947, 0
        %v1970 = vsel %vm725, %v1949, 0
        %v1973 = vsel %vm725, %v1951, 0
        %v1976 = vsel %vm725, %v1953, 0
        %1978 = vmatpush.bf16.xpose.msra.mxu0 0
        %1979 = vmatpush.bf16.xpose.msra.mxu0 0
        %1980 = vmatpush.bf16.xpose.msra.mxu0 0
        %1981 = vmatpush.bf16.xpose.msra.mxu0 0
        %1982 = vmatpush.bf16.xpose.msra.mxu0 %v1976
        %1983 = vmatpush.bf16.xpose.msra.mxu0 %v1973
        %1984 = vmatpush.bf16.xpose.msra.mxu0 %v1970
        %1985 = vmatpush.bf16.xpose.msra.mxu0 %v1967
        %1986 = vmatmul.bf16.gmra.mxu0 %v1955
        %v1987 = vpop.f32.mrf.mxu0
        %v1988 = vadd.f32 %v673, %v1987
        %v1989 = vpop.f32.mrf.mxu0
        %v1990 = vadd.f32 %v674, %v1989
        %1991 = vmatmul.bf16.gmra.mxu0 %v1958
        %v1992 = vpop.f32.mrf.mxu0
        %v1993 = vadd.f32 %v675, %v1992
        %v1994 = vpop.f32.mrf.mxu0
        %v1995 = vadd.f32 %v676, %v1994
        %1996 = vmatmul.bf16.gmra.mxu0 %v1961
        %v1997 = vpop.f32.mrf.mxu0
        %v1998 = vadd.f32 %v677, %v1997
        %v1999 = vpop.f32.mrf.mxu0
        %v2000 = vadd.f32 %v678, %v1999
        %2001 = vmatmul.bf16.gmra.mxu0 %v1964
        %v2002 = vpop.f32.mrf.mxu0
        %v2003 = vadd.f32 %v679, %v2002
        %v2004 = vpop.f32.mrf.mxu0
        %v2005 = vadd.f32 %v680, %v2004
        %2006 = vdwg.mxu0
        %v2007 = vsel %vm1022, %v1781, -inf
        %2008 = vmax.xlane.f32.xlu0 %v2007
        %v2009 = vpop.xlane.xlu0 %2008
        %v2010 = vsel %vm1022, %v1783, -inf
        %2011 = vmax.xlane.f32.xlu0 %v2010
        %v2012 = vpop.xlane.xlu0 %2011
        %v2013 = vsel %vm1022, %v1786, -inf
        %2014 = vmax.xlane.f32.xlu0 %v2013
        %v2015 = vpop.xlane.xlu0 %2014
        %v2016 = vsel %vm1022, %v1788, -inf
        %2017 = vmax.xlane.f32.xlu0 %v2016
        %v2018 = vpop.xlane.xlu0 %2017
        %v2019 = vsel %vm1022, %v1791, -inf
        %2020 = vmax.xlane.f32.xlu0 %v2019
        %v2021 = vpop.xlane.xlu0 %2020
        %v2022 = vsel %vm1022, %v1793, -inf
        %2023 = vmax.xlane.f32.xlu0 %v2022
        %v2024 = vpop.xlane.xlu0 %2023
        %v2025 = vsel %vm1022, %v1796, -inf
        %2026 = vmax.xlane.f32.xlu0 %v2025
        %v2027 = vpop.xlane.xlu0 %2026
        %v2028 = vsel %vm1022, %v1798, -inf
        %2029 = vmax.xlane.f32.xlu0 %v2028
        %v2030 = vpop.xlane.xlu0 %2029
        %v2031 = vsel %vm1022, %v1850, -inf
        %2032 = vmax.xlane.f32.xlu0 %v2031
        %v2033 = vpop.xlane.xlu0 %2032
        %v2034 = vsel %vm1022, %v1852, -inf
        %2035 = vmax.xlane.f32.xlu0 %v2034
        %v2036 = vpop.xlane.xlu0 %2035
        %v2037 = vsel %vm1022, %v1855, -inf
        %2038 = vmax.xlane.f32.xlu0 %v2037
        %v2039 = vpop.xlane.xlu0 %2038
        %v2040 = vsel %vm1022, %v1857, -inf
        %2041 = vmax.xlane.f32.xlu0 %v2040
        %v2042 = vpop.xlane.xlu0 %2041
        %v2043 = vsel %vm1022, %v1860, -inf
        %2044 = vmax.xlane.f32.xlu0 %v2043
        %v2045 = vpop.xlane.xlu0 %2044
        %v2046 = vsel %vm1022, %v1862, -inf
        %2047 = vmax.xlane.f32.xlu0 %v2046
        %v2048 = vpop.xlane.xlu0 %2047
        %v2049 = vsel %vm1022, %v1865, -inf
        %2050 = vmax.xlane.f32.xlu0 %v2049
        %v2051 = vpop.xlane.xlu0 %2050
        %v2052 = vsel %vm1022, %v1867, -inf
        %2053 = vmax.xlane.f32.xlu0 %v2052
        %v2054 = vpop.xlane.xlu0 %2053
        %v2055 = vsel %vm1022, %v1919, -inf
        %2056 = vmax.xlane.f32.xlu0 %v2055
        %v2057 = vpop.xlane.xlu0 %2056
        %v2058 = vsel %vm1022, %v1921, -inf
        %2059 = vmax.xlane.f32.xlu0 %v2058
        %v2060 = vpop.xlane.xlu0 %2059
        %v2061 = vsel %vm1022, %v1924, -inf
        %2062 = vmax.xlane.f32.xlu0 %v2061
        %v2063 = vpop.xlane.xlu0 %2062
        %v2064 = vsel %vm1022, %v1926, -inf
        %2065 = vmax.xlane.f32.xlu0 %v2064
        %v2066 = vpop.xlane.xlu0 %2065
        %v2067 = vsel %vm1022, %v1929, -inf
        %2068 = vmax.xlane.f32.xlu0 %v2067
        %v2069 = vpop.xlane.xlu0 %2068
        %v2070 = vsel %vm1022, %v1931, -inf
        %2071 = vmax.xlane.f32.xlu0 %v2070
        %v2072 = vpop.xlane.xlu0 %2071
        %v2073 = vsel %vm1022, %v1934, -inf
        %2074 = vmax.xlane.f32.xlu0 %v2073
        %v2075 = vpop.xlane.xlu0 %2074
        %v2076 = vsel %vm1022, %v1936, -inf
        %2077 = vmax.xlane.f32.xlu0 %v2076
        %v2078 = vpop.xlane.xlu0 %2077
        %v2079 = vsel %vm1022, %v1988, -inf
        %2080 = vmax.xlane.f32.xlu0 %v2079
        %v2081 = vpop.xlane.xlu0 %2080
        %v2082 = vsel %vm1022, %v1990, -inf
        %2083 = vmax.xlane.f32.xlu0 %v2082
        %v2084 = vpop.xlane.xlu0 %2083
        %v2085 = vsel %vm1022, %v1993, -inf
        %2086 = vmax.xlane.f32.xlu0 %v2085
        %v2087 = vpop.xlane.xlu0 %2086
        %v2088 = vsel %vm1022, %v1995, -inf
        %2089 = vmax.xlane.f32.xlu0 %v2088
        %v2090 = vpop.xlane.xlu0 %2089
        %v2091 = vsel %vm1022, %v1998, -inf
        %2092 = vmax.xlane.f32.xlu0 %v2091
        %v2093 = vpop.xlane.xlu0 %2092
        %v2094 = vsel %vm1022, %v2000, -inf
        %2095 = vmax.xlane.f32.xlu0 %v2094
        %v2096 = vpop.xlane.xlu0 %2095
        %v2097 = vsel %vm1022, %v2003, -inf
        %2098 = vmax.xlane.f32.xlu0 %v2097
        %v2099 = vpop.xlane.xlu0 %2098
        %v2100 = vsel %vm1022, %v2005, -inf
        %2101 = vmax.xlane.f32.xlu0 %v2100
        %v2102 = vpop.xlane.xlu0 %2101
        %v2103 = vsub.f32 %v1781, %v2009
        %v2104 = vsub.f32 %v1783, %v2012
        %v2105 = vsub.f32 %v1786, %v2015
        %v2106 = vsub.f32 %v1788, %v2018
        %v2107 = vsub.f32 %v1791, %v2021
        %v2108 = vsub.f32 %v1793, %v2024
        %v2109 = vsub.f32 %v1796, %v2027
        %v2110 = vsub.f32 %v1798, %v2030
        %v2111 = vsub.f32 %v1850, %v2033
        %v2112 = vsub.f32 %v1852, %v2036
        %v2113 = vsub.f32 %v1855, %v2039
        %v2114 = vsub.f32 %v1857, %v2042
        %v2115 = vsub.f32 %v1860, %v2045
        %v2116 = vsub.f32 %v1862, %v2048
        %v2117 = vsub.f32 %v1865, %v2051
        %v2118 = vsub.f32 %v1867, %v2054
        %v2119 = vsub.f32 %v1919, %v2057
        %v2120 = vsub.f32 %v1921, %v2060
        %v2121 = vsub.f32 %v1924, %v2063
        %v2122 = vsub.f32 %v1926, %v2066
        %v2123 = vsub.f32 %v1929, %v2069
        %v2124 = vsub.f32 %v1931, %v2072
        %v2125 = vsub.f32 %v1934, %v2075
        %v2126 = vsub.f32 %v1936, %v2078
        %v2127 = vsub.f32 %v1988, %v2081
        %v2128 = vsub.f32 %v1990, %v2084
        %v2129 = vsub.f32 %v1993, %v2087
        %v2130 = vsub.f32 %v1995, %v2090
        %v2131 = vsub.f32 %v1998, %v2093
        %v2132 = vsub.f32 %v2000, %v2096
        %v2133 = vsub.f32 %v2003, %v2099
        %v2134 = vsub.f32 %v2005, %v2102
        %v2135 = vmul.f32 %v2103, 1.442695
        %v2136 = vpow.pop %v2135
        %v2137 = vmul.f32 %v2104, 1.442695
        %v2138 = vpow.pop %v2137
        %v2139 = vmul.f32 %v2105, 1.442695
        %v2140 = vpow.pop %v2139
        %v2141 = vmul.f32 %v2106, 1.442695
        %v2142 = vpow.pop %v2141
        %v2143 = vmul.f32 %v2107, 1.442695
        %v2144 = vpow.pop %v2143
        %v2145 = vmul.f32 %v2108, 1.442695
        %v2146 = vpow.pop %v2145
        %v2147 = vmul.f32 %v2109, 1.442695
        %v2148 = vpow.pop %v2147
        %v2149 = vmul.f32 %v2110, 1.442695
        %v2150 = vpow.pop %v2149
        %v2151 = vmul.f32 %v2111, 1.442695
        %v2152 = vpow.pop %v2151
        %v2153 = vmul.f32 %v2112, 1.442695
        %v2154 = vpow.pop %v2153
        %v2155 = vmul.f32 %v2113, 1.442695
        %v2156 = vpow.pop %v2155
        %v2157 = vmul.f32 %v2114, 1.442695
        %v2158 = vpow.pop %v2157
        %v2159 = vmul.f32 %v2115, 1.442695
        %v2160 = vpow.pop %v2159
        %v2161 = vmul.f32 %v2116, 1.442695
        %v2162 = vpow.pop %v2161
        %v2163 = vmul.f32 %v2117, 1.442695
        %v2164 = vpow.pop %v2163
        %v2165 = vmul.f32 %v2118, 1.442695
        %v2166 = vpow.pop %v2165
        %v2167 = vmul.f32 %v2119, 1.442695
        %v2168 = vpow.pop %v2167
        %v2169 = vmul.f32 %v2120, 1.442695
        %v2170 = vpow.pop %v2169
        %v2171 = vmul.f32 %v2121, 1.442695
        %v2172 = vpow.pop %v2171
        %v2173 = vmul.f32 %v2122, 1.442695
        %v2174 = vpow.pop %v2173
        %v2175 = vmul.f32 %v2123, 1.442695
        %v2176 = vpow.pop %v2175
        %v2177 = vmul.f32 %v2124, 1.442695
        %v2178 = vpow.pop %v2177
        %v2179 = vmul.f32 %v2125, 1.442695
        %v2180 = vpow.pop %v2179
        %v2181 = vmul.f32 %v2126, 1.442695
        %v2182 = vpow.pop %v2181
        %v2183 = vmul.f32 %v2127, 1.442695
        %v2184 = vpow.pop %v2183
        %v2185 = vmul.f32 %v2128, 1.442695
        %v2186 = vpow.pop %v2185
        %v2187 = vmul.f32 %v2129, 1.442695
        %v2188 = vpow.pop %v2187
        %v2189 = vmul.f32 %v2130, 1.442695
        %v2190 = vpow.pop %v2189
        %v2191 = vmul.f32 %v2131, 1.442695
        %v2192 = vpow.pop %v2191
        %v2193 = vmul.f32 %v2132, 1.442695
        %v2194 = vpow.pop %v2193
        %v2195 = vmul.f32 %v2133, 1.442695
        %v2196 = vpow.pop %v2195
        %v2197 = vmul.f32 %v2134, 1.442695
        %v2198 = vpow.pop %v2197
        %v2199 = vsel %vm1022, %v2136, 0.0
        %2200 = vadd.xlane.f32.xlu0 %v2199
        %v2201 = vpop.xlane.xlu0 %2200
        %v2202 = vsel %vm1022, %v2138, 0.0
        %2203 = vadd.xlane.f32.xlu0 %v2202
        %v2204 = vpop.xlane.xlu0 %2203
        %v2205 = vsel %vm1022, %v2140, 0.0
        %2206 = vadd.xlane.f32.xlu0 %v2205
        %v2207 = vpop.xlane.xlu0 %2206
        %v2208 = vsel %vm1022, %v2142, 0.0
        %2209 = vadd.xlane.f32.xlu0 %v2208
        %v2210 = vpop.xlane.xlu0 %2209
        %v2211 = vsel %vm1022, %v2144, 0.0
        %2212 = vadd.xlane.f32.xlu0 %v2211
        %v2213 = vpop.xlane.xlu0 %2212
        %v2214 = vsel %vm1022, %v2146, 0.0
        %2215 = vadd.xlane.f32.xlu0 %v2214
        %v2216 = vpop.xlane.xlu0 %2215
        %v2217 = vsel %vm1022, %v2148, 0.0
        %2218 = vadd.xlane.f32.xlu0 %v2217
        %v2219 = vpop.xlane.xlu0 %2218
        %v2220 = vsel %vm1022, %v2150, 0.0
        %2221 = vadd.xlane.f32.xlu0 %v2220
        %v2222 = vpop.xlane.xlu0 %2221
        %v2223 = vsel %vm1022, %v2152, 0.0
        %2224 = vadd.xlane.f32.xlu0 %v2223
        %v2225 = vpop.xlane.xlu0 %2224
        %v2226 = vsel %vm1022, %v2154, 0.0
        %2227 = vadd.xlane.f32.xlu0 %v2226
        %v2228 = vpop.xlane.xlu0 %2227
        %v2229 = vsel %vm1022, %v2156, 0.0
        %2230 = vadd.xlane.f32.xlu0 %v2229
        %v2231 = vpop.xlane.xlu0 %2230
        %v2232 = vsel %vm1022, %v2158, 0.0
        %2233 = vadd.xlane.f32.xlu0 %v2232
        %v2234 = vpop.xlane.xlu0 %2233
        %v2235 = vsel %vm1022, %v2160, 0.0
        %2236 = vadd.xlane.f32.xlu0 %v2235
        %v2237 = vpop.xlane.xlu0 %2236
        %v2238 = vsel %vm1022, %v2162, 0.0
        %2239 = vadd.xlane.f32.xlu0 %v2238
        %v2240 = vpop.xlane.xlu0 %2239
        %v2241 = vsel %vm1022, %v2164, 0.0
        %2242 = vadd.xlane.f32.xlu0 %v2241
        %v2243 = vpop.xlane.xlu0 %2242
        %v2244 = vsel %vm1022, %v2166, 0.0
        %2245 = vadd.xlane.f32.xlu0 %v2244
        %v2246 = vpop.xlane.xlu0 %2245
        %v2247 = vsel %vm1022, %v2168, 0.0
        %2248 = vadd.xlane.f32.xlu0 %v2247
        %v2249 = vpop.xlane.xlu0 %2248
        %v2250 = vsel %vm1022, %v2170, 0.0
        %2251 = vadd.xlane.f32.xlu0 %v2250
        %v2252 = vpop.xlane.xlu0 %2251
        %v2253 = vsel %vm1022, %v2172, 0.0
        %2254 = vadd.xlane.f32.xlu0 %v2253
        %v2255 = vpop.xlane.xlu0 %2254
        %v2256 = vsel %vm1022, %v2174, 0.0
        %2257 = vadd.xlane.f32.xlu0 %v2256
        %v2258 = vpop.xlane.xlu0 %2257
        %v2259 = vsel %vm1022, %v2176, 0.0
        %2260 = vadd.xlane.f32.xlu0 %v2259
        %v2261 = vpop.xlane.xlu0 %2260
        %v2262 = vsel %vm1022, %v2178, 0.0
        %2263 = vadd.xlane.f32.xlu0 %v2262
        %v2264 = vpop.xlane.xlu0 %2263
        %v2265 = vsel %vm1022, %v2180, 0.0
        %2266 = vadd.xlane.f32.xlu0 %v2265
        %v2267 = vpop.xlane.xlu0 %2266
        %v2268 = vsel %vm1022, %v2182, 0.0
        %2269 = vadd.xlane.f32.xlu0 %v2268
        %v2270 = vpop.xlane.xlu0 %2269
        %v2271 = vsel %vm1022, %v2184, 0.0
        %2272 = vadd.xlane.f32.xlu0 %v2271
        %v2273 = vpop.xlane.xlu0 %2272
        %v2274 = vsel %vm1022, %v2186, 0.0
        %2275 = vadd.xlane.f32.xlu0 %v2274
        %v2276 = vpop.xlane.xlu0 %2275
        %v2277 = vsel %vm1022, %v2188, 0.0
        %2278 = vadd.xlane.f32.xlu0 %v2277
        %v2279 = vpop.xlane.xlu0 %2278
        %v2280 = vsel %vm1022, %v2190, 0.0
        %2281 = vadd.xlane.f32.xlu0 %v2280
        %v2282 = vpop.xlane.xlu0 %2281
        %v2283 = vsel %vm1022, %v2192, 0.0
        %2284 = vadd.xlane.f32.xlu0 %v2283
        %v2285 = vpop.xlane.xlu0 %2284
        %v2286 = vsel %vm1022, %v2194, 0.0
        %2287 = vadd.xlane.f32.xlu0 %v2286
        %v2288 = vpop.xlane.xlu0 %2287
        %v2289 = vsel %vm1022, %v2196, 0.0
        %2290 = vadd.xlane.f32.xlu0 %v2289
        %v2291 = vpop.xlane.xlu0 %2290
        %v2292 = vsel %vm1022, %v2198, 0.0
        %2293 = vadd.xlane.f32.xlu0 %v2292
        %v2294 = vpop.xlane.xlu0 %2293
        %v2295 = vrcp.pop %v2201
        %v2296 = vrcp.pop %v2204
        %v2297 = vrcp.pop %v2207
        %v2298 = vrcp.pop %v2210
        %v2299 = vrcp.pop %v2213
        %v2300 = vrcp.pop %v2216
        %v2301 = vrcp.pop %v2219
        %v2302 = vrcp.pop %v2222
        %v2303 = vrcp.pop %v2225
        %v2304 = vrcp.pop %v2228
        %v2305 = vrcp.pop %v2231
        %v2306 = vrcp.pop %v2234
        %v2307 = vrcp.pop %v2237
        %v2308 = vrcp.pop %v2240
        %v2309 = vrcp.pop %v2243
        %v2310 = vrcp.pop %v2246
        %v2311 = vrcp.pop %v2249
        %v2312 = vrcp.pop %v2252
        %v2313 = vrcp.pop %v2255
        %v2314 = vrcp.pop %v2258
        %v2315 = vrcp.pop %v2261
        %v2316 = vrcp.pop %v2264
        %v2317 = vrcp.pop %v2267
        %v2318 = vrcp.pop %v2270
        %v2319 = vrcp.pop %v2273
        %v2320 = vrcp.pop %v2276
        %v2321 = vrcp.pop %v2279
        %v2322 = vrcp.pop %v2282
        %v2323 = vrcp.pop %v2285
        %v2324 = vrcp.pop %v2288
        %v2325 = vrcp.pop %v2291
        %v2326 = vrcp.pop %v2294
        %v2327 = vmul.f32 %v2136, %v2295
        %v2328 = vmul.f32 %v2138, %v2296
        %v2329 = vmul.f32 %v2140, %v2297
        %v2330 = vmul.f32 %v2142, %v2298
        %v2331 = vmul.f32 %v2144, %v2299
        %v2332 = vmul.f32 %v2146, %v2300
        %v2333 = vmul.f32 %v2148, %v2301
        %v2334 = vmul.f32 %v2150, %v2302
        %v2335 = vmul.f32 %v2152, %v2303
        %v2336 = vmul.f32 %v2154, %v2304
        %v2337 = vmul.f32 %v2156, %v2305
        %v2338 = vmul.f32 %v2158, %v2306
        %v2339 = vmul.f32 %v2160, %v2307
        %v2340 = vmul.f32 %v2162, %v2308
        %v2341 = vmul.f32 %v2164, %v2309
        %v2342 = vmul.f32 %v2166, %v2310
        %v2343 = vmul.f32 %v2168, %v2311
        %v2344 = vmul.f32 %v2170, %v2312
        %v2345 = vmul.f32 %v2172, %v2313
        %v2346 = vmul.f32 %v2174, %v2314
        %v2347 = vmul.f32 %v2176, %v2315
        %v2348 = vmul.f32 %v2178, %v2316
        %v2349 = vmul.f32 %v2180, %v2317
        %v2350 = vmul.f32 %v2182, %v2318
        %v2351 = vmul.f32 %v2184, %v2319
        %v2352 = vmul.f32 %v2186, %v2320
        %v2353 = vmul.f32 %v2188, %v2321
        %v2354 = vmul.f32 %v2190, %v2322
        %v2355 = vmul.f32 %v2192, %v2323
        %v2356 = vmul.f32 %v2194, %v2324
        %v2357 = vmul.f32 %v2196, %v2325
        %v2358 = vmul.f32 %v2198, %v2326
        %v2359 = vpack.c.bf16 %v2327, %v2327
        %v2360 = vpack.c.bf16 %v2328, %v2328
        %v2361 = vpack.c.bf16 %v2329, %v2329
        %v2362 = vpack.c.bf16 %v2330, %v2330
        %v2363 = vpack.c.bf16 %v2331, %v2331
        %v2364 = vpack.c.bf16 %v2332, %v2332
        %v2365 = vpack.c.bf16 %v2333, %v2333
        %v2366 = vpack.c.bf16 %v2334, %v2334
        %v2367 = vpack.c.bf16 %v2335, %v2335
        %v2368 = vpack.c.bf16 %v2336, %v2336
        %v2369 = vpack.c.bf16 %v2337, %v2337
        %v2370 = vpack.c.bf16 %v2338, %v2338
        %v2371 = vpack.c.bf16 %v2339, %v2339
        %v2372 = vpack.c.bf16 %v2340, %v2340
        %v2373 = vpack.c.bf16 %v2341, %v2341
        %v2374 = vpack.c.bf16 %v2342, %v2342
        %v2375 = vpack.c.bf16 %v2343, %v2343
        %v2376 = vpack.c.bf16 %v2344, %v2344
        %v2377 = vpack.c.bf16 %v2345, %v2345
        %v2378 = vpack.c.bf16 %v2346, %v2346
        %v2379 = vpack.c.bf16 %v2347, %v2347
        %v2380 = vpack.c.bf16 %v2348, %v2348
        %v2381 = vpack.c.bf16 %v2349, %v2349
        %v2382 = vpack.c.bf16 %v2350, %v2350
        %v2383 = vpack.c.bf16 %v2351, %v2351
        %v2384 = vpack.c.bf16 %v2352, %v2352
        %v2385 = vpack.c.bf16 %v2353, %v2353
        %v2386 = vpack.c.bf16 %v2354, %v2354
        %v2387 = vpack.c.bf16 %v2355, %v2355
        %v2388 = vpack.c.bf16 %v2356, %v2356
        %v2389 = vpack.c.bf16 %v2357, %v2357
        %v2390 = vpack.c.bf16 %v2358, %v2358
        %v2399 = vunpack.c.l.b16 %v2359
        %v2400 = vunpack.c.l.b16 %v2360
        %v2401 = vunpack.c.l.b16 %v2361
        %v2402 = vunpack.c.l.b16 %v2362
        %v2403 = vunpack.c.l.b16 %v2363
        %v2404 = vunpack.c.l.b16 %v2364
        %v2405 = vunpack.c.l.b16 %v2365
        %v2406 = vunpack.c.l.b16 %v2366
        %v2407 = vpack.c.b16 %v2400, %v2399
        %v2408 = vpack.c.b16 %v2402, %v2401
        %v2409 = vpack.c.b16 %v2404, %v2403
        %v2410 = vpack.c.b16 %v2406, %v2405
        %2411 = vrot.lane.b32.xlu0 %v713, 56
        %v2412 = vpop.permute.xlu0 %2411
        %2413 = vrot.lane.b32.xlu0 %v714, 56
        %v2414 = vpop.permute.xlu0 %2413
        %2415 = vrot.lane.b32.xlu0 %v715, 56
        %v2416 = vpop.permute.xlu0 %2415
        %2417 = vrot.lane.b32.xlu0 %v716, 56
        %v2418 = vpop.permute.xlu0 %2417
        %v2424 = vsel %vm1022, %v2407, 0
        %v2427 = vsel %vm1022, %v2408, 0
        %v2430 = vsel %vm1022, %v2409, 0
        %v2433 = vsel %vm1022, %v2410, 0
        %2435 = vmatpush.bf16.msra.mxu0 0
        %2436 = vmatpush.bf16.msra.mxu0 0
        %2437 = vmatpush.bf16.msra.mxu0 0
        %2438 = vmatpush.bf16.msra.mxu0 0
        %2439 = vmatpush.bf16.msra.mxu0 %v2418
        %2440 = vmatpush.bf16.msra.mxu0 %v2416
        %2441 = vmatpush.bf16.msra.mxu0 %v2414
        %2442 = vmatpush.bf16.msra.mxu0 %v2412
        %2443 = vmatmul.bf16.gmra.mxu0 %v2424
        %v2444 = vpop.f32.mrf.mxu0
        %v2445 = vadd.f32 0.0, %v2444
        %v2446 = vpop.f32.mrf.mxu0
        %v2447 = vadd.f32 0.0, %v2446
        %2448 = vmatmul.bf16.gmra.mxu0 %v2427
        %v2449 = vpop.f32.mrf.mxu0
        %v2450 = vadd.f32 0.0, %v2449
        %v2451 = vpop.f32.mrf.mxu0
        %v2452 = vadd.f32 0.0, %v2451
        %2453 = vmatmul.bf16.gmra.mxu0 %v2430
        %v2454 = vpop.f32.mrf.mxu0
        %v2455 = vadd.f32 0.0, %v2454
        %v2456 = vpop.f32.mrf.mxu0
        %v2457 = vadd.f32 0.0, %v2456
        %2458 = vmatmul.bf16.gmra.mxu0 %v2433
        %v2459 = vpop.f32.mrf.mxu0
        %v2460 = vadd.f32 0.0, %v2459
        %v2461 = vpop.f32.mrf.mxu0
        %v2462 = vadd.f32 0.0, %v2461
        %2463 = vdwg.mxu0
        %v2472 = vunpack.c.l.b16 %v2367
        %v2473 = vunpack.c.l.b16 %v2368
        %v2474 = vunpack.c.l.b16 %v2369
        %v2475 = vunpack.c.l.b16 %v2370
        %v2476 = vunpack.c.l.b16 %v2371
        %v2477 = vunpack.c.l.b16 %v2372
        %v2478 = vunpack.c.l.b16 %v2373
        %v2479 = vunpack.c.l.b16 %v2374
        %v2480 = vpack.c.b16 %v2473, %v2472
        %v2481 = vpack.c.b16 %v2475, %v2474
        %v2482 = vpack.c.b16 %v2477, %v2476
        %v2483 = vpack.c.b16 %v2479, %v2478
        %2484 = vrot.lane.b32.xlu0 %v795, 56
        %v2485 = vpop.permute.xlu0 %2484
        %2486 = vrot.lane.b32.xlu0 %v796, 56
        %v2487 = vpop.permute.xlu0 %2486
        %2488 = vrot.lane.b32.xlu0 %v797, 56
        %v2489 = vpop.permute.xlu0 %2488
        %2490 = vrot.lane.b32.xlu0 %v798, 56
        %v2491 = vpop.permute.xlu0 %2490
        %v2497 = vsel %vm1022, %v2480, 0
        %v2500 = vsel %vm1022, %v2481, 0
        %v2503 = vsel %vm1022, %v2482, 0
        %v2506 = vsel %vm1022, %v2483, 0
        %2508 = vmatpush.bf16.msra.mxu0 0
        %2509 = vmatpush.bf16.msra.mxu0 0
        %2510 = vmatpush.bf16.msra.mxu0 0
        %2511 = vmatpush.bf16.msra.mxu0 0
        %2512 = vmatpush.bf16.msra.mxu0 %v2491
        %2513 = vmatpush.bf16.msra.mxu0 %v2489
        %2514 = vmatpush.bf16.msra.mxu0 %v2487
        %2515 = vmatpush.bf16.msra.mxu0 %v2485
        %2516 = vmatmul.bf16.gmra.mxu0 %v2497
        %v2517 = vpop.f32.mrf.mxu0
        %v2518 = vadd.f32 0.0, %v2517
        %v2519 = vpop.f32.mrf.mxu0
        %v2520 = vadd.f32 0.0, %v2519
        %2521 = vmatmul.bf16.gmra.mxu0 %v2500
        %v2522 = vpop.f32.mrf.mxu0
        %v2523 = vadd.f32 0.0, %v2522
        %v2524 = vpop.f32.mrf.mxu0
        %v2525 = vadd.f32 0.0, %v2524
        %2526 = vmatmul.bf16.gmra.mxu0 %v2503
        %v2527 = vpop.f32.mrf.mxu0
        %v2528 = vadd.f32 0.0, %v2527
        %v2529 = vpop.f32.mrf.mxu0
        %v2530 = vadd.f32 0.0, %v2529
        %2531 = vmatmul.bf16.gmra.mxu0 %v2506
        %v2532 = vpop.f32.mrf.mxu0
        %v2533 = vadd.f32 0.0, %v2532
        %v2534 = vpop.f32.mrf.mxu0
        %v2535 = vadd.f32 0.0, %v2534
        %2536 = vdwg.mxu0
        %v2545 = vunpack.c.l.b16 %v2375
        %v2546 = vunpack.c.l.b16 %v2376
        %v2547 = vunpack.c.l.b16 %v2377
        %v2548 = vunpack.c.l.b16 %v2378
        %v2549 = vunpack.c.l.b16 %v2379
        %v2550 = vunpack.c.l.b16 %v2380
        %v2551 = vunpack.c.l.b16 %v2381
        %v2552 = vunpack.c.l.b16 %v2382
        %v2553 = vpack.c.b16 %v2546, %v2545
        %v2554 = vpack.c.b16 %v2548, %v2547
        %v2555 = vpack.c.b16 %v2550, %v2549
        %v2556 = vpack.c.b16 %v2552, %v2551
        %2557 = vrot.lane.b32.xlu0 %v876, 56
        %v2558 = vpop.permute.xlu0 %2557
        %2559 = vrot.lane.b32.xlu0 %v877, 56
        %v2560 = vpop.permute.xlu0 %2559
        %2561 = vrot.lane.b32.xlu0 %v878, 56
        %v2562 = vpop.permute.xlu0 %2561
        %2563 = vrot.lane.b32.xlu0 %v879, 56
        %v2564 = vpop.permute.xlu0 %2563
        %v2570 = vsel %vm1022, %v2553, 0
        %v2573 = vsel %vm1022, %v2554, 0
        %v2576 = vsel %vm1022, %v2555, 0
        %v2579 = vsel %vm1022, %v2556, 0
        %2581 = vmatpush.bf16.msra.mxu0 0
        %2582 = vmatpush.bf16.msra.mxu0 0
        %2583 = vmatpush.bf16.msra.mxu0 0
        %2584 = vmatpush.bf16.msra.mxu0 0
        %2585 = vmatpush.bf16.msra.mxu0 %v2564
        %2586 = vmatpush.bf16.msra.mxu0 %v2562
        %2587 = vmatpush.bf16.msra.mxu0 %v2560
        %2588 = vmatpush.bf16.msra.mxu0 %v2558
        %2589 = vmatmul.bf16.gmra.mxu0 %v2570
        %v2590 = vpop.f32.mrf.mxu0
        %v2591 = vadd.f32 0.0, %v2590
        %v2592 = vpop.f32.mrf.mxu0
        %v2593 = vadd.f32 0.0, %v2592
        %2594 = vmatmul.bf16.gmra.mxu0 %v2573
        %v2595 = vpop.f32.mrf.mxu0
        %v2596 = vadd.f32 0.0, %v2595
        %v2597 = vpop.f32.mrf.mxu0
        %v2598 = vadd.f32 0.0, %v2597
        %2599 = vmatmul.bf16.gmra.mxu0 %v2576
        %v2600 = vpop.f32.mrf.mxu0
        %v2601 = vadd.f32 0.0, %v2600
        %v2602 = vpop.f32.mrf.mxu0
        %v2603 = vadd.f32 0.0, %v2602
        %2604 = vmatmul.bf16.gmra.mxu0 %v2579
        %v2605 = vpop.f32.mrf.mxu0
        %v2606 = vadd.f32 0.0, %v2605
        %v2607 = vpop.f32.mrf.mxu0
        %v2608 = vadd.f32 0.0, %v2607
        %2609 = vdwg.mxu0
        %v2618 = vunpack.c.l.b16 %v2383
        %v2619 = vunpack.c.l.b16 %v2384
        %v2620 = vunpack.c.l.b16 %v2385
        %v2621 = vunpack.c.l.b16 %v2386
        %v2622 = vunpack.c.l.b16 %v2387
        %v2623 = vunpack.c.l.b16 %v2388
        %v2624 = vunpack.c.l.b16 %v2389
        %v2625 = vunpack.c.l.b16 %v2390
        %v2626 = vpack.c.b16 %v2619, %v2618
        %v2627 = vpack.c.b16 %v2621, %v2620
        %v2628 = vpack.c.b16 %v2623, %v2622
        %v2629 = vpack.c.b16 %v2625, %v2624
        %2630 = vrot.lane.b32.xlu0 %v957, 56
        %v2631 = vpop.permute.xlu0 %2630
        %2632 = vrot.lane.b32.xlu0 %v958, 56
        %v2633 = vpop.permute.xlu0 %2632
        %2634 = vrot.lane.b32.xlu0 %v959, 56
        %v2635 = vpop.permute.xlu0 %2634
        %2636 = vrot.lane.b32.xlu0 %v960, 56
        %v2637 = vpop.permute.xlu0 %2636
        %v2643 = vsel %vm1022, %v2626, 0
        %v2646 = vsel %vm1022, %v2627, 0
        %v2649 = vsel %vm1022, %v2628, 0
        %v2652 = vsel %vm1022, %v2629, 0
        %2654 = vmatpush.bf16.msra.mxu0 0
        %2655 = vmatpush.bf16.msra.mxu0 0
        %2656 = vmatpush.bf16.msra.mxu0 0
        %2657 = vmatpush.bf16.msra.mxu0 0
        %2658 = vmatpush.bf16.msra.mxu0 %v2637
        %2659 = vmatpush.bf16.msra.mxu0 %v2635
        %2660 = vmatpush.bf16.msra.mxu0 %v2633
        %2661 = vmatpush.bf16.msra.mxu0 %v2631
        %2662 = vmatmul.bf16.gmra.mxu0 %v2643
        %v2663 = vpop.f32.mrf.mxu0
        %v2664 = vadd.f32 0.0, %v2663
        %v2665 = vpop.f32.mrf.mxu0
        %v2666 = vadd.f32 0.0, %v2665
        %2667 = vmatmul.bf16.gmra.mxu0 %v2646
        %v2668 = vpop.f32.mrf.mxu0
        %v2669 = vadd.f32 0.0, %v2668
        %v2670 = vpop.f32.mrf.mxu0
        %v2671 = vadd.f32 0.0, %v2670
        %2672 = vmatmul.bf16.gmra.mxu0 %v2649
        %v2673 = vpop.f32.mrf.mxu0
        %v2674 = vadd.f32 0.0, %v2673
        %v2675 = vpop.f32.mrf.mxu0
        %v2676 = vadd.f32 0.0, %v2675
        %2677 = vmatmul.bf16.gmra.mxu0 %v2652
        %v2678 = vpop.f32.mrf.mxu0
        %v2679 = vadd.f32 0.0, %v2678
        %v2680 = vpop.f32.mrf.mxu0
        %v2681 = vadd.f32 0.0, %v2680
        %2682 = vdwg.mxu0
        %2715 = vrot.lane.b32.xlu0 %v2445, 8
        %v2716 = vpop.permute.xlu0 %2715
        %2717 = vrot.lane.b32.xlu0 %v2447, 8
        %v2718 = vpop.permute.xlu0 %2717
        %2719 = vrot.lane.b32.xlu0 %v2450, 8
        %v2720 = vpop.permute.xlu0 %2719
        %2721 = vrot.lane.b32.xlu0 %v2452, 8
        %v2722 = vpop.permute.xlu0 %2721
        %2723 = vrot.lane.b32.xlu0 %v2455, 8
        %v2724 = vpop.permute.xlu0 %2723
        %2725 = vrot.lane.b32.xlu0 %v2457, 8
        %v2726 = vpop.permute.xlu0 %2725
        %2727 = vrot.lane.b32.xlu0 %v2460, 8
        %v2728 = vpop.permute.xlu0 %2727
        %2729 = vrot.lane.b32.xlu0 %v2462, 8
        %v2730 = vpop.permute.xlu0 %2729
        %2731 = vrot.lane.b32.xlu0 %v2518, 8
        %v2732 = vpop.permute.xlu0 %2731
        %2733 = vrot.lane.b32.xlu0 %v2520, 8
        %v2734 = vpop.permute.xlu0 %2733
        %2735 = vrot.lane.b32.xlu0 %v2523, 8
        %v2736 = vpop.permute.xlu0 %2735
        %2737 = vrot.lane.b32.xlu0 %v2525, 8
        %v2738 = vpop.permute.xlu0 %2737
        %2739 = vrot.lane.b32.xlu0 %v2528, 8
        %v2740 = vpop.permute.xlu0 %2739
        %2741 = vrot.lane.b32.xlu0 %v2530, 8
        %v2742 = vpop.permute.xlu0 %2741
        %2743 = vrot.lane.b32.xlu0 %v2533, 8
        %v2744 = vpop.permute.xlu0 %2743
        %2745 = vrot.lane.b32.xlu0 %v2535, 8
        %v2746 = vpop.permute.xlu0 %2745
        %2747 = vrot.lane.b32.xlu0 %v2591, 8
        %v2748 = vpop.permute.xlu0 %2747
        %2749 = vrot.lane.b32.xlu0 %v2593, 8
        %v2750 = vpop.permute.xlu0 %2749
        %2751 = vrot.lane.b32.xlu0 %v2596, 8
        %v2752 = vpop.permute.xlu0 %2751
        %2753 = vrot.lane.b32.xlu0 %v2598, 8
        %v2754 = vpop.permute.xlu0 %2753
        %2755 = vrot.lane.b32.xlu0 %v2601, 8
        %v2756 = vpop.permute.xlu0 %2755
        %2757 = vrot.lane.b32.xlu0 %v2603, 8
        %v2758 = vpop.permute.xlu0 %2757
        %2759 = vrot.lane.b32.xlu0 %v2606, 8
        %v2760 = vpop.permute.xlu0 %2759
        %2761 = vrot.lane.b32.xlu0 %v2608, 8
        %v2762 = vpop.permute.xlu0 %2761
        %2763 = vrot.lane.b32.xlu0 %v2664, 8
        %v2764 = vpop.permute.xlu0 %2763
        %2765 = vrot.lane.b32.xlu0 %v2666, 8
        %v2766 = vpop.permute.xlu0 %2765
        %2767 = vrot.lane.b32.xlu0 %v2669, 8
        %v2768 = vpop.permute.xlu0 %2767
        %2769 = vrot.lane.b32.xlu0 %v2671, 8
        %v2770 = vpop.permute.xlu0 %2769
        %2771 = vrot.lane.b32.xlu0 %v2674, 8
        %v2772 = vpop.permute.xlu0 %2771
        %2773 = vrot.lane.b32.xlu0 %v2676, 8
        %v2774 = vpop.permute.xlu0 %2773
        %2775 = vrot.lane.b32.xlu0 %v2679, 8
        %v2776 = vpop.permute.xlu0 %2775
        %2777 = vrot.lane.b32.xlu0 %v2681, 8
        %v2778 = vpop.permute.xlu0 %2777
        %vm2811 = vcmask 130112
        %2812 = vst.msk [vmem:[%s363] sm:$0xff] %vm2811, %v2716
        %2813 = vst.msk [vmem:[%s363 + $0x8] sm:$0xff] %vm2811, %v2718
        %2814 = vst.msk [vmem:[%s363 + $0x10] sm:$0xff] %vm2811, %v2720
        %2815 = vst.msk [vmem:[%s363 + $0x18] sm:$0xff] %vm2811, %v2722
        %2816 = vst.msk [vmem:[%s363 + $0x20] sm:$0xff] %vm2811, %v2724
        %2817 = vst.msk [vmem:[%s363 + $0x28] sm:$0xff] %vm2811, %v2726
        %2818 = vst.msk [vmem:[%s363 + $0x30] sm:$0xff] %vm2811, %v2728
        %2819 = vst.msk [vmem:[%s363 + $0x38] sm:$0xff] %vm2811, %v2730
        %2820 = vst.msk [vmem:[%s363 + $0x40] sm:$0xff] %vm2811, %v2732
        %2821 = vst.msk [vmem:[%s363 + $0x48] sm:$0xff] %vm2811, %v2734
        %2822 = vst.msk [vmem:[%s363 + $0x50] sm:$0xff] %vm2811, %v2736
        %2823 = vst.msk [vmem:[%s363 + $0x58] sm:$0xff] %vm2811, %v2738
        %2824 = vst.msk [vmem:[%s363 + $0x60] sm:$0xff] %vm2811, %v2740
        %2825 = vst.msk [vmem:[%s363 + $0x68] sm:$0xff] %vm2811, %v2742
        %2826 = vst.msk [vmem:[%s363 + $0x70] sm:$0xff] %vm2811, %v2744
        %2827 = vst.msk [vmem:[%s363 + $0x78] sm:$0xff] %vm2811, %v2746
        %2828 = vst.msk [vmem:[%s363 + $0x80] sm:$0xff] %vm2811, %v2748
        %2829 = vst.msk [vmem:[%s363 + $0x88] sm:$0xff] %vm2811, %v2750
        %2830 = vst.msk [vmem:[%s363 + $0x90] sm:$0xff] %vm2811, %v2752
        %2831 = vst.msk [vmem:[%s363 + $0x98] sm:$0xff] %vm2811, %v2754
        %2832 = vst.msk [vmem:[%s363 + $0xa0] sm:$0xff] %vm2811, %v2756
        %2833 = vst.msk [vmem:[%s363 + $0xa8] sm:$0xff] %vm2811, %v2758
        %2834 = vst.msk [vmem:[%s363 + $0xb0] sm:$0xff] %vm2811, %v2760
        %2835 = vst.msk [vmem:[%s363 + $0xb8] sm:$0xff] %vm2811, %v2762
        %2836 = vst.msk [vmem:[%s363 + $0xc0] sm:$0xff] %vm2811, %v2764
        %2837 = vst.msk [vmem:[%s363 + $0xc8] sm:$0xff] %vm2811, %v2766
        %2838 = vst.msk [vmem:[%s363 + $0xd0] sm:$0xff] %vm2811, %v2768
        %2839 = vst.msk [vmem:[%s363 + $0xd8] sm:$0xff] %vm2811, %v2770
        %2840 = vst.msk [vmem:[%s363 + $0xe0] sm:$0xff] %vm2811, %v2772
        %2841 = vst.msk [vmem:[%s363 + $0xe8] sm:$0xff] %vm2811, %v2774
        %2842 = vst.msk [vmem:[%s363 + $0xf0] sm:$0xff] %vm2811, %v2776
        %2843 = vst.msk [vmem:[%s363 + $0xf8] sm:$0xff] %vm2811, %v2778
        %2844 = vrot.lane.b32.xlu0 %v713, 112
        %v2845 = vpop.permute.xlu0 %2844
        %2846 = vrot.lane.b32.xlu0 %v714, 112
        %v2847 = vpop.permute.xlu0 %2846
        %2848 = vrot.lane.b32.xlu0 %v715, 112
        %v2849 = vpop.permute.xlu0 %2848
        %2850 = vrot.lane.b32.xlu0 %v716, 112
        %v2851 = vpop.permute.xlu0 %2850
        %2852 = vrot.lane.b32.xlu0 %v713, 80
        %v2853 = vpop.permute.xlu0 %2852
        %2854 = vrot.lane.b32.xlu0 %v714, 80
        %v2855 = vpop.permute.xlu0 %2854
        %2856 = vrot.lane.b32.xlu0 %v715, 80
        %v2857 = vpop.permute.xlu0 %2856
        %2858 = vrot.lane.b32.xlu0 %v716, 80
        %v2859 = vpop.permute.xlu0 %2858
        %v2861 = vsel %vm725, %v2845, 0
        %v2864 = vsel %vm725, %v2847, 0
        %v2867 = vsel %vm725, %v2849, 0
        %v2870 = vsel %vm725, %v2851, 0
        %v2873 = vsel %vm725, %v2853, 0
        %v2876 = vsel %vm725, %v2855, 0
        %v2879 = vsel %vm725, %v2857, 0
        %v2882 = vsel %vm725, %v2859, 0
        %2884 = vmatpush.bf16.xpose.msra.mxu0 0
        %2885 = vmatpush.bf16.xpose.msra.mxu0 0
        %2886 = vmatpush.bf16.xpose.msra.mxu0 0
        %2887 = vmatpush.bf16.xpose.msra.mxu0 0
        %2888 = vmatpush.bf16.xpose.msra.mxu0 %v2882
        %2889 = vmatpush.bf16.xpose.msra.mxu0 %v2879
        %2890 = vmatpush.bf16.xpose.msra.mxu0 %v2876
        %2891 = vmatpush.bf16.xpose.msra.mxu0 %v2873
        %2892 = vmatmul.bf16.gmra.mxu0 %v2861
        %v2893 = vpop.f32.mrf.mxu0
        %v2894 = vadd.f32 %v681, %v2893
        %v2895 = vpop.f32.mrf.mxu0
        %v2896 = vadd.f32 %v682, %v2895
        %2897 = vmatmul.bf16.gmra.mxu0 %v2864
        %v2898 = vpop.f32.mrf.mxu0
        %v2899 = vadd.f32 %v683, %v2898
        %v2900 = vpop.f32.mrf.mxu0
        %v2901 = vadd.f32 %v684, %v2900
        %2902 = vmatmul.bf16.gmra.mxu0 %v2867
        %v2903 = vpop.f32.mrf.mxu0
        %v2904 = vadd.f32 %v685, %v2903
        %v2905 = vpop.f32.mrf.mxu0
        %v2906 = vadd.f32 %v686, %v2905
        %2907 = vmatmul.bf16.gmra.mxu0 %v2870
        %v2908 = vpop.f32.mrf.mxu0
        %v2909 = vadd.f32 %v687, %v2908
        %v2910 = vpop.f32.mrf.mxu0
        %v2911 = vadd.f32 %v688, %v2910
        %2912 = vdwg.mxu0
        %2913 = vrot.lane.b32.xlu0 %v795, 112
        %v2914 = vpop.permute.xlu0 %2913
        %2915 = vrot.lane.b32.xlu0 %v796, 112
        %v2916 = vpop.permute.xlu0 %2915
        %2917 = vrot.lane.b32.xlu0 %v797, 112
        %v2918 = vpop.permute.xlu0 %2917
        %2919 = vrot.lane.b32.xlu0 %v798, 112
        %v2920 = vpop.permute.xlu0 %2919
        %2921 = vrot.lane.b32.xlu0 %v795, 80
        %v2922 = vpop.permute.xlu0 %2921
        %2923 = vrot.lane.b32.xlu0 %v796, 80
        %v2924 = vpop.permute.xlu0 %2923
        %2925 = vrot.lane.b32.xlu0 %v797, 80
        %v2926 = vpop.permute.xlu0 %2925
        %2927 = vrot.lane.b32.xlu0 %v798, 80
        %v2928 = vpop.permute.xlu0 %2927
        %v2930 = vsel %vm725, %v2914, 0
        %v2933 = vsel %vm725, %v2916, 0
        %v2936 = vsel %vm725, %v2918, 0
        %v2939 = vsel %vm725, %v2920, 0
        %v2942 = vsel %vm725, %v2922, 0
        %v2945 = vsel %vm725, %v2924, 0
        %v2948 = vsel %vm725, %v2926, 0
        %v2951 = vsel %vm725, %v2928, 0
        %2953 = vmatpush.bf16.xpose.msra.mxu0 0
        %2954 = vmatpush.bf16.xpose.msra.mxu0 0
        %2955 = vmatpush.bf16.xpose.msra.mxu0 0
        %2956 = vmatpush.bf16.xpose.msra.mxu0 0
        %2957 = vmatpush.bf16.xpose.msra.mxu0 %v2951
        %2958 = vmatpush.bf16.xpose.msra.mxu0 %v2948
        %2959 = vmatpush.bf16.xpose.msra.mxu0 %v2945
        %2960 = vmatpush.bf16.xpose.msra.mxu0 %v2942
        %2961 = vmatmul.bf16.gmra.mxu0 %v2930
        %v2962 = vpop.f32.mrf.mxu0
        %v2963 = vadd.f32 %v681, %v2962
        %v2964 = vpop.f32.mrf.mxu0
        %v2965 = vadd.f32 %v682, %v2964
        %2966 = vmatmul.bf16.gmra.mxu0 %v2933
        %v2967 = vpop.f32.mrf.mxu0
        %v2968 = vadd.f32 %v683, %v2967
        %v2969 = vpop.f32.mrf.mxu0
        %v2970 = vadd.f32 %v684, %v2969
        %2971 = vmatmul.bf16.gmra.mxu0 %v2936
        %v2972 = vpop.f32.mrf.mxu0
        %v2973 = vadd.f32 %v685, %v2972
        %v2974 = vpop.f32.mrf.mxu0
        %v2975 = vadd.f32 %v686, %v2974
        %2976 = vmatmul.bf16.gmra.mxu0 %v2939
        %v2977 = vpop.f32.mrf.mxu0
        %v2978 = vadd.f32 %v687, %v2977
        %v2979 = vpop.f32.mrf.mxu0
        %v2980 = vadd.f32 %v688, %v2979
        %2981 = vdwg.mxu0
        %2982 = vrot.lane.b32.xlu0 %v876, 112
        %v2983 = vpop.permute.xlu0 %2982
        %2984 = vrot.lane.b32.xlu0 %v877, 112
        %v2985 = vpop.permute.xlu0 %2984
        %2986 = vrot.lane.b32.xlu0 %v878, 112
        %v2987 = vpop.permute.xlu0 %2986
        %2988 = vrot.lane.b32.xlu0 %v879, 112
        %v2989 = vpop.permute.xlu0 %2988
        %2990 = vrot.lane.b32.xlu0 %v876, 80
        %v2991 = vpop.permute.xlu0 %2990
        %2992 = vrot.lane.b32.xlu0 %v877, 80
        %v2993 = vpop.permute.xlu0 %2992
        %2994 = vrot.lane.b32.xlu0 %v878, 80
        %v2995 = vpop.permute.xlu0 %2994
        %2996 = vrot.lane.b32.xlu0 %v879, 80
        %v2997 = vpop.permute.xlu0 %2996
        %v2999 = vsel %vm725, %v2983, 0
        %v3002 = vsel %vm725, %v2985, 0
        %v3005 = vsel %vm725, %v2987, 0
        %v3008 = vsel %vm725, %v2989, 0
        %v3011 = vsel %vm725, %v2991, 0
        %v3014 = vsel %vm725, %v2993, 0
        %v3017 = vsel %vm725, %v2995, 0
        %v3020 = vsel %vm725, %v2997, 0
        %3022 = vmatpush.bf16.xpose.msra.mxu0 0
        %3023 = vmatpush.bf16.xpose.msra.mxu0 0
        %3024 = vmatpush.bf16.xpose.msra.mxu0 0
        %3025 = vmatpush.bf16.xpose.msra.mxu0 0
        %3026 = vmatpush.bf16.xpose.msra.mxu0 %v3020
        %3027 = vmatpush.bf16.xpose.msra.mxu0 %v3017
        %3028 = vmatpush.bf16.xpose.msra.mxu0 %v3014
        %3029 = vmatpush.bf16.xpose.msra.mxu0 %v3011
        %3030 = vmatmul.bf16.gmra.mxu0 %v2999
        %v3031 = vpop.f32.mrf.mxu0
        %v3032 = vadd.f32 %v681, %v3031
        %v3033 = vpop.f32.mrf.mxu0
        %v3034 = vadd.f32 %v682, %v3033
        %3035 = vmatmul.bf16.gmra.mxu0 %v3002
        %v3036 = vpop.f32.mrf.mxu0
        %v3037 = vadd.f32 %v683, %v3036
        %v3038 = vpop.f32.mrf.mxu0
        %v3039 = vadd.f32 %v684, %v3038
        %3040 = vmatmul.bf16.gmra.mxu0 %v3005
        %v3041 = vpop.f32.mrf.mxu0
        %v3042 = vadd.f32 %v685, %v3041
        %v3043 = vpop.f32.mrf.mxu0
        %v3044 = vadd.f32 %v686, %v3043
        %3045 = vmatmul.bf16.gmra.mxu0 %v3008
        %v3046 = vpop.f32.mrf.mxu0
        %v3047 = vadd.f32 %v687, %v3046
        %v3048 = vpop.f32.mrf.mxu0
        %v3049 = vadd.f32 %v688, %v3048
        %3050 = vdwg.mxu0
        %3051 = vrot.lane.b32.xlu0 %v957, 112
        %v3052 = vpop.permute.xlu0 %3051
        %3053 = vrot.lane.b32.xlu0 %v958, 112
        %v3054 = vpop.permute.xlu0 %3053
        %3055 = vrot.lane.b32.xlu0 %v959, 112
        %v3056 = vpop.permute.xlu0 %3055
        %3057 = vrot.lane.b32.xlu0 %v960, 112
        %v3058 = vpop.permute.xlu0 %3057
        %3059 = vrot.lane.b32.xlu0 %v957, 80
        %v3060 = vpop.permute.xlu0 %3059
        %3061 = vrot.lane.b32.xlu0 %v958, 80
        %v3062 = vpop.permute.xlu0 %3061
        %3063 = vrot.lane.b32.xlu0 %v959, 80
        %v3064 = vpop.permute.xlu0 %3063
        %3065 = vrot.lane.b32.xlu0 %v960, 80
        %v3066 = vpop.permute.xlu0 %3065
        %v3068 = vsel %vm725, %v3052, 0
        %v3071 = vsel %vm725, %v3054, 0
        %v3074 = vsel %vm725, %v3056, 0
        %v3077 = vsel %vm725, %v3058, 0
        %v3080 = vsel %vm725, %v3060, 0
        %v3083 = vsel %vm725, %v3062, 0
        %v3086 = vsel %vm725, %v3064, 0
        %v3089 = vsel %vm725, %v3066, 0
        %3091 = vmatpush.bf16.xpose.msra.mxu0 0
        %3092 = vmatpush.bf16.xpose.msra.mxu0 0
        %3093 = vmatpush.bf16.xpose.msra.mxu0 0
        %3094 = vmatpush.bf16.xpose.msra.mxu0 0
        %3095 = vmatpush.bf16.xpose.msra.mxu0 %v3089
        %3096 = vmatpush.bf16.xpose.msra.mxu0 %v3086
        %3097 = vmatpush.bf16.xpose.msra.mxu0 %v3083
        %3098 = vmatpush.bf16.xpose.msra.mxu0 %v3080
        %3099 = vmatmul.bf16.gmra.mxu0 %v3068
        %v3100 = vpop.f32.mrf.mxu0
        %v3101 = vadd.f32 %v681, %v3100
        %v3102 = vpop.f32.mrf.mxu0
        %v3103 = vadd.f32 %v682, %v3102
        %3104 = vmatmul.bf16.gmra.mxu0 %v3071
        %v3105 = vpop.f32.mrf.mxu0
        %v3106 = vadd.f32 %v683, %v3105
        %v3107 = vpop.f32.mrf.mxu0
        %v3108 = vadd.f32 %v684, %v3107
        %3109 = vmatmul.bf16.gmra.mxu0 %v3074
        %v3110 = vpop.f32.mrf.mxu0
        %v3111 = vadd.f32 %v685, %v3110
        %v3112 = vpop.f32.mrf.mxu0
        %v3113 = vadd.f32 %v686, %v3112
        %3114 = vmatmul.bf16.gmra.mxu0 %v3077
        %v3115 = vpop.f32.mrf.mxu0
        %v3116 = vadd.f32 %v687, %v3115
        %v3117 = vpop.f32.mrf.mxu0
        %v3118 = vadd.f32 %v688, %v3117
        %3119 = vdwg.mxu0
        %v3120 = vsel %vm1022, %v2894, -inf
        %3121 = vmax.xlane.f32.xlu0 %v3120
        %v3122 = vpop.xlane.xlu0 %3121
        %v3123 = vsel %vm1022, %v2896, -inf
        %3124 = vmax.xlane.f32.xlu0 %v3123
        %v3125 = vpop.xlane.xlu0 %3124
        %v3126 = vsel %vm1022, %v2899, -inf
        %3127 = vmax.xlane.f32.xlu0 %v3126
        %v3128 = vpop.xlane.xlu0 %3127
        %v3129 = vsel %vm1022, %v2901, -inf
        %3130 = vmax.xlane.f32.xlu0 %v3129
        %v3131 = vpop.xlane.xlu0 %3130
        %v3132 = vsel %vm1022, %v2904, -inf
        %3133 = vmax.xlane.f32.xlu0 %v3132
        %v3134 = vpop.xlane.xlu0 %3133
        %v3135 = vsel %vm1022, %v2906, -inf
        %3136 = vmax.xlane.f32.xlu0 %v3135
        %v3137 = vpop.xlane.xlu0 %3136
        %v3138 = vsel %vm1022, %v2909, -inf
        %3139 = vmax.xlane.f32.xlu0 %v3138
        %v3140 = vpop.xlane.xlu0 %3139
        %v3141 = vsel %vm1022, %v2911, -inf
        %3142 = vmax.xlane.f32.xlu0 %v3141
        %v3143 = vpop.xlane.xlu0 %3142
        %v3144 = vsel %vm1022, %v2963, -inf
        %3145 = vmax.xlane.f32.xlu0 %v3144
        %v3146 = vpop.xlane.xlu0 %3145
        %v3147 = vsel %vm1022, %v2965, -inf
        %3148 = vmax.xlane.f32.xlu0 %v3147
        %v3149 = vpop.xlane.xlu0 %3148
        %v3150 = vsel %vm1022, %v2968, -inf
        %3151 = vmax.xlane.f32.xlu0 %v3150
        %v3152 = vpop.xlane.xlu0 %3151
        %v3153 = vsel %vm1022, %v2970, -inf
        %3154 = vmax.xlane.f32.xlu0 %v3153
        %v3155 = vpop.xlane.xlu0 %3154
        %v3156 = vsel %vm1022, %v2973, -inf
        %3157 = vmax.xlane.f32.xlu0 %v3156
        %v3158 = vpop.xlane.xlu0 %3157
        %v3159 = vsel %vm1022, %v2975, -inf
        %3160 = vmax.xlane.f32.xlu0 %v3159
        %v3161 = vpop.xlane.xlu0 %3160
        %v3162 = vsel %vm1022, %v2978, -inf
        %3163 = vmax.xlane.f32.xlu0 %v3162
        %v3164 = vpop.xlane.xlu0 %3163
        %v3165 = vsel %vm1022, %v2980, -inf
        %3166 = vmax.xlane.f32.xlu0 %v3165
        %v3167 = vpop.xlane.xlu0 %3166
        %v3168 = vsel %vm1022, %v3032, -inf
        %3169 = vmax.xlane.f32.xlu0 %v3168
        %v3170 = vpop.xlane.xlu0 %3169
        %v3171 = vsel %vm1022, %v3034, -inf
        %3172 = vmax.xlane.f32.xlu0 %v3171
        %v3173 = vpop.xlane.xlu0 %3172
        %v3174 = vsel %vm1022, %v3037, -inf
        %3175 = vmax.xlane.f32.xlu0 %v3174
        %v3176 = vpop.xlane.xlu0 %3175
        %v3177 = vsel %vm1022, %v3039, -inf
        %3178 = vmax.xlane.f32.xlu0 %v3177
        %v3179 = vpop.xlane.xlu0 %3178
        %v3180 = vsel %vm1022, %v3042, -inf
        %3181 = vmax.xlane.f32.xlu0 %v3180
        %v3182 = vpop.xlane.xlu0 %3181
        %v3183 = vsel %vm1022, %v3044, -inf
        %3184 = vmax.xlane.f32.xlu0 %v3183
        %v3185 = vpop.xlane.xlu0 %3184
        %v3186 = vsel %vm1022, %v3047, -inf
        %3187 = vmax.xlane.f32.xlu0 %v3186
        %v3188 = vpop.xlane.xlu0 %3187
        %v3189 = vsel %vm1022, %v3049, -inf
        %3190 = vmax.xlane.f32.xlu0 %v3189
        %v3191 = vpop.xlane.xlu0 %3190
        %v3192 = vsel %vm1022, %v3101, -inf
        %3193 = vmax.xlane.f32.xlu0 %v3192
        %v3194 = vpop.xlane.xlu0 %3193
        %v3195 = vsel %vm1022, %v3103, -inf
        %3196 = vmax.xlane.f32.xlu0 %v3195
        %v3197 = vpop.xlane.xlu0 %3196
        %v3198 = vsel %vm1022, %v3106, -inf
        %3199 = vmax.xlane.f32.xlu0 %v3198
        %v3200 = vpop.xlane.xlu0 %3199
        %v3201 = vsel %vm1022, %v3108, -inf
        %3202 = vmax.xlane.f32.xlu0 %v3201
        %v3203 = vpop.xlane.xlu0 %3202
        %v3204 = vsel %vm1022, %v3111, -inf
        %3205 = vmax.xlane.f32.xlu0 %v3204
        %v3206 = vpop.xlane.xlu0 %3205
        %v3207 = vsel %vm1022, %v3113, -inf
        %3208 = vmax.xlane.f32.xlu0 %v3207
        %v3209 = vpop.xlane.xlu0 %3208
        %v3210 = vsel %vm1022, %v3116, -inf
        %3211 = vmax.xlane.f32.xlu0 %v3210
        %v3212 = vpop.xlane.xlu0 %3211
        %v3213 = vsel %vm1022, %v3118, -inf
        %3214 = vmax.xlane.f32.xlu0 %v3213
        %v3215 = vpop.xlane.xlu0 %3214
        %v3216 = vsub.f32 %v2894, %v3122
        %v3217 = vsub.f32 %v2896, %v3125
        %v3218 = vsub.f32 %v2899, %v3128
        %v3219 = vsub.f32 %v2901, %v3131
        %v3220 = vsub.f32 %v2904, %v3134
        %v3221 = vsub.f32 %v2906, %v3137
        %v3222 = vsub.f32 %v2909, %v3140
        %v3223 = vsub.f32 %v2911, %v3143
        %v3224 = vsub.f32 %v2963, %v3146
        %v3225 = vsub.f32 %v2965, %v3149
        %v3226 = vsub.f32 %v2968, %v3152
        %v3227 = vsub.f32 %v2970, %v3155
        %v3228 = vsub.f32 %v2973, %v3158
        %v3229 = vsub.f32 %v2975, %v3161
        %v3230 = vsub.f32 %v2978, %v3164
        %v3231 = vsub.f32 %v2980, %v3167
        %v3232 = vsub.f32 %v3032, %v3170
        %v3233 = vsub.f32 %v3034, %v3173
        %v3234 = vsub.f32 %v3037, %v3176
        %v3235 = vsub.f32 %v3039, %v3179
        %v3236 = vsub.f32 %v3042, %v3182
        %v3237 = vsub.f32 %v3044, %v3185
        %v3238 = vsub.f32 %v3047, %v3188
        %v3239 = vsub.f32 %v3049, %v3191
        %v3240 = vsub.f32 %v3101, %v3194
        %v3241 = vsub.f32 %v3103, %v3197
        %v3242 = vsub.f32 %v3106, %v3200
        %v3243 = vsub.f32 %v3108, %v3203
        %v3244 = vsub.f32 %v3111, %v3206
        %v3245 = vsub.f32 %v3113, %v3209
        %v3246 = vsub.f32 %v3116, %v3212
        %v3247 = vsub.f32 %v3118, %v3215
        %v3248 = vmul.f32 %v3216, 1.442695
        %v3249 = vpow.pop %v3248
        %v3250 = vmul.f32 %v3217, 1.442695
        %v3251 = vpow.pop %v3250
        %v3252 = vmul.f32 %v3218, 1.442695
        %v3253 = vpow.pop %v3252
        %v3254 = vmul.f32 %v3219, 1.442695
        %v3255 = vpow.pop %v3254
        %v3256 = vmul.f32 %v3220, 1.442695
        %v3257 = vpow.pop %v3256
        %v3258 = vmul.f32 %v3221, 1.442695
        %v3259 = vpow.pop %v3258
        %v3260 = vmul.f32 %v3222, 1.442695
        %v3261 = vpow.pop %v3260
        %v3262 = vmul.f32 %v3223, 1.442695
        %v3263 = vpow.pop %v3262
        %v3264 = vmul.f32 %v3224, 1.442695
        %v3265 = vpow.pop %v3264
        %v3266 = vmul.f32 %v3225, 1.442695
        %v3267 = vpow.pop %v3266
        %v3268 = vmul.f32 %v3226, 1.442695
        %v3269 = vpow.pop %v3268
        %v3270 = vmul.f32 %v3227, 1.442695
        %v3271 = vpow.pop %v3270
        %v3272 = vmul.f32 %v3228, 1.442695
        %v3273 = vpow.pop %v3272
        %v3274 = vmul.f32 %v3229, 1.442695
        %v3275 = vpow.pop %v3274
        %v3276 = vmul.f32 %v3230, 1.442695
        %v3277 = vpow.pop %v3276
        %v3278 = vmul.f32 %v3231, 1.442695
        %v3279 = vpow.pop %v3278
        %v3280 = vmul.f32 %v3232, 1.442695
        %v3281 = vpow.pop %v3280
        %v3282 = vmul.f32 %v3233, 1.442695
        %v3283 = vpow.pop %v3282
        %v3284 = vmul.f32 %v3234, 1.442695
        %v3285 = vpow.pop %v3284
        %v3286 = vmul.f32 %v3235, 1.442695
        %v3287 = vpow.pop %v3286
        %v3288 = vmul.f32 %v3236, 1.442695
        %v3289 = vpow.pop %v3288
        %v3290 = vmul.f32 %v3237, 1.442695
        %v3291 = vpow.pop %v3290
        %v3292 = vmul.f32 %v3238, 1.442695
        %v3293 = vpow.pop %v3292
        %v3294 = vmul.f32 %v3239, 1.442695
        %v3295 = vpow.pop %v3294
        %v3296 = vmul.f32 %v3240, 1.442695
        %v3297 = vpow.pop %v3296
        %v3298 = vmul.f32 %v3241, 1.442695
        %v3299 = vpow.pop %v3298
        %v3300 = vmul.f32 %v3242, 1.442695
        %v3301 = vpow.pop %v3300
        %v3302 = vmul.f32 %v3243, 1.442695
        %v3303 = vpow.pop %v3302
        %v3304 = vmul.f32 %v3244, 1.442695
        %v3305 = vpow.pop %v3304
        %v3306 = vmul.f32 %v3245, 1.442695
        %v3307 = vpow.pop %v3306
        %v3308 = vmul.f32 %v3246, 1.442695
        %v3309 = vpow.pop %v3308
        %v3310 = vmul.f32 %v3247, 1.442695
        %v3311 = vpow.pop %v3310
        %v3312 = vsel %vm1022, %v3249, 0.0
        %3313 = vadd.xlane.f32.xlu0 %v3312
        %v3314 = vpop.xlane.xlu0 %3313
        %v3315 = vsel %vm1022, %v3251, 0.0
        %3316 = vadd.xlane.f32.xlu0 %v3315
        %v3317 = vpop.xlane.xlu0 %3316
        %v3318 = vsel %vm1022, %v3253, 0.0
        %3319 = vadd.xlane.f32.xlu0 %v3318
        %v3320 = vpop.xlane.xlu0 %3319
        %v3321 = vsel %vm1022, %v3255, 0.0
        %3322 = vadd.xlane.f32.xlu0 %v3321
        %v3323 = vpop.xlane.xlu0 %3322
        %v3324 = vsel %vm1022, %v3257, 0.0
        %3325 = vadd.xlane.f32.xlu0 %v3324
        %v3326 = vpop.xlane.xlu0 %3325
        %v3327 = vsel %vm1022, %v3259, 0.0
        %3328 = vadd.xlane.f32.xlu0 %v3327
        %v3329 = vpop.xlane.xlu0 %3328
        %v3330 = vsel %vm1022, %v3261, 0.0
        %3331 = vadd.xlane.f32.xlu0 %v3330
        %v3332 = vpop.xlane.xlu0 %3331
        %v3333 = vsel %vm1022, %v3263, 0.0
        %3334 = vadd.xlane.f32.xlu0 %v3333
        %v3335 = vpop.xlane.xlu0 %3334
        %v3336 = vsel %vm1022, %v3265, 0.0
        %3337 = vadd.xlane.f32.xlu0 %v3336
        %v3338 = vpop.xlane.xlu0 %3337
        %v3339 = vsel %vm1022, %v3267, 0.0
        %3340 = vadd.xlane.f32.xlu0 %v3339
        %v3341 = vpop.xlane.xlu0 %3340
        %v3342 = vsel %vm1022, %v3269, 0.0
        %3343 = vadd.xlane.f32.xlu0 %v3342
        %v3344 = vpop.xlane.xlu0 %3343
        %v3345 = vsel %vm1022, %v3271, 0.0
        %3346 = vadd.xlane.f32.xlu0 %v3345
        %v3347 = vpop.xlane.xlu0 %3346
        %v3348 = vsel %vm1022, %v3273, 0.0
        %3349 = vadd.xlane.f32.xlu0 %v3348
        %v3350 = vpop.xlane.xlu0 %3349
        %v3351 = vsel %vm1022, %v3275, 0.0
        %3352 = vadd.xlane.f32.xlu0 %v3351
        %v3353 = vpop.xlane.xlu0 %3352
        %v3354 = vsel %vm1022, %v3277, 0.0
        %3355 = vadd.xlane.f32.xlu0 %v3354
        %v3356 = vpop.xlane.xlu0 %3355
        %v3357 = vsel %vm1022, %v3279, 0.0
        %3358 = vadd.xlane.f32.xlu0 %v3357
        %v3359 = vpop.xlane.xlu0 %3358
        %v3360 = vsel %vm1022, %v3281, 0.0
        %3361 = vadd.xlane.f32.xlu0 %v3360
        %v3362 = vpop.xlane.xlu0 %3361
        %v3363 = vsel %vm1022, %v3283, 0.0
        %3364 = vadd.xlane.f32.xlu0 %v3363
        %v3365 = vpop.xlane.xlu0 %3364
        %v3366 = vsel %vm1022, %v3285, 0.0
        %3367 = vadd.xlane.f32.xlu0 %v3366
        %v3368 = vpop.xlane.xlu0 %3367
        %v3369 = vsel %vm1022, %v3287, 0.0
        %3370 = vadd.xlane.f32.xlu0 %v3369
        %v3371 = vpop.xlane.xlu0 %3370
        %v3372 = vsel %vm1022, %v3289, 0.0
        %3373 = vadd.xlane.f32.xlu0 %v3372
        %v3374 = vpop.xlane.xlu0 %3373
        %v3375 = vsel %vm1022, %v3291, 0.0
        %3376 = vadd.xlane.f32.xlu0 %v3375
        %v3377 = vpop.xlane.xlu0 %3376
        %v3378 = vsel %vm1022, %v3293, 0.0
        %3379 = vadd.xlane.f32.xlu0 %v3378
        %v3380 = vpop.xlane.xlu0 %3379
        %v3381 = vsel %vm1022, %v3295, 0.0
        %3382 = vadd.xlane.f32.xlu0 %v3381
        %v3383 = vpop.xlane.xlu0 %3382
        %v3384 = vsel %vm1022, %v3297, 0.0
        %3385 = vadd.xlane.f32.xlu0 %v3384
        %v3386 = vpop.xlane.xlu0 %3385
        %v3387 = vsel %vm1022, %v3299, 0.0
        %3388 = vadd.xlane.f32.xlu0 %v3387
        %v3389 = vpop.xlane.xlu0 %3388
        %v3390 = vsel %vm1022, %v3301, 0.0
        %3391 = vadd.xlane.f32.xlu0 %v3390
        %v3392 = vpop.xlane.xlu0 %3391
        %v3393 = vsel %vm1022, %v3303, 0.0
        %3394 = vadd.xlane.f32.xlu0 %v3393
        %v3395 = vpop.xlane.xlu0 %3394
        %v3396 = vsel %vm1022, %v3305, 0.0
        %3397 = vadd.xlane.f32.xlu0 %v3396
        %v3398 = vpop.xlane.xlu0 %3397
        %v3399 = vsel %vm1022, %v3307, 0.0
        %3400 = vadd.xlane.f32.xlu0 %v3399
        %v3401 = vpop.xlane.xlu0 %3400
        %v3402 = vsel %vm1022, %v3309, 0.0
        %3403 = vadd.xlane.f32.xlu0 %v3402
        %v3404 = vpop.xlane.xlu0 %3403
        %v3405 = vsel %vm1022, %v3311, 0.0
        %3406 = vadd.xlane.f32.xlu0 %v3405
        %v3407 = vpop.xlane.xlu0 %3406
        %v3408 = vrcp.pop %v3314
        %v3409 = vrcp.pop %v3317
        %v3410 = vrcp.pop %v3320
        %v3411 = vrcp.pop %v3323
        %v3412 = vrcp.pop %v3326
        %v3413 = vrcp.pop %v3329
        %v3414 = vrcp.pop %v3332
        %v3415 = vrcp.pop %v3335
        %v3416 = vrcp.pop %v3338
        %v3417 = vrcp.pop %v3341
        %v3418 = vrcp.pop %v3344
        %v3419 = vrcp.pop %v3347
        %v3420 = vrcp.pop %v3350
        %v3421 = vrcp.pop %v3353
        %v3422 = vrcp.pop %v3356
        %v3423 = vrcp.pop %v3359
        %v3424 = vrcp.pop %v3362
        %v3425 = vrcp.pop %v3365
        %v3426 = vrcp.pop %v3368
        %v3427 = vrcp.pop %v3371
        %v3428 = vrcp.pop %v3374
        %v3429 = vrcp.pop %v3377
        %v3430 = vrcp.pop %v3380
        %v3431 = vrcp.pop %v3383
        %v3432 = vrcp.pop %v3386
        %v3433 = vrcp.pop %v3389
        %v3434 = vrcp.pop %v3392
        %v3435 = vrcp.pop %v3395
        %v3436 = vrcp.pop %v3398
        %v3437 = vrcp.pop %v3401
        %v3438 = vrcp.pop %v3404
        %v3439 = vrcp.pop %v3407
        %v3440 = vmul.f32 %v3249, %v3408
        %v3441 = vmul.f32 %v3251, %v3409
        %v3442 = vmul.f32 %v3253, %v3410
        %v3443 = vmul.f32 %v3255, %v3411
        %v3444 = vmul.f32 %v3257, %v3412
        %v3445 = vmul.f32 %v3259, %v3413
        %v3446 = vmul.f32 %v3261, %v3414
        %v3447 = vmul.f32 %v3263, %v3415
        %v3448 = vmul.f32 %v3265, %v3416
        %v3449 = vmul.f32 %v3267, %v3417
        %v3450 = vmul.f32 %v3269, %v3418
        %v3451 = vmul.f32 %v3271, %v3419
        %v3452 = vmul.f32 %v3273, %v3420
        %v3453 = vmul.f32 %v3275, %v3421
        %v3454 = vmul.f32 %v3277, %v3422
        %v3455 = vmul.f32 %v3279, %v3423
        %v3456 = vmul.f32 %v3281, %v3424
        %v3457 = vmul.f32 %v3283, %v3425
        %v3458 = vmul.f32 %v3285, %v3426
        %v3459 = vmul.f32 %v3287, %v3427
        %v3460 = vmul.f32 %v3289, %v3428
        %v3461 = vmul.f32 %v3291, %v3429
        %v3462 = vmul.f32 %v3293, %v3430
        %v3463 = vmul.f32 %v3295, %v3431
        %v3464 = vmul.f32 %v3297, %v3432
        %v3465 = vmul.f32 %v3299, %v3433
        %v3466 = vmul.f32 %v3301, %v3434
        %v3467 = vmul.f32 %v3303, %v3435
        %v3468 = vmul.f32 %v3305, %v3436
        %v3469 = vmul.f32 %v3307, %v3437
        %v3470 = vmul.f32 %v3309, %v3438
        %v3471 = vmul.f32 %v3311, %v3439
        %v3472 = vpack.c.bf16 %v3440, %v3440
        %v3473 = vpack.c.bf16 %v3441, %v3441
        %v3474 = vpack.c.bf16 %v3442, %v3442
        %v3475 = vpack.c.bf16 %v3443, %v3443
        %v3476 = vpack.c.bf16 %v3444, %v3444
        %v3477 = vpack.c.bf16 %v3445, %v3445
        %v3478 = vpack.c.bf16 %v3446, %v3446
        %v3479 = vpack.c.bf16 %v3447, %v3447
        %v3480 = vpack.c.bf16 %v3448, %v3448
        %v3481 = vpack.c.bf16 %v3449, %v3449
        %v3482 = vpack.c.bf16 %v3450, %v3450
        %v3483 = vpack.c.bf16 %v3451, %v3451
        %v3484 = vpack.c.bf16 %v3452, %v3452
        %v3485 = vpack.c.bf16 %v3453, %v3453
        %v3486 = vpack.c.bf16 %v3454, %v3454
        %v3487 = vpack.c.bf16 %v3455, %v3455
        %v3488 = vpack.c.bf16 %v3456, %v3456
        %v3489 = vpack.c.bf16 %v3457, %v3457
        %v3490 = vpack.c.bf16 %v3458, %v3458
        %v3491 = vpack.c.bf16 %v3459, %v3459
        %v3492 = vpack.c.bf16 %v3460, %v3460
        %v3493 = vpack.c.bf16 %v3461, %v3461
        %v3494 = vpack.c.bf16 %v3462, %v3462
        %v3495 = vpack.c.bf16 %v3463, %v3463
        %v3496 = vpack.c.bf16 %v3464, %v3464
        %v3497 = vpack.c.bf16 %v3465, %v3465
        %v3498 = vpack.c.bf16 %v3466, %v3466
        %v3499 = vpack.c.bf16 %v3467, %v3467
        %v3500 = vpack.c.bf16 %v3468, %v3468
        %v3501 = vpack.c.bf16 %v3469, %v3469
        %v3502 = vpack.c.bf16 %v3470, %v3470
        %v3503 = vpack.c.bf16 %v3471, %v3471
        %v3512 = vunpack.c.l.b16 %v3472
        %v3513 = vunpack.c.l.b16 %v3473
        %v3514 = vunpack.c.l.b16 %v3474
        %v3515 = vunpack.c.l.b16 %v3475
        %v3516 = vunpack.c.l.b16 %v3476
        %v3517 = vunpack.c.l.b16 %v3477
        %v3518 = vunpack.c.l.b16 %v3478
        %v3519 = vunpack.c.l.b16 %v3479
        %v3520 = vpack.c.b16 %v3513, %v3512
        %v3521 = vpack.c.b16 %v3515, %v3514
        %v3522 = vpack.c.b16 %v3517, %v3516
        %v3523 = vpack.c.b16 %v3519, %v3518
        %3524 = vrot.lane.b32.xlu0 %v713, 48
        %v3525 = vpop.permute.xlu0 %3524
        %3526 = vrot.lane.b32.xlu0 %v714, 48
        %v3527 = vpop.permute.xlu0 %3526
        %3528 = vrot.lane.b32.xlu0 %v715, 48
        %v3529 = vpop.permute.xlu0 %3528
        %3530 = vrot.lane.b32.xlu0 %v716, 48
        %v3531 = vpop.permute.xlu0 %3530
        %v3537 = vsel %vm1022, %v3520, 0
        %v3540 = vsel %vm1022, %v3521, 0
        %v3543 = vsel %vm1022, %v3522, 0
        %v3546 = vsel %vm1022, %v3523, 0
        %3548 = vmatpush.bf16.msra.mxu0 0
        %3549 = vmatpush.bf16.msra.mxu0 0
        %3550 = vmatpush.bf16.msra.mxu0 0
        %3551 = vmatpush.bf16.msra.mxu0 0
        %3552 = vmatpush.bf16.msra.mxu0 %v3531
        %3553 = vmatpush.bf16.msra.mxu0 %v3529
        %3554 = vmatpush.bf16.msra.mxu0 %v3527
        %3555 = vmatpush.bf16.msra.mxu0 %v3525
        %3556 = vmatmul.bf16.gmra.mxu0 %v3537
        %v3557 = vpop.f32.mrf.mxu0
        %v3558 = vadd.f32 0.0, %v3557
        %v3559 = vpop.f32.mrf.mxu0
        %v3560 = vadd.f32 0.0, %v3559
        %3561 = vmatmul.bf16.gmra.mxu0 %v3540
        %v3562 = vpop.f32.mrf.mxu0
        %v3563 = vadd.f32 0.0, %v3562
        %v3564 = vpop.f32.mrf.mxu0
        %v3565 = vadd.f32 0.0, %v3564
        %3566 = vmatmul.bf16.gmra.mxu0 %v3543
        %v3567 = vpop.f32.mrf.mxu0
        %v3568 = vadd.f32 0.0, %v3567
        %v3569 = vpop.f32.mrf.mxu0
        %v3570 = vadd.f32 0.0, %v3569
        %3571 = vmatmul.bf16.gmra.mxu0 %v3546
        %v3572 = vpop.f32.mrf.mxu0
        %v3573 = vadd.f32 0.0, %v3572
        %v3574 = vpop.f32.mrf.mxu0
        %v3575 = vadd.f32 0.0, %v3574
        %3576 = vdwg.mxu0
        %v3585 = vunpack.c.l.b16 %v3480
        %v3586 = vunpack.c.l.b16 %v3481
        %v3587 = vunpack.c.l.b16 %v3482
        %v3588 = vunpack.c.l.b16 %v3483
        %v3589 = vunpack.c.l.b16 %v3484
        %v3590 = vunpack.c.l.b16 %v3485
        %v3591 = vunpack.c.l.b16 %v3486
        %v3592 = vunpack.c.l.b16 %v3487
        %v3593 = vpack.c.b16 %v3586, %v3585
        %v3594 = vpack.c.b16 %v3588, %v3587
        %v3595 = vpack.c.b16 %v3590, %v3589
        %v3596 = vpack.c.b16 %v3592, %v3591
        %3597 = vrot.lane.b32.xlu0 %v795, 48
        %v3598 = vpop.permute.xlu0 %3597
        %3599 = vrot.lane.b32.xlu0 %v796, 48
        %v3600 = vpop.permute.xlu0 %3599
        %3601 = vrot.lane.b32.xlu0 %v797, 48
        %v3602 = vpop.permute.xlu0 %3601
        %3603 = vrot.lane.b32.xlu0 %v798, 48
        %v3604 = vpop.permute.xlu0 %3603
        %v3610 = vsel %vm1022, %v3593, 0
        %v3613 = vsel %vm1022, %v3594, 0
        %v3616 = vsel %vm1022, %v3595, 0
        %v3619 = vsel %vm1022, %v3596, 0
        %3621 = vmatpush.bf16.msra.mxu0 0
        %3622 = vmatpush.bf16.msra.mxu0 0
        %3623 = vmatpush.bf16.msra.mxu0 0
        %3624 = vmatpush.bf16.msra.mxu0 0
        %3625 = vmatpush.bf16.msra.mxu0 %v3604
        %3626 = vmatpush.bf16.msra.mxu0 %v3602
        %3627 = vmatpush.bf16.msra.mxu0 %v3600
        %3628 = vmatpush.bf16.msra.mxu0 %v3598
        %3629 = vmatmul.bf16.gmra.mxu0 %v3610
        %v3630 = vpop.f32.mrf.mxu0
        %v3631 = vadd.f32 0.0, %v3630
        %v3632 = vpop.f32.mrf.mxu0
        %v3633 = vadd.f32 0.0, %v3632
        %3634 = vmatmul.bf16.gmra.mxu0 %v3613
        %v3635 = vpop.f32.mrf.mxu0
        %v3636 = vadd.f32 0.0, %v3635
        %v3637 = vpop.f32.mrf.mxu0
        %v3638 = vadd.f32 0.0, %v3637
        %3639 = vmatmul.bf16.gmra.mxu0 %v3616
        %v3640 = vpop.f32.mrf.mxu0
        %v3641 = vadd.f32 0.0, %v3640
        %v3642 = vpop.f32.mrf.mxu0
        %v3643 = vadd.f32 0.0, %v3642
        %3644 = vmatmul.bf16.gmra.mxu0 %v3619
        %v3645 = vpop.f32.mrf.mxu0
        %v3646 = vadd.f32 0.0, %v3645
        %v3647 = vpop.f32.mrf.mxu0
        %v3648 = vadd.f32 0.0, %v3647
        %3649 = vdwg.mxu0
        %v3658 = vunpack.c.l.b16 %v3488
        %v3659 = vunpack.c.l.b16 %v3489
        %v3660 = vunpack.c.l.b16 %v3490
        %v3661 = vunpack.c.l.b16 %v3491
        %v3662 = vunpack.c.l.b16 %v3492
        %v3663 = vunpack.c.l.b16 %v3493
        %v3664 = vunpack.c.l.b16 %v3494
        %v3665 = vunpack.c.l.b16 %v3495
        %v3666 = vpack.c.b16 %v3659, %v3658
        %v3667 = vpack.c.b16 %v3661, %v3660
        %v3668 = vpack.c.b16 %v3663, %v3662
        %v3669 = vpack.c.b16 %v3665, %v3664
        %3670 = vrot.lane.b32.xlu0 %v876, 48
        %v3671 = vpop.permute.xlu0 %3670
        %3672 = vrot.lane.b32.xlu0 %v877, 48
        %v3673 = vpop.permute.xlu0 %3672
        %3674 = vrot.lane.b32.xlu0 %v878, 48
        %v3675 = vpop.permute.xlu0 %3674
        %3676 = vrot.lane.b32.xlu0 %v879, 48
        %v3677 = vpop.permute.xlu0 %3676
        %v3683 = vsel %vm1022, %v3666, 0
        %v3686 = vsel %vm1022, %v3667, 0
        %v3689 = vsel %vm1022, %v3668, 0
        %v3692 = vsel %vm1022, %v3669, 0
        %3694 = vmatpush.bf16.msra.mxu0 0
        %3695 = vmatpush.bf16.msra.mxu0 0
        %3696 = vmatpush.bf16.msra.mxu0 0
        %3697 = vmatpush.bf16.msra.mxu0 0
        %3698 = vmatpush.bf16.msra.mxu0 %v3677
        %3699 = vmatpush.bf16.msra.mxu0 %v3675
        %3700 = vmatpush.bf16.msra.mxu0 %v3673
        %3701 = vmatpush.bf16.msra.mxu0 %v3671
        %3702 = vmatmul.bf16.gmra.mxu0 %v3683
        %v3703 = vpop.f32.mrf.mxu0
        %v3704 = vadd.f32 0.0, %v3703
        %v3705 = vpop.f32.mrf.mxu0
        %v3706 = vadd.f32 0.0, %v3705
        %3707 = vmatmul.bf16.gmra.mxu0 %v3686
        %v3708 = vpop.f32.mrf.mxu0
        %v3709 = vadd.f32 0.0, %v3708
        %v3710 = vpop.f32.mrf.mxu0
        %v3711 = vadd.f32 0.0, %v3710
        %3712 = vmatmul.bf16.gmra.mxu0 %v3689
        %v3713 = vpop.f32.mrf.mxu0
        %v3714 = vadd.f32 0.0, %v3713
        %v3715 = vpop.f32.mrf.mxu0
        %v3716 = vadd.f32 0.0, %v3715
        %3717 = vmatmul.bf16.gmra.mxu0 %v3692
        %v3718 = vpop.f32.mrf.mxu0
        %v3719 = vadd.f32 0.0, %v3718
        %v3720 = vpop.f32.mrf.mxu0
        %v3721 = vadd.f32 0.0, %v3720
        %3722 = vdwg.mxu0
        %v3731 = vunpack.c.l.b16 %v3496
        %v3732 = vunpack.c.l.b16 %v3497
        %v3733 = vunpack.c.l.b16 %v3498
        %v3734 = vunpack.c.l.b16 %v3499
        %v3735 = vunpack.c.l.b16 %v3500
        %v3736 = vunpack.c.l.b16 %v3501
        %v3737 = vunpack.c.l.b16 %v3502
        %v3738 = vunpack.c.l.b16 %v3503
        %v3739 = vpack.c.b16 %v3732, %v3731
        %v3740 = vpack.c.b16 %v3734, %v3733
        %v3741 = vpack.c.b16 %v3736, %v3735
        %v3742 = vpack.c.b16 %v3738, %v3737
        %3743 = vrot.lane.b32.xlu0 %v957, 48
        %v3744 = vpop.permute.xlu0 %3743
        %3745 = vrot.lane.b32.xlu0 %v958, 48
        %v3746 = vpop.permute.xlu0 %3745
        %3747 = vrot.lane.b32.xlu0 %v959, 48
        %v3748 = vpop.permute.xlu0 %3747
        %3749 = vrot.lane.b32.xlu0 %v960, 48
        %v3750 = vpop.permute.xlu0 %3749
        %v3756 = vsel %vm1022, %v3739, 0
        %v3759 = vsel %vm1022, %v3740, 0
        %v3762 = vsel %vm1022, %v3741, 0
        %v3765 = vsel %vm1022, %v3742, 0
        %3767 = vmatpush.bf16.msra.mxu0 0
        %3768 = vmatpush.bf16.msra.mxu0 0
        %3769 = vmatpush.bf16.msra.mxu0 0
        %3770 = vmatpush.bf16.msra.mxu0 0
        %3771 = vmatpush.bf16.msra.mxu0 %v3750
        %3772 = vmatpush.bf16.msra.mxu0 %v3748
        %3773 = vmatpush.bf16.msra.mxu0 %v3746
        %3774 = vmatpush.bf16.msra.mxu0 %v3744
        %3775 = vmatmul.bf16.gmra.mxu0 %v3756
        %v3776 = vpop.f32.mrf.mxu0
        %v3777 = vadd.f32 0.0, %v3776
        %v3778 = vpop.f32.mrf.mxu0
        %v3779 = vadd.f32 0.0, %v3778
        %3780 = vmatmul.bf16.gmra.mxu0 %v3759
        %v3781 = vpop.f32.mrf.mxu0
        %v3782 = vadd.f32 0.0, %v3781
        %v3783 = vpop.f32.mrf.mxu0
        %v3784 = vadd.f32 0.0, %v3783
        %3785 = vmatmul.bf16.gmra.mxu0 %v3762
        %v3786 = vpop.f32.mrf.mxu0
        %v3787 = vadd.f32 0.0, %v3786
        %v3788 = vpop.f32.mrf.mxu0
        %v3789 = vadd.f32 0.0, %v3788
        %3790 = vmatmul.bf16.gmra.mxu0 %v3765
        %v3791 = vpop.f32.mrf.mxu0
        %v3792 = vadd.f32 0.0, %v3791
        %v3793 = vpop.f32.mrf.mxu0
        %v3794 = vadd.f32 0.0, %v3793
        %3795 = vdwg.mxu0
        %3828 = vrot.lane.b32.xlu0 %v3558, 16
        %v3829 = vpop.permute.xlu0 %3828
        %3830 = vrot.lane.b32.xlu0 %v3560, 16
        %v3831 = vpop.permute.xlu0 %3830
        %3832 = vrot.lane.b32.xlu0 %v3563, 16
        %v3833 = vpop.permute.xlu0 %3832
        %3834 = vrot.lane.b32.xlu0 %v3565, 16
        %v3835 = vpop.permute.xlu0 %3834
        %3836 = vrot.lane.b32.xlu0 %v3568, 16
        %v3837 = vpop.permute.xlu0 %3836
        %3838 = vrot.lane.b32.xlu0 %v3570, 16
        %v3839 = vpop.permute.xlu0 %3838
        %3840 = vrot.lane.b32.xlu0 %v3573, 16
        %v3841 = vpop.permute.xlu0 %3840
        %3842 = vrot.lane.b32.xlu0 %v3575, 16
        %v3843 = vpop.permute.xlu0 %3842
        %3844 = vrot.lane.b32.xlu0 %v3631, 16
        %v3845 = vpop.permute.xlu0 %3844
        %3846 = vrot.lane.b32.xlu0 %v3633, 16
        %v3847 = vpop.permute.xlu0 %3846
        %3848 = vrot.lane.b32.xlu0 %v3636, 16
        %v3849 = vpop.permute.xlu0 %3848
        %3850 = vrot.lane.b32.xlu0 %v3638, 16
        %v3851 = vpop.permute.xlu0 %3850
        %3852 = vrot.lane.b32.xlu0 %v3641, 16
        %v3853 = vpop.permute.xlu0 %3852
        %3854 = vrot.lane.b32.xlu0 %v3643, 16
        %v3855 = vpop.permute.xlu0 %3854
        %3856 = vrot.lane.b32.xlu0 %v3646, 16
        %v3857 = vpop.permute.xlu0 %3856
        %3858 = vrot.lane.b32.xlu0 %v3648, 16
        %v3859 = vpop.permute.xlu0 %3858
        %3860 = vrot.lane.b32.xlu0 %v3704, 16
        %v3861 = vpop.permute.xlu0 %3860
        %3862 = vrot.lane.b32.xlu0 %v3706, 16
        %v3863 = vpop.permute.xlu0 %3862
        %3864 = vrot.lane.b32.xlu0 %v3709, 16
        %v3865 = vpop.permute.xlu0 %3864
        %3866 = vrot.lane.b32.xlu0 %v3711, 16
        %v3867 = vpop.permute.xlu0 %3866
        %3868 = vrot.lane.b32.xlu0 %v3714, 16
        %v3869 = vpop.permute.xlu0 %3868
        %3870 = vrot.lane.b32.xlu0 %v3716, 16
        %v3871 = vpop.permute.xlu0 %3870
        %3872 = vrot.lane.b32.xlu0 %v3719, 16
        %v3873 = vpop.permute.xlu0 %3872
        %3874 = vrot.lane.b32.xlu0 %v3721, 16
        %v3875 = vpop.permute.xlu0 %3874
        %3876 = vrot.lane.b32.xlu0 %v3777, 16
        %v3877 = vpop.permute.xlu0 %3876
        %3878 = vrot.lane.b32.xlu0 %v3779, 16
        %v3879 = vpop.permute.xlu0 %3878
        %3880 = vrot.lane.b32.xlu0 %v3782, 16
        %v3881 = vpop.permute.xlu0 %3880
        %3882 = vrot.lane.b32.xlu0 %v3784, 16
        %v3883 = vpop.permute.xlu0 %3882
        %3884 = vrot.lane.b32.xlu0 %v3787, 16
        %v3885 = vpop.permute.xlu0 %3884
        %3886 = vrot.lane.b32.xlu0 %v3789, 16
        %v3887 = vpop.permute.xlu0 %3886
        %3888 = vrot.lane.b32.xlu0 %v3792, 16
        %v3889 = vpop.permute.xlu0 %3888
        %3890 = vrot.lane.b32.xlu0 %v3794, 16
        %v3891 = vpop.permute.xlu0 %3890
        %vm3924 = vcmask 195712
        %3925 = vst.msk [vmem:[%s363] sm:$0xff] %vm3924, %v3829
        %3926 = vst.msk [vmem:[%s363 + $0x8] sm:$0xff] %vm3924, %v3831
        %3927 = vst.msk [vmem:[%s363 + $0x10] sm:$0xff] %vm3924, %v3833
        %3928 = vst.msk [vmem:[%s363 + $0x18] sm:$0xff] %vm3924, %v3835
        %3929 = vst.msk [vmem:[%s363 + $0x20] sm:$0xff] %vm3924, %v3837
        %3930 = vst.msk [vmem:[%s363 + $0x28] sm:$0xff] %vm3924, %v3839
        %3931 = vst.msk [vmem:[%s363 + $0x30] sm:$0xff] %vm3924, %v3841
        %3932 = vst.msk [vmem:[%s363 + $0x38] sm:$0xff] %vm3924, %v3843
        %3933 = vst.msk [vmem:[%s363 + $0x40] sm:$0xff] %vm3924, %v3845
        %3934 = vst.msk [vmem:[%s363 + $0x48] sm:$0xff] %vm3924, %v3847
        %3935 = vst.msk [vmem:[%s363 + $0x50] sm:$0xff] %vm3924, %v3849
        %3936 = vst.msk [vmem:[%s363 + $0x58] sm:$0xff] %vm3924, %v3851
        %3937 = vst.msk [vmem:[%s363 + $0x60] sm:$0xff] %vm3924, %v3853
        %3938 = vst.msk [vmem:[%s363 + $0x68] sm:$0xff] %vm3924, %v3855
        %3939 = vst.msk [vmem:[%s363 + $0x70] sm:$0xff] %vm3924, %v3857
        %3940 = vst.msk [vmem:[%s363 + $0x78] sm:$0xff] %vm3924, %v3859
        %3941 = vst.msk [vmem:[%s363 + $0x80] sm:$0xff] %vm3924, %v3861
        %3942 = vst.msk [vmem:[%s363 + $0x88] sm:$0xff] %vm3924, %v3863
        %3943 = vst.msk [vmem:[%s363 + $0x90] sm:$0xff] %vm3924, %v3865
        %3944 = vst.msk [vmem:[%s363 + $0x98] sm:$0xff] %vm3924, %v3867
        %3945 = vst.msk [vmem:[%s363 + $0xa0] sm:$0xff] %vm3924, %v3869
        %3946 = vst.msk [vmem:[%s363 + $0xa8] sm:$0xff] %vm3924, %v3871
        %3947 = vst.msk [vmem:[%s363 + $0xb0] sm:$0xff] %vm3924, %v3873
        %3948 = vst.msk [vmem:[%s363 + $0xb8] sm:$0xff] %vm3924, %v3875
        %3949 = vst.msk [vmem:[%s363 + $0xc0] sm:$0xff] %vm3924, %v3877
        %3950 = vst.msk [vmem:[%s363 + $0xc8] sm:$0xff] %vm3924, %v3879
        %3951 = vst.msk [vmem:[%s363 + $0xd0] sm:$0xff] %vm3924, %v3881
        %3952 = vst.msk [vmem:[%s363 + $0xd8] sm:$0xff] %vm3924, %v3883
        %3953 = vst.msk [vmem:[%s363 + $0xe0] sm:$0xff] %vm3924, %v3885
        %3954 = vst.msk [vmem:[%s363 + $0xe8] sm:$0xff] %vm3924, %v3887
        %3955 = vst.msk [vmem:[%s363 + $0xf0] sm:$0xff] %vm3924, %v3889
        %3956 = vst.msk [vmem:[%s363 + $0xf8] sm:$0xff] %vm3924, %v3891
        %3957 = vrot.lane.b32.xlu0 %v713, 104
        %v3958 = vpop.permute.xlu0 %3957
        %3959 = vrot.lane.b32.xlu0 %v714, 104
        %v3960 = vpop.permute.xlu0 %3959
        %3961 = vrot.lane.b32.xlu0 %v715, 104
        %v3962 = vpop.permute.xlu0 %3961
        %3963 = vrot.lane.b32.xlu0 %v716, 104
        %v3964 = vpop.permute.xlu0 %3963
        %3965 = vrot.lane.b32.xlu0 %v713, 72
        %v3966 = vpop.permute.xlu0 %3965
        %3967 = vrot.lane.b32.xlu0 %v714, 72
        %v3968 = vpop.permute.xlu0 %3967
        %3969 = vrot.lane.b32.xlu0 %v715, 72
        %v3970 = vpop.permute.xlu0 %3969
        %3971 = vrot.lane.b32.xlu0 %v716, 72
        %v3972 = vpop.permute.xlu0 %3971
        %v3974 = vsel %vm725, %v3958, 0
        %v3977 = vsel %vm725, %v3960, 0
        %v3980 = vsel %vm725, %v3962, 0
        %v3983 = vsel %vm725, %v3964, 0
        %v3986 = vsel %vm725, %v3966, 0
        %v3989 = vsel %vm725, %v3968, 0
        %v3992 = vsel %vm725, %v3970, 0
        %v3995 = vsel %vm725, %v3972, 0
        %3997 = vmatpush.bf16.xpose.msra.mxu0 0
        %3998 = vmatpush.bf16.xpose.msra.mxu0 0
        %3999 = vmatpush.bf16.xpose.msra.mxu0 0
        %4000 = vmatpush.bf16.xpose.msra.mxu0 0
        %4001 = vmatpush.bf16.xpose.msra.mxu0 %v3995
        %4002 = vmatpush.bf16.xpose.msra.mxu0 %v3992
        %4003 = vmatpush.bf16.xpose.msra.mxu0 %v3989
        %4004 = vmatpush.bf16.xpose.msra.mxu0 %v3986
        %4005 = vmatmul.bf16.gmra.mxu0 %v3974
        %v4006 = vpop.f32.mrf.mxu0
        %v4007 = vadd.f32 %v689, %v4006
        %v4008 = vpop.f32.mrf.mxu0
        %v4009 = vadd.f32 %v690, %v4008
        %4010 = vmatmul.bf16.gmra.mxu0 %v3977
        %v4011 = vpop.f32.mrf.mxu0
        %v4012 = vadd.f32 %v691, %v4011
        %v4013 = vpop.f32.mrf.mxu0
        %v4014 = vadd.f32 %v692, %v4013
        %4015 = vmatmul.bf16.gmra.mxu0 %v3980
        %v4016 = vpop.f32.mrf.mxu0
        %v4017 = vadd.f32 %v693, %v4016
        %v4018 = vpop.f32.mrf.mxu0
        %v4019 = vadd.f32 %v694, %v4018
        %4020 = vmatmul.bf16.gmra.mxu0 %v3983
        %v4021 = vpop.f32.mrf.mxu0
        %v4022 = vadd.f32 %v695, %v4021
        %v4023 = vpop.f32.mrf.mxu0
        %v4024 = vadd.f32 %v696, %v4023
        %4025 = vdwg.mxu0
        %4026 = vrot.lane.b32.xlu0 %v795, 104
        %v4027 = vpop.permute.xlu0 %4026
        %4028 = vrot.lane.b32.xlu0 %v796, 104
        %v4029 = vpop.permute.xlu0 %4028
        %4030 = vrot.lane.b32.xlu0 %v797, 104
        %v4031 = vpop.permute.xlu0 %4030
        %4032 = vrot.lane.b32.xlu0 %v798, 104
        %v4033 = vpop.permute.xlu0 %4032
        %4034 = vrot.lane.b32.xlu0 %v795, 72
        %v4035 = vpop.permute.xlu0 %4034
        %4036 = vrot.lane.b32.xlu0 %v796, 72
        %v4037 = vpop.permute.xlu0 %4036
        %4038 = vrot.lane.b32.xlu0 %v797, 72
        %v4039 = vpop.permute.xlu0 %4038
        %4040 = vrot.lane.b32.xlu0 %v798, 72
        %v4041 = vpop.permute.xlu0 %4040
        %v4043 = vsel %vm725, %v4027, 0
        %v4046 = vsel %vm725, %v4029, 0
        %v4049 = vsel %vm725, %v4031, 0
        %v4052 = vsel %vm725, %v4033, 0
        %v4055 = vsel %vm725, %v4035, 0
        %v4058 = vsel %vm725, %v4037, 0
        %v4061 = vsel %vm725, %v4039, 0
        %v4064 = vsel %vm725, %v4041, 0
        %4066 = vmatpush.bf16.xpose.msra.mxu0 0
        %4067 = vmatpush.bf16.xpose.msra.mxu0 0
        %4068 = vmatpush.bf16.xpose.msra.mxu0 0
        %4069 = vmatpush.bf16.xpose.msra.mxu0 0
        %4070 = vmatpush.bf16.xpose.msra.mxu0 %v4064
        %4071 = vmatpush.bf16.xpose.msra.mxu0 %v4061
        %4072 = vmatpush.bf16.xpose.msra.mxu0 %v4058
        %4073 = vmatpush.bf16.xpose.msra.mxu0 %v4055
        %4074 = vmatmul.bf16.gmra.mxu0 %v4043
        %v4075 = vpop.f32.mrf.mxu0
        %v4076 = vadd.f32 %v689, %v4075
        %v4077 = vpop.f32.mrf.mxu0
        %v4078 = vadd.f32 %v690, %v4077
        %4079 = vmatmul.bf16.gmra.mxu0 %v4046
        %v4080 = vpop.f32.mrf.mxu0
        %v4081 = vadd.f32 %v691, %v4080
        %v4082 = vpop.f32.mrf.mxu0
        %v4083 = vadd.f32 %v692, %v4082
        %4084 = vmatmul.bf16.gmra.mxu0 %v4049
        %v4085 = vpop.f32.mrf.mxu0
        %v4086 = vadd.f32 %v693, %v4085
        %v4087 = vpop.f32.mrf.mxu0
        %v4088 = vadd.f32 %v694, %v4087
        %4089 = vmatmul.bf16.gmra.mxu0 %v4052
        %v4090 = vpop.f32.mrf.mxu0
        %v4091 = vadd.f32 %v695, %v4090
        %v4092 = vpop.f32.mrf.mxu0
        %v4093 = vadd.f32 %v696, %v4092
        %4094 = vdwg.mxu0
        %4095 = vrot.lane.b32.xlu0 %v876, 104
        %v4096 = vpop.permute.xlu0 %4095
        %4097 = vrot.lane.b32.xlu0 %v877, 104
        %v4098 = vpop.permute.xlu0 %4097
        %4099 = vrot.lane.b32.xlu0 %v878, 104
        %v4100 = vpop.permute.xlu0 %4099
        %4101 = vrot.lane.b32.xlu0 %v879, 104
        %v4102 = vpop.permute.xlu0 %4101
        %4103 = vrot.lane.b32.xlu0 %v876, 72
        %v4104 = vpop.permute.xlu0 %4103
        %4105 = vrot.lane.b32.xlu0 %v877, 72
        %v4106 = vpop.permute.xlu0 %4105
        %4107 = vrot.lane.b32.xlu0 %v878, 72
        %v4108 = vpop.permute.xlu0 %4107
        %4109 = vrot.lane.b32.xlu0 %v879, 72
        %v4110 = vpop.permute.xlu0 %4109
        %v4112 = vsel %vm725, %v4096, 0
        %v4115 = vsel %vm725, %v4098, 0
        %v4118 = vsel %vm725, %v4100, 0
        %v4121 = vsel %vm725, %v4102, 0
        %v4124 = vsel %vm725, %v4104, 0
        %v4127 = vsel %vm725, %v4106, 0
        %v4130 = vsel %vm725, %v4108, 0
        %v4133 = vsel %vm725, %v4110, 0
        %4135 = vmatpush.bf16.xpose.msra.mxu0 0
        %4136 = vmatpush.bf16.xpose.msra.mxu0 0
        %4137 = vmatpush.bf16.xpose.msra.mxu0 0
        %4138 = vmatpush.bf16.xpose.msra.mxu0 0
        %4139 = vmatpush.bf16.xpose.msra.mxu0 %v4133
        %4140 = vmatpush.bf16.xpose.msra.mxu0 %v4130
        %4141 = vmatpush.bf16.xpose.msra.mxu0 %v4127
        %4142 = vmatpush.bf16.xpose.msra.mxu0 %v4124
        %4143 = vmatmul.bf16.gmra.mxu0 %v4112
        %v4144 = vpop.f32.mrf.mxu0
        %v4145 = vadd.f32 %v689, %v4144
        %v4146 = vpop.f32.mrf.mxu0
        %v4147 = vadd.f32 %v690, %v4146
        %4148 = vmatmul.bf16.gmra.mxu0 %v4115
        %v4149 = vpop.f32.mrf.mxu0
        %v4150 = vadd.f32 %v691, %v4149
        %v4151 = vpop.f32.mrf.mxu0
        %v4152 = vadd.f32 %v692, %v4151
        %4153 = vmatmul.bf16.gmra.mxu0 %v4118
        %v4154 = vpop.f32.mrf.mxu0
        %v4155 = vadd.f32 %v693, %v4154
        %v4156 = vpop.f32.mrf.mxu0
        %v4157 = vadd.f32 %v694, %v4156
        %4158 = vmatmul.bf16.gmra.mxu0 %v4121
        %v4159 = vpop.f32.mrf.mxu0
        %v4160 = vadd.f32 %v695, %v4159
        %v4161 = vpop.f32.mrf.mxu0
        %v4162 = vadd.f32 %v696, %v4161
        %4163 = vdwg.mxu0
        %4164 = vrot.lane.b32.xlu0 %v957, 104
        %v4165 = vpop.permute.xlu0 %4164
        %4166 = vrot.lane.b32.xlu0 %v958, 104
        %v4167 = vpop.permute.xlu0 %4166
        %4168 = vrot.lane.b32.xlu0 %v959, 104
        %v4169 = vpop.permute.xlu0 %4168
        %4170 = vrot.lane.b32.xlu0 %v960, 104
        %v4171 = vpop.permute.xlu0 %4170
        %4172 = vrot.lane.b32.xlu0 %v957, 72
        %v4173 = vpop.permute.xlu0 %4172
        %4174 = vrot.lane.b32.xlu0 %v958, 72
        %v4175 = vpop.permute.xlu0 %4174
        %4176 = vrot.lane.b32.xlu0 %v959, 72
        %v4177 = vpop.permute.xlu0 %4176
        %4178 = vrot.lane.b32.xlu0 %v960, 72
        %v4179 = vpop.permute.xlu0 %4178
        %v4181 = vsel %vm725, %v4165, 0
        %v4184 = vsel %vm725, %v4167, 0
        %v4187 = vsel %vm725, %v4169, 0
        %v4190 = vsel %vm725, %v4171, 0
        %v4193 = vsel %vm725, %v4173, 0
        %v4196 = vsel %vm725, %v4175, 0
        %v4199 = vsel %vm725, %v4177, 0
        %v4202 = vsel %vm725, %v4179, 0
        %4204 = vmatpush.bf16.xpose.msra.mxu0 0
        %4205 = vmatpush.bf16.xpose.msra.mxu0 0
        %4206 = vmatpush.bf16.xpose.msra.mxu0 0
        %4207 = vmatpush.bf16.xpose.msra.mxu0 0
        %4208 = vmatpush.bf16.xpose.msra.mxu0 %v4202
        %4209 = vmatpush.bf16.xpose.msra.mxu0 %v4199
        %4210 = vmatpush.bf16.xpose.msra.mxu0 %v4196
        %4211 = vmatpush.bf16.xpose.msra.mxu0 %v4193
        %4212 = vmatmul.bf16.gmra.mxu0 %v4181
        %v4213 = vpop.f32.mrf.mxu0
        %v4214 = vadd.f32 %v689, %v4213
        %v4215 = vpop.f32.mrf.mxu0
        %v4216 = vadd.f32 %v690, %v4215
        %4217 = vmatmul.bf16.gmra.mxu0 %v4184
        %v4218 = vpop.f32.mrf.mxu0
        %v4219 = vadd.f32 %v691, %v4218
        %v4220 = vpop.f32.mrf.mxu0
        %v4221 = vadd.f32 %v692, %v4220
        %4222 = vmatmul.bf16.gmra.mxu0 %v4187
        %v4223 = vpop.f32.mrf.mxu0
        %v4224 = vadd.f32 %v693, %v4223
        %v4225 = vpop.f32.mrf.mxu0
        %v4226 = vadd.f32 %v694, %v4225
        %4227 = vmatmul.bf16.gmra.mxu0 %v4190
        %v4228 = vpop.f32.mrf.mxu0
        %v4229 = vadd.f32 %v695, %v4228
        %v4230 = vpop.f32.mrf.mxu0
        %v4231 = vadd.f32 %v696, %v4230
        %4232 = vdwg.mxu0
        %v4233 = vsel %vm1022, %v4007, -inf
        %4234 = vmax.xlane.f32.xlu0 %v4233
        %v4235 = vpop.xlane.xlu0 %4234
        %v4236 = vsel %vm1022, %v4009, -inf
        %4237 = vmax.xlane.f32.xlu0 %v4236
        %v4238 = vpop.xlane.xlu0 %4237
        %v4239 = vsel %vm1022, %v4012, -inf
        %4240 = vmax.xlane.f32.xlu0 %v4239
        %v4241 = vpop.xlane.xlu0 %4240
        %v4242 = vsel %vm1022, %v4014, -inf
        %4243 = vmax.xlane.f32.xlu0 %v4242
        %v4244 = vpop.xlane.xlu0 %4243
        %v4245 = vsel %vm1022, %v4017, -inf
        %4246 = vmax.xlane.f32.xlu0 %v4245
        %v4247 = vpop.xlane.xlu0 %4246
        %v4248 = vsel %vm1022, %v4019, -inf
        %4249 = vmax.xlane.f32.xlu0 %v4248
        %v4250 = vpop.xlane.xlu0 %4249
        %v4251 = vsel %vm1022, %v4022, -inf
        %4252 = vmax.xlane.f32.xlu0 %v4251
        %v4253 = vpop.xlane.xlu0 %4252
        %v4254 = vsel %vm1022, %v4024, -inf
        %4255 = vmax.xlane.f32.xlu0 %v4254
        %v4256 = vpop.xlane.xlu0 %4255
        %v4257 = vsel %vm1022, %v4076, -inf
        %4258 = vmax.xlane.f32.xlu0 %v4257
        %v4259 = vpop.xlane.xlu0 %4258
        %v4260 = vsel %vm1022, %v4078, -inf
        %4261 = vmax.xlane.f32.xlu0 %v4260
        %v4262 = vpop.xlane.xlu0 %4261
        %v4263 = vsel %vm1022, %v4081, -inf
        %4264 = vmax.xlane.f32.xlu0 %v4263
        %v4265 = vpop.xlane.xlu0 %4264
        %v4266 = vsel %vm1022, %v4083, -inf
        %4267 = vmax.xlane.f32.xlu0 %v4266
        %v4268 = vpop.xlane.xlu0 %4267
        %v4269 = vsel %vm1022, %v4086, -inf
        %4270 = vmax.xlane.f32.xlu0 %v4269
        %v4271 = vpop.xlane.xlu0 %4270
        %v4272 = vsel %vm1022, %v4088, -inf
        %4273 = vmax.xlane.f32.xlu0 %v4272
        %v4274 = vpop.xlane.xlu0 %4273
        %v4275 = vsel %vm1022, %v4091, -inf
        %4276 = vmax.xlane.f32.xlu0 %v4275
        %v4277 = vpop.xlane.xlu0 %4276
        %v4278 = vsel %vm1022, %v4093, -inf
        %4279 = vmax.xlane.f32.xlu0 %v4278
        %v4280 = vpop.xlane.xlu0 %4279
        %v4281 = vsel %vm1022, %v4145, -inf
        %4282 = vmax.xlane.f32.xlu0 %v4281
        %v4283 = vpop.xlane.xlu0 %4282
        %v4284 = vsel %vm1022, %v4147, -inf
        %4285 = vmax.xlane.f32.xlu0 %v4284
        %v4286 = vpop.xlane.xlu0 %4285
        %v4287 = vsel %vm1022, %v4150, -inf
        %4288 = vmax.xlane.f32.xlu0 %v4287
        %v4289 = vpop.xlane.xlu0 %4288
        %v4290 = vsel %vm1022, %v4152, -inf
        %4291 = vmax.xlane.f32.xlu0 %v4290
        %v4292 = vpop.xlane.xlu0 %4291
        %v4293 = vsel %vm1022, %v4155, -inf
        %4294 = vmax.xlane.f32.xlu0 %v4293
        %v4295 = vpop.xlane.xlu0 %4294
        %v4296 = vsel %vm1022, %v4157, -inf
        %4297 = vmax.xlane.f32.xlu0 %v4296
        %v4298 = vpop.xlane.xlu0 %4297
        %v4299 = vsel %vm1022, %v4160, -inf
        %4300 = vmax.xlane.f32.xlu0 %v4299
        %v4301 = vpop.xlane.xlu0 %4300
        %v4302 = vsel %vm1022, %v4162, -inf
        %4303 = vmax.xlane.f32.xlu0 %v4302
        %v4304 = vpop.xlane.xlu0 %4303
        %v4305 = vsel %vm1022, %v4214, -inf
        %4306 = vmax.xlane.f32.xlu0 %v4305
        %v4307 = vpop.xlane.xlu0 %4306
        %v4308 = vsel %vm1022, %v4216, -inf
        %4309 = vmax.xlane.f32.xlu0 %v4308
        %v4310 = vpop.xlane.xlu0 %4309
        %v4311 = vsel %vm1022, %v4219, -inf
        %4312 = vmax.xlane.f32.xlu0 %v4311
        %v4313 = vpop.xlane.xlu0 %4312
        %v4314 = vsel %vm1022, %v4221, -inf
        %4315 = vmax.xlane.f32.xlu0 %v4314
        %v4316 = vpop.xlane.xlu0 %4315
        %v4317 = vsel %vm1022, %v4224, -inf
        %4318 = vmax.xlane.f32.xlu0 %v4317
        %v4319 = vpop.xlane.xlu0 %4318
        %v4320 = vsel %vm1022, %v4226, -inf
        %4321 = vmax.xlane.f32.xlu0 %v4320
        %v4322 = vpop.xlane.xlu0 %4321
        %v4323 = vsel %vm1022, %v4229, -inf
        %4324 = vmax.xlane.f32.xlu0 %v4323
        %v4325 = vpop.xlane.xlu0 %4324
        %v4326 = vsel %vm1022, %v4231, -inf
        %4327 = vmax.xlane.f32.xlu0 %v4326
        %v4328 = vpop.xlane.xlu0 %4327
        %v4329 = vsub.f32 %v4007, %v4235
        %v4330 = vsub.f32 %v4009, %v4238
        %v4331 = vsub.f32 %v4012, %v4241
        %v4332 = vsub.f32 %v4014, %v4244
        %v4333 = vsub.f32 %v4017, %v4247
        %v4334 = vsub.f32 %v4019, %v4250
        %v4335 = vsub.f32 %v4022, %v4253
        %v4336 = vsub.f32 %v4024, %v4256
        %v4337 = vsub.f32 %v4076, %v4259
        %v4338 = vsub.f32 %v4078, %v4262
        %v4339 = vsub.f32 %v4081, %v4265
        %v4340 = vsub.f32 %v4083, %v4268
        %v4341 = vsub.f32 %v4086, %v4271
        %v4342 = vsub.f32 %v4088, %v4274
        %v4343 = vsub.f32 %v4091, %v4277
        %v4344 = vsub.f32 %v4093, %v4280
        %v4345 = vsub.f32 %v4145, %v4283
        %v4346 = vsub.f32 %v4147, %v4286
        %v4347 = vsub.f32 %v4150, %v4289
        %v4348 = vsub.f32 %v4152, %v4292
        %v4349 = vsub.f32 %v4155, %v4295
        %v4350 = vsub.f32 %v4157, %v4298
        %v4351 = vsub.f32 %v4160, %v4301
        %v4352 = vsub.f32 %v4162, %v4304
        %v4353 = vsub.f32 %v4214, %v4307
        %v4354 = vsub.f32 %v4216, %v4310
        %v4355 = vsub.f32 %v4219, %v4313
        %v4356 = vsub.f32 %v4221, %v4316
        %v4357 = vsub.f32 %v4224, %v4319
        %v4358 = vsub.f32 %v4226, %v4322
        %v4359 = vsub.f32 %v4229, %v4325
        %v4360 = vsub.f32 %v4231, %v4328
        %v4361 = vmul.f32 %v4329, 1.442695
        %v4362 = vpow.pop %v4361
        %v4363 = vmul.f32 %v4330, 1.442695
        %v4364 = vpow.pop %v4363
        %v4365 = vmul.f32 %v4331, 1.442695
        %v4366 = vpow.pop %v4365
        %v4367 = vmul.f32 %v4332, 1.442695
        %v4368 = vpow.pop %v4367
        %v4369 = vmul.f32 %v4333, 1.442695
        %v4370 = vpow.pop %v4369
        %v4371 = vmul.f32 %v4334, 1.442695
        %v4372 = vpow.pop %v4371
        %v4373 = vmul.f32 %v4335, 1.442695
        %v4374 = vpow.pop %v4373
        %v4375 = vmul.f32 %v4336, 1.442695
        %v4376 = vpow.pop %v4375
        %v4377 = vmul.f32 %v4337, 1.442695
        %v4378 = vpow.pop %v4377
        %v4379 = vmul.f32 %v4338, 1.442695
        %v4380 = vpow.pop %v4379
        %v4381 = vmul.f32 %v4339, 1.442695
        %v4382 = vpow.pop %v4381
        %v4383 = vmul.f32 %v4340, 1.442695
        %v4384 = vpow.pop %v4383
        %v4385 = vmul.f32 %v4341, 1.442695
        %v4386 = vpow.pop %v4385
        %v4387 = vmul.f32 %v4342, 1.442695
        %v4388 = vpow.pop %v4387
        %v4389 = vmul.f32 %v4343, 1.442695
        %v4390 = vpow.pop %v4389
        %v4391 = vmul.f32 %v4344, 1.442695
        %v4392 = vpow.pop %v4391
        %v4393 = vmul.f32 %v4345, 1.442695
        %v4394 = vpow.pop %v4393
        %v4395 = vmul.f32 %v4346, 1.442695
        %v4396 = vpow.pop %v4395
        %v4397 = vmul.f32 %v4347, 1.442695
        %v4398 = vpow.pop %v4397
        %v4399 = vmul.f32 %v4348, 1.442695
        %v4400 = vpow.pop %v4399
        %v4401 = vmul.f32 %v4349, 1.442695
        %v4402 = vpow.pop %v4401
        %v4403 = vmul.f32 %v4350, 1.442695
        %v4404 = vpow.pop %v4403
        %v4405 = vmul.f32 %v4351, 1.442695
        %v4406 = vpow.pop %v4405
        %v4407 = vmul.f32 %v4352, 1.442695
        %v4408 = vpow.pop %v4407
        %v4409 = vmul.f32 %v4353, 1.442695
        %v4410 = vpow.pop %v4409
        %v4411 = vmul.f32 %v4354, 1.442695
        %v4412 = vpow.pop %v4411
        %v4413 = vmul.f32 %v4355, 1.442695
        %v4414 = vpow.pop %v4413
        %v4415 = vmul.f32 %v4356, 1.442695
        %v4416 = vpow.pop %v4415
        %v4417 = vmul.f32 %v4357, 1.442695
        %v4418 = vpow.pop %v4417
        %v4419 = vmul.f32 %v4358, 1.442695
        %v4420 = vpow.pop %v4419
        %v4421 = vmul.f32 %v4359, 1.442695
        %v4422 = vpow.pop %v4421
        %v4423 = vmul.f32 %v4360, 1.442695
        %v4424 = vpow.pop %v4423
        %v4425 = vsel %vm1022, %v4362, 0.0
        %4426 = vadd.xlane.f32.xlu0 %v4425
        %v4427 = vpop.xlane.xlu0 %4426
        %v4428 = vsel %vm1022, %v4364, 0.0
        %4429 = vadd.xlane.f32.xlu0 %v4428
        %v4430 = vpop.xlane.xlu0 %4429
        %v4431 = vsel %vm1022, %v4366, 0.0
        %4432 = vadd.xlane.f32.xlu0 %v4431
        %v4433 = vpop.xlane.xlu0 %4432
        %v4434 = vsel %vm1022, %v4368, 0.0
        %4435 = vadd.xlane.f32.xlu0 %v4434
        %v4436 = vpop.xlane.xlu0 %4435
        %v4437 = vsel %vm1022, %v4370, 0.0
        %4438 = vadd.xlane.f32.xlu0 %v4437
        %v4439 = vpop.xlane.xlu0 %4438
        %v4440 = vsel %vm1022, %v4372, 0.0
        %4441 = vadd.xlane.f32.xlu0 %v4440
        %v4442 = vpop.xlane.xlu0 %4441
        %v4443 = vsel %vm1022, %v4374, 0.0
        %4444 = vadd.xlane.f32.xlu0 %v4443
        %v4445 = vpop.xlane.xlu0 %4444
        %v4446 = vsel %vm1022, %v4376, 0.0
        %4447 = vadd.xlane.f32.xlu0 %v4446
        %v4448 = vpop.xlane.xlu0 %4447
        %v4449 = vsel %vm1022, %v4378, 0.0
        %4450 = vadd.xlane.f32.xlu0 %v4449
        %v4451 = vpop.xlane.xlu0 %4450
        %v4452 = vsel %vm1022, %v4380, 0.0
        %4453 = vadd.xlane.f32.xlu0 %v4452
        %v4454 = vpop.xlane.xlu0 %4453
        %v4455 = vsel %vm1022, %v4382, 0.0
        %4456 = vadd.xlane.f32.xlu0 %v4455
        %v4457 = vpop.xlane.xlu0 %4456
        %v4458 = vsel %vm1022, %v4384, 0.0
        %4459 = vadd.xlane.f32.xlu0 %v4458
        %v4460 = vpop.xlane.xlu0 %4459
        %v4461 = vsel %vm1022, %v4386, 0.0
        %4462 = vadd.xlane.f32.xlu0 %v4461
        %v4463 = vpop.xlane.xlu0 %4462
        %v4464 = vsel %vm1022, %v4388, 0.0
        %4465 = vadd.xlane.f32.xlu0 %v4464
        %v4466 = vpop.xlane.xlu0 %4465
        %v4467 = vsel %vm1022, %v4390, 0.0
        %4468 = vadd.xlane.f32.xlu0 %v4467
        %v4469 = vpop.xlane.xlu0 %4468
        %v4470 = vsel %vm1022, %v4392, 0.0
        %4471 = vadd.xlane.f32.xlu0 %v4470
        %v4472 = vpop.xlane.xlu0 %4471
        %v4473 = vsel %vm1022, %v4394, 0.0
        %4474 = vadd.xlane.f32.xlu0 %v4473
        %v4475 = vpop.xlane.xlu0 %4474
        %v4476 = vsel %vm1022, %v4396, 0.0
        %4477 = vadd.xlane.f32.xlu0 %v4476
        %v4478 = vpop.xlane.xlu0 %4477
        %v4479 = vsel %vm1022, %v4398, 0.0
        %4480 = vadd.xlane.f32.xlu0 %v4479
        %v4481 = vpop.xlane.xlu0 %4480
        %v4482 = vsel %vm1022, %v4400, 0.0
        %4483 = vadd.xlane.f32.xlu0 %v4482
        %v4484 = vpop.xlane.xlu0 %4483
        %v4485 = vsel %vm1022, %v4402, 0.0
        %4486 = vadd.xlane.f32.xlu0 %v4485
        %v4487 = vpop.xlane.xlu0 %4486
        %v4488 = vsel %vm1022, %v4404, 0.0
        %4489 = vadd.xlane.f32.xlu0 %v4488
        %v4490 = vpop.xlane.xlu0 %4489
        %v4491 = vsel %vm1022, %v4406, 0.0
        %4492 = vadd.xlane.f32.xlu0 %v4491
        %v4493 = vpop.xlane.xlu0 %4492
        %v4494 = vsel %vm1022, %v4408, 0.0
        %4495 = vadd.xlane.f32.xlu0 %v4494
        %v4496 = vpop.xlane.xlu0 %4495
        %v4497 = vsel %vm1022, %v4410, 0.0
        %4498 = vadd.xlane.f32.xlu0 %v4497
        %v4499 = vpop.xlane.xlu0 %4498
        %v4500 = vsel %vm1022, %v4412, 0.0
        %4501 = vadd.xlane.f32.xlu0 %v4500
        %v4502 = vpop.xlane.xlu0 %4501
        %v4503 = vsel %vm1022, %v4414, 0.0
        %4504 = vadd.xlane.f32.xlu0 %v4503
        %v4505 = vpop.xlane.xlu0 %4504
        %v4506 = vsel %vm1022, %v4416, 0.0
        %4507 = vadd.xlane.f32.xlu0 %v4506
        %v4508 = vpop.xlane.xlu0 %4507
        %v4509 = vsel %vm1022, %v4418, 0.0
        %4510 = vadd.xlane.f32.xlu0 %v4509
        %v4511 = vpop.xlane.xlu0 %4510
        %v4512 = vsel %vm1022, %v4420, 0.0
        %4513 = vadd.xlane.f32.xlu0 %v4512
        %v4514 = vpop.xlane.xlu0 %4513
        %v4515 = vsel %vm1022, %v4422, 0.0
        %4516 = vadd.xlane.f32.xlu0 %v4515
        %v4517 = vpop.xlane.xlu0 %4516
        %v4518 = vsel %vm1022, %v4424, 0.0
        %4519 = vadd.xlane.f32.xlu0 %v4518
        %v4520 = vpop.xlane.xlu0 %4519
        %v4521 = vrcp.pop %v4427
        %v4522 = vrcp.pop %v4430
        %v4523 = vrcp.pop %v4433
        %v4524 = vrcp.pop %v4436
        %v4525 = vrcp.pop %v4439
        %v4526 = vrcp.pop %v4442
        %v4527 = vrcp.pop %v4445
        %v4528 = vrcp.pop %v4448
        %v4529 = vrcp.pop %v4451
        %v4530 = vrcp.pop %v4454
        %v4531 = vrcp.pop %v4457
        %v4532 = vrcp.pop %v4460
        %v4533 = vrcp.pop %v4463
        %v4534 = vrcp.pop %v4466
        %v4535 = vrcp.pop %v4469
        %v4536 = vrcp.pop %v4472
        %v4537 = vrcp.pop %v4475
        %v4538 = vrcp.pop %v4478
        %v4539 = vrcp.pop %v4481
        %v4540 = vrcp.pop %v4484
        %v4541 = vrcp.pop %v4487
        %v4542 = vrcp.pop %v4490
        %v4543 = vrcp.pop %v4493
        %v4544 = vrcp.pop %v4496
        %v4545 = vrcp.pop %v4499
        %v4546 = vrcp.pop %v4502
        %v4547 = vrcp.pop %v4505
        %v4548 = vrcp.pop %v4508
        %v4549 = vrcp.pop %v4511
        %v4550 = vrcp.pop %v4514
        %v4551 = vrcp.pop %v4517
        %v4552 = vrcp.pop %v4520
        %v4553 = vmul.f32 %v4362, %v4521
        %v4554 = vmul.f32 %v4364, %v4522
        %v4555 = vmul.f32 %v4366, %v4523
        %v4556 = vmul.f32 %v4368, %v4524
        %v4557 = vmul.f32 %v4370, %v4525
        %v4558 = vmul.f32 %v4372, %v4526
        %v4559 = vmul.f32 %v4374, %v4527
        %v4560 = vmul.f32 %v4376, %v4528
        %v4561 = vmul.f32 %v4378, %v4529
        %v4562 = vmul.f32 %v4380, %v4530
        %v4563 = vmul.f32 %v4382, %v4531
        %v4564 = vmul.f32 %v4384, %v4532
        %v4565 = vmul.f32 %v4386, %v4533
        %v4566 = vmul.f32 %v4388, %v4534
        %v4567 = vmul.f32 %v4390, %v4535
        %v4568 = vmul.f32 %v4392, %v4536
        %v4569 = vmul.f32 %v4394, %v4537
        %v4570 = vmul.f32 %v4396, %v4538
        %v4571 = vmul.f32 %v4398, %v4539
        %v4572 = vmul.f32 %v4400, %v4540
        %v4573 = vmul.f32 %v4402, %v4541
        %v4574 = vmul.f32 %v4404, %v4542
        %v4575 = vmul.f32 %v4406, %v4543
        %v4576 = vmul.f32 %v4408, %v4544
        %v4577 = vmul.f32 %v4410, %v4545
        %v4578 = vmul.f32 %v4412, %v4546
        %v4579 = vmul.f32 %v4414, %v4547
        %v4580 = vmul.f32 %v4416, %v4548
        %v4581 = vmul.f32 %v4418, %v4549
        %v4582 = vmul.f32 %v4420, %v4550
        %v4583 = vmul.f32 %v4422, %v4551
        %v4584 = vmul.f32 %v4424, %v4552
        %v4585 = vpack.c.bf16 %v4553, %v4553
        %v4586 = vpack.c.bf16 %v4554, %v4554
        %v4587 = vpack.c.bf16 %v4555, %v4555
        %v4588 = vpack.c.bf16 %v4556, %v4556
        %v4589 = vpack.c.bf16 %v4557, %v4557
        %v4590 = vpack.c.bf16 %v4558, %v4558
        %v4591 = vpack.c.bf16 %v4559, %v4559
        %v4592 = vpack.c.bf16 %v4560, %v4560
        %v4593 = vpack.c.bf16 %v4561, %v4561
        %v4594 = vpack.c.bf16 %v4562, %v4562
        %v4595 = vpack.c.bf16 %v4563, %v4563
        %v4596 = vpack.c.bf16 %v4564, %v4564
        %v4597 = vpack.c.bf16 %v4565, %v4565
        %v4598 = vpack.c.bf16 %v4566, %v4566
        %v4599 = vpack.c.bf16 %v4567, %v4567
        %v4600 = vpack.c.bf16 %v4568, %v4568
        %v4601 = vpack.c.bf16 %v4569, %v4569
        %v4602 = vpack.c.bf16 %v4570, %v4570
        %v4603 = vpack.c.bf16 %v4571, %v4571
        %v4604 = vpack.c.bf16 %v4572, %v4572
        %v4605 = vpack.c.bf16 %v4573, %v4573
        %v4606 = vpack.c.bf16 %v4574, %v4574
        %v4607 = vpack.c.bf16 %v4575, %v4575
        %v4608 = vpack.c.bf16 %v4576, %v4576
        %v4609 = vpack.c.bf16 %v4577, %v4577
        %v4610 = vpack.c.bf16 %v4578, %v4578
        %v4611 = vpack.c.bf16 %v4579, %v4579
        %v4612 = vpack.c.bf16 %v4580, %v4580
        %v4613 = vpack.c.bf16 %v4581, %v4581
        %v4614 = vpack.c.bf16 %v4582, %v4582
        %v4615 = vpack.c.bf16 %v4583, %v4583
        %v4616 = vpack.c.bf16 %v4584, %v4584
        %v4625 = vunpack.c.l.b16 %v4585
        %v4626 = vunpack.c.l.b16 %v4586
        %v4627 = vunpack.c.l.b16 %v4587
        %v4628 = vunpack.c.l.b16 %v4588
        %v4629 = vunpack.c.l.b16 %v4589
        %v4630 = vunpack.c.l.b16 %v4590
        %v4631 = vunpack.c.l.b16 %v4591
        %v4632 = vunpack.c.l.b16 %v4592
        %v4633 = vpack.c.b16 %v4626, %v4625
        %v4634 = vpack.c.b16 %v4628, %v4627
        %v4635 = vpack.c.b16 %v4630, %v4629
        %v4636 = vpack.c.b16 %v4632, %v4631
        %4637 = vrot.lane.b32.xlu0 %v713, 40
        %v4638 = vpop.permute.xlu0 %4637
        %4639 = vrot.lane.b32.xlu0 %v714, 40
        %v4640 = vpop.permute.xlu0 %4639
        %4641 = vrot.lane.b32.xlu0 %v715, 40
        %v4642 = vpop.permute.xlu0 %4641
        %4643 = vrot.lane.b32.xlu0 %v716, 40
        %v4644 = vpop.permute.xlu0 %4643
        %v4650 = vsel %vm1022, %v4633, 0
        %v4653 = vsel %vm1022, %v4634, 0
        %v4656 = vsel %vm1022, %v4635, 0
        %v4659 = vsel %vm1022, %v4636, 0
        %4661 = vmatpush.bf16.msra.mxu0 0
        %4662 = vmatpush.bf16.msra.mxu0 0
        %4663 = vmatpush.bf16.msra.mxu0 0
        %4664 = vmatpush.bf16.msra.mxu0 0
        %4665 = vmatpush.bf16.msra.mxu0 %v4644
        %4666 = vmatpush.bf16.msra.mxu0 %v4642
        %4667 = vmatpush.bf16.msra.mxu0 %v4640
        %4668 = vmatpush.bf16.msra.mxu0 %v4638
        %4669 = vmatmul.bf16.gmra.mxu0 %v4650
        %v4670 = vpop.f32.mrf.mxu0
        %v4671 = vadd.f32 0.0, %v4670
        %v4672 = vpop.f32.mrf.mxu0
        %v4673 = vadd.f32 0.0, %v4672
        %4674 = vmatmul.bf16.gmra.mxu0 %v4653
        %v4675 = vpop.f32.mrf.mxu0
        %v4676 = vadd.f32 0.0, %v4675
        %v4677 = vpop.f32.mrf.mxu0
        %v4678 = vadd.f32 0.0, %v4677
        %4679 = vmatmul.bf16.gmra.mxu0 %v4656
        %v4680 = vpop.f32.mrf.mxu0
        %v4681 = vadd.f32 0.0, %v4680
        %v4682 = vpop.f32.mrf.mxu0
        %v4683 = vadd.f32 0.0, %v4682
        %4684 = vmatmul.bf16.gmra.mxu0 %v4659
        %v4685 = vpop.f32.mrf.mxu0
        %v4686 = vadd.f32 0.0, %v4685
        %v4687 = vpop.f32.mrf.mxu0
        %v4688 = vadd.f32 0.0, %v4687
        %4689 = vdwg.mxu0
        %v4698 = vunpack.c.l.b16 %v4593
        %v4699 = vunpack.c.l.b16 %v4594
        %v4700 = vunpack.c.l.b16 %v4595
        %v4701 = vunpack.c.l.b16 %v4596
        %v4702 = vunpack.c.l.b16 %v4597
        %v4703 = vunpack.c.l.b16 %v4598
        %v4704 = vunpack.c.l.b16 %v4599
        %v4705 = vunpack.c.l.b16 %v4600
        %v4706 = vpack.c.b16 %v4699, %v4698
        %v4707 = vpack.c.b16 %v4701, %v4700
        %v4708 = vpack.c.b16 %v4703, %v4702
        %v4709 = vpack.c.b16 %v4705, %v4704
        %4710 = vrot.lane.b32.xlu0 %v795, 40
        %v4711 = vpop.permute.xlu0 %4710
        %4712 = vrot.lane.b32.xlu0 %v796, 40
        %v4713 = vpop.permute.xlu0 %4712
        %4714 = vrot.lane.b32.xlu0 %v797, 40
        %v4715 = vpop.permute.xlu0 %4714
        %4716 = vrot.lane.b32.xlu0 %v798, 40
        %v4717 = vpop.permute.xlu0 %4716
        %v4723 = vsel %vm1022, %v4706, 0
        %v4726 = vsel %vm1022, %v4707, 0
        %v4729 = vsel %vm1022, %v4708, 0
        %v4732 = vsel %vm1022, %v4709, 0
        %4734 = vmatpush.bf16.msra.mxu0 0
        %4735 = vmatpush.bf16.msra.mxu0 0
        %4736 = vmatpush.bf16.msra.mxu0 0
        %4737 = vmatpush.bf16.msra.mxu0 0
        %4738 = vmatpush.bf16.msra.mxu0 %v4717
        %4739 = vmatpush.bf16.msra.mxu0 %v4715
        %4740 = vmatpush.bf16.msra.mxu0 %v4713
        %4741 = vmatpush.bf16.msra.mxu0 %v4711
        %4742 = vmatmul.bf16.gmra.mxu0 %v4723
        %v4743 = vpop.f32.mrf.mxu0
        %v4744 = vadd.f32 0.0, %v4743
        %v4745 = vpop.f32.mrf.mxu0
        %v4746 = vadd.f32 0.0, %v4745
        %4747 = vmatmul.bf16.gmra.mxu0 %v4726
        %v4748 = vpop.f32.mrf.mxu0
        %v4749 = vadd.f32 0.0, %v4748
        %v4750 = vpop.f32.mrf.mxu0
        %v4751 = vadd.f32 0.0, %v4750
        %4752 = vmatmul.bf16.gmra.mxu0 %v4729
        %v4753 = vpop.f32.mrf.mxu0
        %v4754 = vadd.f32 0.0, %v4753
        %v4755 = vpop.f32.mrf.mxu0
        %v4756 = vadd.f32 0.0, %v4755
        %4757 = vmatmul.bf16.gmra.mxu0 %v4732
        %v4758 = vpop.f32.mrf.mxu0
        %v4759 = vadd.f32 0.0, %v4758
        %v4760 = vpop.f32.mrf.mxu0
        %v4761 = vadd.f32 0.0, %v4760
        %4762 = vdwg.mxu0
        %v4771 = vunpack.c.l.b16 %v4601
        %v4772 = vunpack.c.l.b16 %v4602
        %v4773 = vunpack.c.l.b16 %v4603
        %v4774 = vunpack.c.l.b16 %v4604
        %v4775 = vunpack.c.l.b16 %v4605
        %v4776 = vunpack.c.l.b16 %v4606
        %v4777 = vunpack.c.l.b16 %v4607
        %v4778 = vunpack.c.l.b16 %v4608
        %v4779 = vpack.c.b16 %v4772, %v4771
        %v4780 = vpack.c.b16 %v4774, %v4773
        %v4781 = vpack.c.b16 %v4776, %v4775
        %v4782 = vpack.c.b16 %v4778, %v4777
        %4783 = vrot.lane.b32.xlu0 %v876, 40
        %v4784 = vpop.permute.xlu0 %4783
        %4785 = vrot.lane.b32.xlu0 %v877, 40
        %v4786 = vpop.permute.xlu0 %4785
        %4787 = vrot.lane.b32.xlu0 %v878, 40
        %v4788 = vpop.permute.xlu0 %4787
        %4789 = vrot.lane.b32.xlu0 %v879, 40
        %v4790 = vpop.permute.xlu0 %4789
        %v4796 = vsel %vm1022, %v4779, 0
        %v4799 = vsel %vm1022, %v4780, 0
        %v4802 = vsel %vm1022, %v4781, 0
        %v4805 = vsel %vm1022, %v4782, 0
        %4807 = vmatpush.bf16.msra.mxu0 0
        %4808 = vmatpush.bf16.msra.mxu0 0
        %4809 = vmatpush.bf16.msra.mxu0 0
        %4810 = vmatpush.bf16.msra.mxu0 0
        %4811 = vmatpush.bf16.msra.mxu0 %v4790
        %4812 = vmatpush.bf16.msra.mxu0 %v4788
        %4813 = vmatpush.bf16.msra.mxu0 %v4786
        %4814 = vmatpush.bf16.msra.mxu0 %v4784
        %4815 = vmatmul.bf16.gmra.mxu0 %v4796
        %v4816 = vpop.f32.mrf.mxu0
        %v4817 = vadd.f32 0.0, %v4816
        %v4818 = vpop.f32.mrf.mxu0
        %v4819 = vadd.f32 0.0, %v4818
        %4820 = vmatmul.bf16.gmra.mxu0 %v4799
        %v4821 = vpop.f32.mrf.mxu0
        %v4822 = vadd.f32 0.0, %v4821
        %v4823 = vpop.f32.mrf.mxu0
        %v4824 = vadd.f32 0.0, %v4823
        %4825 = vmatmul.bf16.gmra.mxu0 %v4802
        %v4826 = vpop.f32.mrf.mxu0
        %v4827 = vadd.f32 0.0, %v4826
        %v4828 = vpop.f32.mrf.mxu0
        %v4829 = vadd.f32 0.0, %v4828
        %4830 = vmatmul.bf16.gmra.mxu0 %v4805
        %v4831 = vpop.f32.mrf.mxu0
        %v4832 = vadd.f32 0.0, %v4831
        %v4833 = vpop.f32.mrf.mxu0
        %v4834 = vadd.f32 0.0, %v4833
        %4835 = vdwg.mxu0
        %v4844 = vunpack.c.l.b16 %v4609
        %v4845 = vunpack.c.l.b16 %v4610
        %v4846 = vunpack.c.l.b16 %v4611
        %v4847 = vunpack.c.l.b16 %v4612
        %v4848 = vunpack.c.l.b16 %v4613
        %v4849 = vunpack.c.l.b16 %v4614
        %v4850 = vunpack.c.l.b16 %v4615
        %v4851 = vunpack.c.l.b16 %v4616
        %v4852 = vpack.c.b16 %v4845, %v4844
        %v4853 = vpack.c.b16 %v4847, %v4846
        %v4854 = vpack.c.b16 %v4849, %v4848
        %v4855 = vpack.c.b16 %v4851, %v4850
        %4856 = vrot.lane.b32.xlu0 %v957, 40
        %v4857 = vpop.permute.xlu0 %4856
        %4858 = vrot.lane.b32.xlu0 %v958, 40
        %v4859 = vpop.permute.xlu0 %4858
        %4860 = vrot.lane.b32.xlu0 %v959, 40
        %v4861 = vpop.permute.xlu0 %4860
        %4862 = vrot.lane.b32.xlu0 %v960, 40
        %v4863 = vpop.permute.xlu0 %4862
        %v4869 = vsel %vm1022, %v4852, 0
        %v4872 = vsel %vm1022, %v4853, 0
        %v4875 = vsel %vm1022, %v4854, 0
        %v4878 = vsel %vm1022, %v4855, 0
        %4880 = vmatpush.bf16.msra.mxu0 0
        %4881 = vmatpush.bf16.msra.mxu0 0
        %4882 = vmatpush.bf16.msra.mxu0 0
        %4883 = vmatpush.bf16.msra.mxu0 0
        %4884 = vmatpush.bf16.msra.mxu0 %v4863
        %4885 = vmatpush.bf16.msra.mxu0 %v4861
        %4886 = vmatpush.bf16.msra.mxu0 %v4859
        %4887 = vmatpush.bf16.msra.mxu0 %v4857
        %4888 = vmatmul.bf16.gmra.mxu0 %v4869
        %v4889 = vpop.f32.mrf.mxu0
        %v4890 = vadd.f32 0.0, %v4889
        %v4891 = vpop.f32.mrf.mxu0
        %v4892 = vadd.f32 0.0, %v4891
        %4893 = vmatmul.bf16.gmra.mxu0 %v4872
        %v4894 = vpop.f32.mrf.mxu0
        %v4895 = vadd.f32 0.0, %v4894
        %v4896 = vpop.f32.mrf.mxu0
        %v4897 = vadd.f32 0.0, %v4896
        %4898 = vmatmul.bf16.gmra.mxu0 %v4875
        %v4899 = vpop.f32.mrf.mxu0
        %v4900 = vadd.f32 0.0, %v4899
        %v4901 = vpop.f32.mrf.mxu0
        %v4902 = vadd.f32 0.0, %v4901
        %4903 = vmatmul.bf16.gmra.mxu0 %v4878
        %v4904 = vpop.f32.mrf.mxu0
        %v4905 = vadd.f32 0.0, %v4904
        %v4906 = vpop.f32.mrf.mxu0
        %v4907 = vadd.f32 0.0, %v4906
        %4908 = vdwg.mxu0
        %4941 = vrot.lane.b32.xlu0 %v4671, 24
        %v4942 = vpop.permute.xlu0 %4941
        %4943 = vrot.lane.b32.xlu0 %v4673, 24
        %v4944 = vpop.permute.xlu0 %4943
        %4945 = vrot.lane.b32.xlu0 %v4676, 24
        %v4946 = vpop.permute.xlu0 %4945
        %4947 = vrot.lane.b32.xlu0 %v4678, 24
        %v4948 = vpop.permute.xlu0 %4947
        %4949 = vrot.lane.b32.xlu0 %v4681, 24
        %v4950 = vpop.permute.xlu0 %4949
        %4951 = vrot.lane.b32.xlu0 %v4683, 24
        %v4952 = vpop.permute.xlu0 %4951
        %4953 = vrot.lane.b32.xlu0 %v4686, 24
        %v4954 = vpop.permute.xlu0 %4953
        %4955 = vrot.lane.b32.xlu0 %v4688, 24
        %v4956 = vpop.permute.xlu0 %4955
        %4957 = vrot.lane.b32.xlu0 %v4744, 24
        %v4958 = vpop.permute.xlu0 %4957
        %4959 = vrot.lane.b32.xlu0 %v4746, 24
        %v4960 = vpop.permute.xlu0 %4959
        %4961 = vrot.lane.b32.xlu0 %v4749, 24
        %v4962 = vpop.permute.xlu0 %4961
        %4963 = vrot.lane.b32.xlu0 %v4751, 24
        %v4964 = vpop.permute.xlu0 %4963
        %4965 = vrot.lane.b32.xlu0 %v4754, 24
        %v4966 = vpop.permute.xlu0 %4965
        %4967 = vrot.lane.b32.xlu0 %v4756, 24
        %v4968 = vpop.permute.xlu0 %4967
        %4969 = vrot.lane.b32.xlu0 %v4759, 24
        %v4970 = vpop.permute.xlu0 %4969
        %4971 = vrot.lane.b32.xlu0 %v4761, 24
        %v4972 = vpop.permute.xlu0 %4971
        %4973 = vrot.lane.b32.xlu0 %v4817, 24
        %v4974 = vpop.permute.xlu0 %4973
        %4975 = vrot.lane.b32.xlu0 %v4819, 24
        %v4976 = vpop.permute.xlu0 %4975
        %4977 = vrot.lane.b32.xlu0 %v4822, 24
        %v4978 = vpop.permute.xlu0 %4977
        %4979 = vrot.lane.b32.xlu0 %v4824, 24
        %v4980 = vpop.permute.xlu0 %4979
        %4981 = vrot.lane.b32.xlu0 %v4827, 24
        %v4982 = vpop.permute.xlu0 %4981
        %4983 = vrot.lane.b32.xlu0 %v4829, 24
        %v4984 = vpop.permute.xlu0 %4983
        %4985 = vrot.lane.b32.xlu0 %v4832, 24
        %v4986 = vpop.permute.xlu0 %4985
        %4987 = vrot.lane.b32.xlu0 %v4834, 24
        %v4988 = vpop.permute.xlu0 %4987
        %4989 = vrot.lane.b32.xlu0 %v4890, 24
        %v4990 = vpop.permute.xlu0 %4989
        %4991 = vrot.lane.b32.xlu0 %v4892, 24
        %v4992 = vpop.permute.xlu0 %4991
        %4993 = vrot.lane.b32.xlu0 %v4895, 24
        %v4994 = vpop.permute.xlu0 %4993
        %4995 = vrot.lane.b32.xlu0 %v4897, 24
        %v4996 = vpop.permute.xlu0 %4995
        %4997 = vrot.lane.b32.xlu0 %v4900, 24
        %v4998 = vpop.permute.xlu0 %4997
        %4999 = vrot.lane.b32.xlu0 %v4902, 24
        %v5000 = vpop.permute.xlu0 %4999
        %5001 = vrot.lane.b32.xlu0 %v4905, 24
        %v5002 = vpop.permute.xlu0 %5001
        %5003 = vrot.lane.b32.xlu0 %v4907, 24
        %v5004 = vpop.permute.xlu0 %5003
        %vm5037 = vcmask 261312
        %5038 = vst.msk [vmem:[%s363] sm:$0xff] %vm5037, %v4942
        %5039 = vst.msk [vmem:[%s363 + $0x8] sm:$0xff] %vm5037, %v4944
        %5040 = vst.msk [vmem:[%s363 + $0x10] sm:$0xff] %vm5037, %v4946
        %5041 = vst.msk [vmem:[%s363 + $0x18] sm:$0xff] %vm5037, %v4948
        %5042 = vst.msk [vmem:[%s363 + $0x20] sm:$0xff] %vm5037, %v4950
        %5043 = vst.msk [vmem:[%s363 + $0x28] sm:$0xff] %vm5037, %v4952
        %5044 = vst.msk [vmem:[%s363 + $0x30] sm:$0xff] %vm5037, %v4954
        %5045 = vst.msk [vmem:[%s363 + $0x38] sm:$0xff] %vm5037, %v4956
        %5046 = vst.msk [vmem:[%s363 + $0x40] sm:$0xff] %vm5037, %v4958
        %5047 = vst.msk [vmem:[%s363 + $0x48] sm:$0xff] %vm5037, %v4960
        %5048 = vst.msk [vmem:[%s363 + $0x50] sm:$0xff] %vm5037, %v4962
        %5049 = vst.msk [vmem:[%s363 + $0x58] sm:$0xff] %vm5037, %v4964
        %5050 = vst.msk [vmem:[%s363 + $0x60] sm:$0xff] %vm5037, %v4966
        %5051 = vst.msk [vmem:[%s363 + $0x68] sm:$0xff] %vm5037, %v4968
        %5052 = vst.msk [vmem:[%s363 + $0x70] sm:$0xff] %vm5037, %v4970
        %5053 = vst.msk [vmem:[%s363 + $0x78] sm:$0xff] %vm5037, %v4972
        %5054 = vst.msk [vmem:[%s363 + $0x80] sm:$0xff] %vm5037, %v4974
        %5055 = vst.msk [vmem:[%s363 + $0x88] sm:$0xff] %vm5037, %v4976
        %5056 = vst.msk [vmem:[%s363 + $0x90] sm:$0xff] %vm5037, %v4978
        %5057 = vst.msk [vmem:[%s363 + $0x98] sm:$0xff] %vm5037, %v4980
        %5058 = vst.msk [vmem:[%s363 + $0xa0] sm:$0xff] %vm5037, %v4982
        %5059 = vst.msk [vmem:[%s363 + $0xa8] sm:$0xff] %vm5037, %v4984
        %5060 = vst.msk [vmem:[%s363 + $0xb0] sm:$0xff] %vm5037, %v4986
        %5061 = vst.msk [vmem:[%s363 + $0xb8] sm:$0xff] %vm5037, %v4988
        %5062 = vst.msk [vmem:[%s363 + $0xc0] sm:$0xff] %vm5037, %v4990
        %5063 = vst.msk [vmem:[%s363 + $0xc8] sm:$0xff] %vm5037, %v4992
        %5064 = vst.msk [vmem:[%s363 + $0xd0] sm:$0xff] %vm5037, %v4994
        %5065 = vst.msk [vmem:[%s363 + $0xd8] sm:$0xff] %vm5037, %v4996
        %5066 = vst.msk [vmem:[%s363 + $0xe0] sm:$0xff] %vm5037, %v4998
        %5067 = vst.msk [vmem:[%s363 + $0xe8] sm:$0xff] %vm5037, %v5000
        %5068 = vst.msk [vmem:[%s363 + $0xf0] sm:$0xff] %vm5037, %v5002
        %5069 = vst.msk [vmem:[%s363 + $0xf8] sm:$0xff] %vm5037, %v5004
        %s5070 = sand.u32 %s117, 1
        %s5071 = sand.u32 %s117, 1
        %s5072 = smul.addr %s5071, 256
        %s5073 = scalar_lea.vmem [#allocation3], %s5072
        // Predicated region
        $region74: #{global_attention_forward.2} parent=68 // pred_check
          %p5074 = pneg %p127
        $region75: #{global_attention_forward.2} parent=68 // pred_check_branch
          %5076 = sbr.rel (%p5074) target = $region77
        $region76: #{global_attention_forward.2} parent=68 // pred_region
          %s5077 = smul.u32 32, %s20
          %s5078 = smul.addr %s5077, 4
          %s5079 = sadd.s32 %s21, %s5078
          %s5080 = smul.addr %s19, 128
          %s5081 = sadd.s32 %s5079, %s5080
          %s5082 = smul.addr %s5081, 8
          %s5083 = scalar_lea.vmem %s3, %s5082
          // Predicated region
          $region78: #{global_attention_forward.2} parent=76 // pred_check
            _
          $region79: #{global_attention_forward.2} parent=76 // pred_check_branch
            %5085 = sbr.rel (0) target = $region81
          $region80: #{global_attention_forward.2} parent=76 // pred_region
            // Predicated region
            $region82: #{global_attention_forward.2} parent=80 // pred_check
              _
            $region83: #{global_attention_forward.2} parent=80 // pred_check_branch
              %5087 = sbr.rel (0) target = $region85
            $region84: #{global_attention_forward.2} parent=80 // pred_region
              // Predicated region
              $region97: #{global_attention_forward.2} parent=84 // pred_check
                _
              $region98: #{global_attention_forward.2} parent=84 // pred_check_branch
                %5165 = sbr.rel (0) target = $region100
              $region99: #{global_attention_forward.2} parent=84 // pred_region
                loop: start=0, step=1, limit=1
                $region101: #{global_attention_forward.2} parent=99 // loop_pre_header
                  _
                $region102: #{global_attention_forward.2} parent=99 // loop_header
                  %s5167 = sphi 0, %s5171
                  %p5168 = scmp.ge.s32.totalorder %s5167, 1
                  %s5172 = sphi %s5073, %s5073
                  %s5173 = sphi %s5083, %s5083
                $region103: #{global_attention_forward.2} parent=99 // loop_header_branch
                  %5170 = sbr.rel (%p5168) target = $region107
                $region104: #{global_attention_forward.2} parent=99 // loop_body
                  %v5174 = vld [vmem:[%s5172] sm:$0xff]
                  %5175 = vst [vmem:[%s5173] sm:$0xff] %v5174
                  %v5176 = vld [vmem:[%s5172 + $0x8] sm:$0xff]
                  %5177 = vst [vmem:[%s5173 + $0x20] sm:$0xff] %v5176
                  %v5178 = vld [vmem:[%s5172 + $0x10] sm:$0xff]
                  %5179 = vst [vmem:[%s5173 + $0x40] sm:$0xff] %v5178
                  %v5180 = vld [vmem:[%s5172 + $0x18] sm:$0xff]
                  %5181 = vst [vmem:[%s5173 + $0x60] sm:$0xff] %v5180
                  %v5182 = vld [vmem:[%s5172 + $0x20] sm:$0xff]
                  %5183 = vst [vmem:[%s5173 + $0x80] sm:$0xff] %v5182
                  %v5184 = vld [vmem:[%s5172 + $0x28] sm:$0xff]
                  %5185 = vst [vmem:[%s5173 + $0xa0] sm:$0xff] %v5184
                  %v5186 = vld [vmem:[%s5172 + $0x30] sm:$0xff]
                  %5187 = vst [vmem:[%s5173 + $0xc0] sm:$0xff] %v5186
                  %v5188 = vld [vmem:[%s5172 + $0x38] sm:$0xff]
                  %5189 = vst [vmem:[%s5173 + $0xe0] sm:$0xff] %v5188
                  %v5190 = vld [vmem:[%s5172 + $0x40] sm:$0xff]
                  %5191 = vst [vmem:[%s5173 + $0x100] sm:$0xff] %v5190
                  %v5192 = vld [vmem:[%s5172 + $0x48] sm:$0xff]
                  %5193 = vst [vmem:[%s5173 + $0x120] sm:$0xff] %v5192
                  %v5194 = vld [vmem:[%s5172 + $0x50] sm:$0xff]
                  %5195 = vst [vmem:[%s5173 + $0x140] sm:$0xff] %v5194
                  %v5196 = vld [vmem:[%s5172 + $0x58] sm:$0xff]
                  %5197 = vst [vmem:[%s5173 + $0x160] sm:$0xff] %v5196
                  %v5198 = vld [vmem:[%s5172 + $0x60] sm:$0xff]
                  %5199 = vst [vmem:[%s5173 + $0x180] sm:$0xff] %v5198
                  %v5200 = vld [vmem:[%s5172 + $0x68] sm:$0xff]
                  %5201 = vst [vmem:[%s5173 + $0x1a0] sm:$0xff] %v5200
                  %v5202 = vld [vmem:[%s5172 + $0x70] sm:$0xff]
                  %5203 = vst [vmem:[%s5173 + $0x1c0] sm:$0xff] %v5202
                  %v5204 = vld [vmem:[%s5172 + $0x78] sm:$0xff]
                  %5205 = vst [vmem:[%s5173 + $0x1e0] sm:$0xff] %v5204
                  %v5206 = vld [vmem:[%s5172 + $0x80] sm:$0xff]
                  %5207 = vst [vmem:[%s5173 + $0x200] sm:$0xff] %v5206
                  %v5208 = vld [vmem:[%s5172 + $0x88] sm:$0xff]
                  %5209 = vst [vmem:[%s5173 + $0x220] sm:$0xff] %v5208
                  %v5210 = vld [vmem:[%s5172 + $0x90] sm:$0xff]
                  %5211 = vst [vmem:[%s5173 + $0x240] sm:$0xff] %v5210
                  %v5212 = vld [vmem:[%s5172 + $0x98] sm:$0xff]
                  %5213 = vst [vmem:[%s5173 + $0x260] sm:$0xff] %v5212
                  %v5214 = vld [vmem:[%s5172 + $0xa0] sm:$0xff]
                  %5215 = vst [vmem:[%s5173 + $0x280] sm:$0xff] %v5214
                  %v5216 = vld [vmem:[%s5172 + $0xa8] sm:$0xff]
                  %5217 = vst [vmem:[%s5173 + $0x2a0] sm:$0xff] %v5216
                  %v5218 = vld [vmem:[%s5172 + $0xb0] sm:$0xff]
                  %5219 = vst [vmem:[%s5173 + $0x2c0] sm:$0xff] %v5218
                  %v5220 = vld [vmem:[%s5172 + $0xb8] sm:$0xff]
                  %5221 = vst [vmem:[%s5173 + $0x2e0] sm:$0xff] %v5220
                  %v5222 = vld [vmem:[%s5172 + $0xc0] sm:$0xff]
                  %5223 = vst [vmem:[%s5173 + $0x300] sm:$0xff] %v5222
                  %v5224 = vld [vmem:[%s5172 + $0xc8] sm:$0xff]
                  %5225 = vst [vmem:[%s5173 + $0x320] sm:$0xff] %v5224
                  %v5226 = vld [vmem:[%s5172 + $0xd0] sm:$0xff]
                  %5227 = vst [vmem:[%s5173 + $0x340] sm:$0xff] %v5226
                  %v5228 = vld [vmem:[%s5172 + $0xd8] sm:$0xff]
                  %5229 = vst [vmem:[%s5173 + $0x360] sm:$0xff] %v5228
                  %v5230 = vld [vmem:[%s5172 + $0xe0] sm:$0xff]
                  %5231 = vst [vmem:[%s5173 + $0x380] sm:$0xff] %v5230
                  %v5232 = vld [vmem:[%s5172 + $0xe8] sm:$0xff]
                  %5233 = vst [vmem:[%s5173 + $0x3a0] sm:$0xff] %v5232
                  %v5234 = vld [vmem:[%s5172 + $0xf0] sm:$0xff]
                  %5235 = vst [vmem:[%s5173 + $0x3c0] sm:$0xff] %v5234
                  %v5236 = vld [vmem:[%s5172 + $0xf8] sm:$0xff]
                  %5237 = vst [vmem:[%s5173 + $0x3e0] sm:$0xff] %v5236
                $region105: #{global_attention_forward.2} parent=99 // loop_footer
                  %s5171 = sadd.s32 1, %s5167
                $region106: #{global_attention_forward.2} parent=99 // loop_footer_branch
                  %5166 = sbr.rel target = $region102
                $region107: #{global_attention_forward.2} parent=99 // loop_exit
                  _
              $region100: #{global_attention_forward.2} parent=84 // pred_fallthru
                _
              // Predicated region
              $region108: #{global_attention_forward.2} parent=84 // pred_check
                _
              $region109: #{global_attention_forward.2} parent=84 // pred_check_branch
                %5239 = sbr.rel target = $region111
              $region110: #{global_attention_forward.2} parent=84 // pred_region
                _
              $region111: #{global_attention_forward.2} parent=84 // pred_fallthru
                _
            $region85: #{global_attention_forward.2} parent=80 // pred_fallthru
              _
            // Predicated region
            $region86: #{global_attention_forward.2} parent=80 // pred_check
              _
            $region87: #{global_attention_forward.2} parent=80 // pred_check_branch
              %5089 = sbr.rel target = $region89
            $region88: #{global_attention_forward.2} parent=80 // pred_region
              %s5091 = ssub.s32 256, 1
              loop: start=0, step=1, limit=1
              $region90: #{global_attention_forward.2} parent=88 // loop_pre_header
                _
              $region91: #{global_attention_forward.2} parent=88 // loop_header
                %s5093 = sphi 0, %s5097
                %p5094 = scmp.ge.s32.totalorder %s5093, 1
                %s5098 = sphi %s5073, %s5073
                %s5099 = sphi %s5083, %s5083
              $region92: #{global_attention_forward.2} parent=88 // loop_header_branch
                %5096 = sbr.rel (%p5094) target = $region96
              $region93: #{global_attention_forward.2} parent=88 // loop_body
                %v5100 = vld [vmem:[%s5098] sm:%s5091]
                %5101 = vst [vmem:[%s5099] sm:%s5091] %v5100
                %v5102 = vld [vmem:[%s5098 + $0x8] sm:%s5091]
                %5103 = vst [vmem:[%s5099 + $0x20] sm:%s5091] %v5102
                %v5104 = vld [vmem:[%s5098 + $0x10] sm:%s5091]
                %5105 = vst [vmem:[%s5099 + $0x40] sm:%s5091] %v5104
                %v5106 = vld [vmem:[%s5098 + $0x18] sm:%s5091]
                %5107 = vst [vmem:[%s5099 + $0x60] sm:%s5091] %v5106
                %v5108 = vld [vmem:[%s5098 + $0x20] sm:%s5091]
                %5109 = vst [vmem:[%s5099 + $0x80] sm:%s5091] %v5108
                %v5110 = vld [vmem:[%s5098 + $0x28] sm:%s5091]
                %5111 = vst [vmem:[%s5099 + $0xa0] sm:%s5091] %v5110
                %v5112 = vld [vmem:[%s5098 + $0x30] sm:%s5091]
                %5113 = vst [vmem:[%s5099 + $0xc0] sm:%s5091] %v5112
                %v5114 = vld [vmem:[%s5098 + $0x38] sm:%s5091]
                %5115 = vst [vmem:[%s5099 + $0xe0] sm:%s5091] %v5114
                %v5116 = vld [vmem:[%s5098 + $0x40] sm:%s5091]
                %5117 = vst [vmem:[%s5099 + $0x100] sm:%s5091] %v5116
                %v5118 = vld [vmem:[%s5098 + $0x48] sm:%s5091]
                %5119 = vst [vmem:[%s5099 + $0x120] sm:%s5091] %v5118
                %v5120 = vld [vmem:[%s5098 + $0x50] sm:%s5091]
                %5121 = vst [vmem:[%s5099 + $0x140] sm:%s5091] %v5120
                %v5122 = vld [vmem:[%s5098 + $0x58] sm:%s5091]
                %5123 = vst [vmem:[%s5099 + $0x160] sm:%s5091] %v5122
                %v5124 = vld [vmem:[%s5098 + $0x60] sm:%s5091]
                %5125 = vst [vmem:[%s5099 + $0x180] sm:%s5091] %v5124
                %v5126 = vld [vmem:[%s5098 + $0x68] sm:%s5091]
                %5127 = vst [vmem:[%s5099 + $0x1a0] sm:%s5091] %v5126
                %v5128 = vld [vmem:[%s5098 + $0x70] sm:%s5091]
                %5129 = vst [vmem:[%s5099 + $0x1c0] sm:%s5091] %v5128
                %v5130 = vld [vmem:[%s5098 + $0x78] sm:%s5091]
                %5131 = vst [vmem:[%s5099 + $0x1e0] sm:%s5091] %v5130
                %v5132 = vld [vmem:[%s5098 + $0x80] sm:%s5091]
                %5133 = vst [vmem:[%s5099 + $0x200] sm:%s5091] %v5132
                %v5134 = vld [vmem:[%s5098 + $0x88] sm:%s5091]
                %5135 = vst [vmem:[%s5099 + $0x220] sm:%s5091] %v5134
                %v5136 = vld [vmem:[%s5098 + $0x90] sm:%s5091]
                %5137 = vst [vmem:[%s5099 + $0x240] sm:%s5091] %v5136
                %v5138 = vld [vmem:[%s5098 + $0x98] sm:%s5091]
                %5139 = vst [vmem:[%s5099 + $0x260] sm:%s5091] %v5138
                %v5140 = vld [vmem:[%s5098 + $0xa0] sm:%s5091]
                %5141 = vst [vmem:[%s5099 + $0x280] sm:%s5091] %v5140
                %v5142 = vld [vmem:[%s5098 + $0xa8] sm:%s5091]
                %5143 = vst [vmem:[%s5099 + $0x2a0] sm:%s5091] %v5142
                %v5144 = vld [vmem:[%s5098 + $0xb0] sm:%s5091]
                %5145 = vst [vmem:[%s5099 + $0x2c0] sm:%s5091] %v5144
                %v5146 = vld [vmem:[%s5098 + $0xb8] sm:%s5091]
                %5147 = vst [vmem:[%s5099 + $0x2e0] sm:%s5091] %v5146
                %v5148 = vld [vmem:[%s5098 + $0xc0] sm:%s5091]
                %5149 = vst [vmem:[%s5099 + $0x300] sm:%s5091] %v5148
                %v5150 = vld [vmem:[%s5098 + $0xc8] sm:%s5091]
                %5151 = vst [vmem:[%s5099 + $0x320] sm:%s5091] %v5150
                %v5152 = vld [vmem:[%s5098 + $0xd0] sm:%s5091]
                %5153 = vst [vmem:[%s5099 + $0x340] sm:%s5091] %v5152
                %v5154 = vld [vmem:[%s5098 + $0xd8] sm:%s5091]
                %5155 = vst [vmem:[%s5099 + $0x360] sm:%s5091] %v5154
                %v5156 = vld [vmem:[%s5098 + $0xe0] sm:%s5091]
                %5157 = vst [vmem:[%s5099 + $0x380] sm:%s5091] %v5156
                %v5158 = vld [vmem:[%s5098 + $0xe8] sm:%s5091]
                %5159 = vst [vmem:[%s5099 + $0x3a0] sm:%s5091] %v5158
                %v5160 = vld [vmem:[%s5098 + $0xf0] sm:%s5091]
                %5161 = vst [vmem:[%s5099 + $0x3c0] sm:%s5091] %v5160
                %v5162 = vld [vmem:[%s5098 + $0xf8] sm:%s5091]
                %5163 = vst [vmem:[%s5099 + $0x3e0] sm:%s5091] %v5162
              $region94: #{global_attention_forward.2} parent=88 // loop_footer
                %s5097 = sadd.s32 1, %s5093
              $region95: #{global_attention_forward.2} parent=88 // loop_footer_branch
                %5092 = sbr.rel target = $region91
              $region96: #{global_attention_forward.2} parent=88 // loop_exit
                _
            $region89: #{global_attention_forward.2} parent=80 // pred_fallthru
              _
          $region81: #{global_attention_forward.2} parent=76 // pred_fallthru
            _
          %5240 = vnop
        $region77: #{global_attention_forward.2} parent=68 // pred_fallthru
          _
      $region69: #{global_attention_forward.2} parent=5 // pred_fallthru
        _
      %p5241 = scmp.le.s32.totalorder 2, %s9
      // Predicated region
      $region112: #{global_attention_forward.2} parent=5 // pred_check
        %p5242 = pneg %p5241
      $region113: #{global_attention_forward.2} parent=5 // pred_check_branch
        %5244 = sbr.rel (%p5242) target = $region115
      $region114: #{global_attention_forward.2} parent=5 // pred_region
        %s5245 = ssub.s32 %s9, 2
        // Predicated region
        $region116: #{global_attention_forward.2} parent=114 // pred_check
          %p5246 = pneg %p133
        $region117: #{global_attention_forward.2} parent=114 // pred_check_branch
          %5248 = sbr.rel (%p5246) target = $region119
        $region118: #{global_attention_forward.2} parent=114 // pred_region
          %s5249 = sand.u32 %s118, 1
          %s5250 = sand.u32 %s118, 1
          %s5251 = smul.addr %s5250, 256
          %s5252 = scalar_lea.vmem [#allocation3], %s5251
        $region119: #{global_attention_forward.2} parent=114 // pred_fallthru
          _
      $region115: #{global_attention_forward.2} parent=5 // pred_fallthru
        _
    $region6: #{global_attention_forward.2} parent=1 // loop_footer
      %s13 = sadd.s32 1, %s9
    $region7: #{global_attention_forward.2} parent=1 // loop_footer_branch
      %8 = sbr.rel target = $region3
    $region8: #{global_attention_forward.2} parent=1 // loop_exit
      _

// kernel: global_attention_forward.3
$region0: #{global_attention_forward.3}
  #allocation0 [shape = 'u32[]', space=smem, size = 0x4, offset = 0x4, fixed_abs, tag = 'smem constant byte address 0x4 - core index']
  #allocation1 [shape = 'u32[72,128]{1,0:T(1,128)}', space=vmem, size = 0x9000, scoped, tag = 'internal scratch']
  %s0 = inlined_call_operand.vmem [shape: bf16[2048,32], index: 0, kind: input, shape index: {}]
  %s1 = inlined_call_operand.vmem [shape: bf16[32,32], index: 1, kind: input, shape index: {}]
  %s2 = inlined_call_operand.vmem [shape: f32[1,32], index: 2, kind: input, shape index: {}]
  %s3 = inlined_call_operand.vmem [shape: f32[2048,32], index: 3, kind: output, shape index: {}]
  %s4 = sld [smem:[#allocation0]]
  $region45: #{global_attention_forward.3} parent=0
    _
  %s6 = ssub.s32 1, %s4
  %s7 = scalar_select 0, %s6, %s4
  loop: start=0, step=1, limit=4
  $region2: #{global_attention_forward.3} parent=0 // loop_pre_header
    _
  $region3: #{global_attention_forward.3} parent=0 // loop_header
    %s9 = sphi 0, %s13
    %p10 = scmp.ge.s32.totalorder %s9, 4
    %s19 = sphi 0, %s21
    %s22 = sphi 0, %s19
    %s23 = sphi 0, %s22
    %s39 = sphi 0, %s23
    %s43 = sphi 0, %s43
    %s45 = sphi 0, %s43
    %s46 = sphi 0, %s45
    %s60 = sphi 0, %s46
    %s64 = sphi 0, %s64
    %s66 = sphi 0, %s64
    %s67 = sphi 0, %s66
    %s81 = sphi 0, %s67
    %s87 = sphi 0, %s89
    %s90 = sphi 0, %s87
    %s91 = sphi 0, %s90
    %s107 = sphi 0, %s91
  $region4: #{global_attention_forward.3} parent=0 // loop_header_branch
    %12 = sbr.rel (%p10) target = $region8
  $region5: #{global_attention_forward.3} parent=0 // loop_body
    %s14 = ssub.s32 %s9, 1
    %s15 = ssub.s32 %s9, 2
    %s16 = sadd.s32 %s9, 1
    %s17 = ssub.s32 %s9, %s16
    %p18 = scmp.eq.s32.totalorder %s17, 0
    %s20 = sadd.s32 %s19, 1
    %s21 = scalar_select %p18, %s19, %s20
    %p24 = pneg %p18
    %p25 = scmp.eq.s32.totalorder %s9, 1
    %p26 = por %p24, %p25
    %p27 = scmp.ne.s32.totalorder %s19, %s22
    %p28 = scmp.eq.s32.totalorder %s9, 0
    %p29 = por %p27, %p28
    %p30 = scmp.ne.s32.totalorder %s19, %s22
    %p31 = scmp.eq.s32.totalorder %s14, 1
    %p32 = por %p30, %p31
    %p33 = scmp.ne.s32.totalorder %s22, %s23
    %p34 = scmp.eq.s32.totalorder %s14, 0
    %p35 = por %p33, %p34
    %p36 = scmp.ne.s32.totalorder %s22, %s23
    %p37 = scmp.eq.s32.totalorder %s15, 1
    %p38 = por %p36, %p37
    %p40 = scmp.ne.s32.totalorder %s23, %s39
    %p41 = scmp.eq.s32.totalorder %s15, 0
    %p42 = por %p40, %p41
    %s44 = sadd.s32 %s43, 1
    %p47 = scmp.eq.s32.totalorder %s9, 1
    %p48 = scmp.ne.s32.totalorder %s43, %s45
    %p49 = scmp.eq.s32.totalorder %s9, 0
    %p50 = por %p48, %p49
    %p51 = scmp.ne.s32.totalorder %s43, %s45
    %p52 = scmp.eq.s32.totalorder %s14, 1
    %p53 = por %p51, %p52
    %p54 = scmp.ne.s32.totalorder %s45, %s46
    %p55 = scmp.eq.s32.totalorder %s14, 0
    %p56 = por %p54, %p55
    %p57 = scmp.ne.s32.totalorder %s45, %s46
    %p58 = scmp.eq.s32.totalorder %s15, 1
    %p59 = por %p57, %p58
    %p61 = scmp.ne.s32.totalorder %s46, %s60
    %p62 = scmp.eq.s32.totalorder %s15, 0
    %p63 = por %p61, %p62
    %s65 = sadd.s32 %s64, 1
    %p68 = scmp.eq.s32.totalorder %s9, 1
    %p69 = scmp.ne.s32.totalorder %s64, %s66
    %p70 = scmp.eq.s32.totalorder %s9, 0
    %p71 = por %p69, %p70
    %p72 = scmp.ne.s32.totalorder %s64, %s66
    %p73 = scmp.eq.s32.totalorder %s14, 1
    %p74 = por %p72, %p73
    %p75 = scmp.ne.s32.totalorder %s66, %s67
    %p76 = scmp.eq.s32.totalorder %s14, 0
    %p77 = por %p75, %p76
    %p78 = scmp.ne.s32.totalorder %s66, %s67
    %p79 = scmp.eq.s32.totalorder %s15, 1
    %p80 = por %p78, %p79
    %p82 = scmp.ne.s32.totalorder %s67, %s81
    %p83 = scmp.eq.s32.totalorder %s15, 0
    %p84 = por %p82, %p83
    %s85 = ssub.s32 %s9, %s16
    %p86 = scmp.eq.s32.totalorder %s85, 0
    %s88 = sadd.s32 %s87, 1
    %s89 = scalar_select %p86, %s87, %s88
    %p92 = pneg %p86
    %p93 = scmp.eq.s32.totalorder %s9, 1
    %p94 = por %p92, %p93
    %p95 = scmp.ne.s32.totalorder %s87, %s90
    %p96 = scmp.eq.s32.totalorder %s9, 0
    %p97 = por %p95, %p96
    %p98 = scmp.ne.s32.totalorder %s87, %s90
    %p99 = scmp.eq.s32.totalorder %s14, 1
    %p100 = por %p98, %p99
    %p101 = scmp.ne.s32.totalorder %s90, %s91
    %p102 = scmp.eq.s32.totalorder %s14, 0
    %p103 = por %p101, %p102
    %p104 = scmp.ne.s32.totalorder %s90, %s91
    %p105 = scmp.eq.s32.totalorder %s15, 1
    %p106 = por %p104, %p105
    %p108 = scmp.ne.s32.totalorder %s91, %s107
    %p109 = scmp.eq.s32.totalorder %s15, 0
    %p110 = por %p108, %p109
    %p111 = scmp.le.s32.totalorder 1, %s9
    %p112 = scmp.lt.s32.totalorder %s9, 3
    %p113 = pnand %p111, %p112
    %p114 = pneg %p113
    // Predicated region
    $region9: #{global_attention_forward.3} parent=5 // pred_check
      _
    $region10: #{global_attention_forward.3} parent=5 // pred_check_branch
      %116 = sbr.rel (%p113) target = $region12
    $region11: #{global_attention_forward.3} parent=5 // pred_region
      %s117 = ssub.s32 %s9, 1
      // Predicated region
      $region13: #{global_attention_forward.3} parent=11 // pred_check
        %p118 = pneg %p56
      $region14: #{global_attention_forward.3} parent=11 // pred_check_branch
        %120 = sbr.rel (%p118) target = $region16
      $region15: #{global_attention_forward.3} parent=11 // pred_region
        _
      $region16: #{global_attention_forward.3} parent=11 // pred_fallthru
        _
      // Predicated region
      $region17: #{global_attention_forward.3} parent=11 // pred_check
        %p121 = pneg %p77
      $region18: #{global_attention_forward.3} parent=11 // pred_check_branch
        %123 = sbr.rel (%p121) target = $region20
      $region19: #{global_attention_forward.3} parent=11 // pred_region
        _
      $region20: #{global_attention_forward.3} parent=11 // pred_fallthru
        _
    $region12: #{global_attention_forward.3} parent=5 // pred_fallthru
      _
    %p124 = scmp.lt.s32.totalorder %s9, 2
    // Predicated region
    $region21: #{global_attention_forward.3} parent=5 // pred_check
      %p125 = pneg %p124
    $region22: #{global_attention_forward.3} parent=5 // pred_check_branch
      %127 = sbr.rel (%p125) target = $region24
    $region23: #{global_attention_forward.3} parent=5 // pred_region
      // Predicated region
      $region25: #{global_attention_forward.3} parent=23 // pred_check
        %p128 = pneg %p29
      $region26: #{global_attention_forward.3} parent=23 // pred_check_branch
        %130 = sbr.rel (%p128) target = $region28
      $region27: #{global_attention_forward.3} parent=23 // pred_region
        %s131 = smul.u32 128, %s9
        %p132 = scmp.lt.s32.totalorder %s131, 255
        %s133 = scalar_select %p132, %s131, 255
        %s134 = smul.addr %s133, 4
        %s135 = scalar_lea.vmem %s0, %s134
        %s136 = smul.u32 128, %s9
      $region28: #{global_attention_forward.3} parent=23 // pred_fallthru
        _
    $region24: #{global_attention_forward.3} parent=5 // pred_fallthru
      _
    %p137 = scmp.le.s32.totalorder 1, %s9
    %p138 = scmp.lt.s32.totalorder %s9, 3
    %p139 = pnand %p137, %p138
    %p140 = pneg %p139
    // Predicated region
    $region29: #{global_attention_forward.3} parent=5 // pred_check
      _
    $region30: #{global_attention_forward.3} parent=5 // pred_check_branch
      %142 = sbr.rel (%p139) target = $region32
    $region31: #{global_attention_forward.3} parent=5 // pred_region
      %s143 = ssub.s32 %s9, 1
      %s144 = smul.u32 128, %s14
      %p145 = scmp.lt.s32.totalorder %s144, 255
      %s146 = scalar_select %p145, %s144, 255
      %s147 = smul.addr %s146, 4
      %s148 = scalar_lea.vmem %s0, %s147
      %p149 = pneg %p35
      %p150 = pneg %p32
      %p151 = pneg %p56
      %p152 = pneg %p53
      %p153 = pneg %p77
      %p154 = pneg %p74
      %p155 = pneg %p103
      %p156 = pneg %p100
      %s157 = smul.u32 128, %s14
      %p158 = scmp.lt.s32.totalorder %s157, 255
      %s159 = scalar_select %p158, %s157, 255
      %s160 = smul.addr %s159, 8
      %s161 = scalar_lea.vmem %s3, %s160
      %s162 = smul.u32 128, %s14
      %p163 = scmp.lt.s32.totalorder %s162, 255
      %s164 = scalar_select %p163, %s162, 255
      %s165 = smul.addr %s164, 4
      %s166 = scalar_lea.vmem %s0, %s165
      %s167 = smul.u32 128, %s14
      %s168 = smul.u32 128, %s14
      %p169 = scmp.lt.s32.totalorder %s168, 255
      %s170 = scalar_select %p169, %s168, 255
      %s171 = smul.addr %s170, 8
      %s172 = scalar_lea.vmem %s3, %s171
      %s173 = smul.u32 128, %s14
      %v175 = vld [vmem:[%s166] sm:$0xf]
      %v176 = vld [vmem:[%s166 + $0x4] sm:$0xf]
      %v177 = vld [vmem:[%s166 + $0x8] sm:$0xf]
      %v178 = vld [vmem:[%s166 + $0xc] sm:$0xf]
      %v179 = vld [vmem:[%s166 + $0x10] sm:$0xf]
      %v180 = vld [vmem:[%s166 + $0x14] sm:$0xf]
      %v181 = vld [vmem:[%s166 + $0x18] sm:$0xf]
      %v182 = vld [vmem:[%s166 + $0x1c] sm:$0xf]
      %v183 = vld [vmem:[%s166 + $0x20] sm:$0xf]
      %v184 = vld [vmem:[%s166 + $0x24] sm:$0xf]
      %v185 = vld [vmem:[%s166 + $0x28] sm:$0xf]
      %v186 = vld [vmem:[%s166 + $0x2c] sm:$0xf]
      %v187 = vld [vmem:[%s166 + $0x30] sm:$0xf]
      %v188 = vld [vmem:[%s166 + $0x34] sm:$0xf]
      %v189 = vld [vmem:[%s166 + $0x38] sm:$0xf]
      %v190 = vld [vmem:[%s166 + $0x3c] sm:$0xf]
      %v191 = vld [vmem:[%s166 + $0x40] sm:$0xf]
      %v192 = vld [vmem:[%s166 + $0x44] sm:$0xf]
      %v193 = vld [vmem:[%s166 + $0x48] sm:$0xf]
      %v194 = vld [vmem:[%s166 + $0x4c] sm:$0xf]
      %v195 = vld [vmem:[%s166 + $0x50] sm:$0xf]
      %v196 = vld [vmem:[%s166 + $0x54] sm:$0xf]
      %v197 = vld [vmem:[%s166 + $0x58] sm:$0xf]
      %v198 = vld [vmem:[%s166 + $0x5c] sm:$0xf]
      %v199 = vld [vmem:[%s166 + $0x60] sm:$0xf]
      %v200 = vld [vmem:[%s166 + $0x64] sm:$0xf]
      %v201 = vld [vmem:[%s166 + $0x68] sm:$0xf]
      %v202 = vld [vmem:[%s166 + $0x6c] sm:$0xf]
      %v203 = vld [vmem:[%s166 + $0x70] sm:$0xf]
      %v204 = vld [vmem:[%s166 + $0x74] sm:$0xf]
      %v205 = vld [vmem:[%s166 + $0x78] sm:$0xf]
      %v206 = vld [vmem:[%s166 + $0x7c] sm:$0xf]
      %v207 = vld [vmem:[%s166 + $0x80] sm:$0xf]
      %v208 = vld [vmem:[%s166 + $0x84] sm:$0xf]
      %v209 = vld [vmem:[%s166 + $0x88] sm:$0xf]
      %v210 = vld [vmem:[%s166 + $0x8c] sm:$0xf]
      %v211 = vld [vmem:[%s166 + $0x90] sm:$0xf]
      %v212 = vld [vmem:[%s166 + $0x94] sm:$0xf]
      %v213 = vld [vmem:[%s166 + $0x98] sm:$0xf]
      %v214 = vld [vmem:[%s166 + $0x9c] sm:$0xf]
      %v215 = vld [vmem:[%s166 + $0xa0] sm:$0xf]
      %v216 = vld [vmem:[%s166 + $0xa4] sm:$0xf]
      %v217 = vld [vmem:[%s166 + $0xa8] sm:$0xf]
      %v218 = vld [vmem:[%s166 + $0xac] sm:$0xf]
      %v219 = vld [vmem:[%s166 + $0xb0] sm:$0xf]
      %v220 = vld [vmem:[%s166 + $0xb4] sm:$0xf]
      %v221 = vld [vmem:[%s166 + $0xb8] sm:$0xf]
      %v222 = vld [vmem:[%s166 + $0xbc] sm:$0xf]
      %v223 = vld [vmem:[%s166 + $0xc0] sm:$0xf]
      %v224 = vld [vmem:[%s166 + $0xc4] sm:$0xf]
      %v225 = vld [vmem:[%s166 + $0xc8] sm:$0xf]
      %v226 = vld [vmem:[%s166 + $0xcc] sm:$0xf]
      %v227 = vld [vmem:[%s166 + $0xd0] sm:$0xf]
      %v228 = vld [vmem:[%s166 + $0xd4] sm:$0xf]
      %v229 = vld [vmem:[%s166 + $0xd8] sm:$0xf]
      %v230 = vld [vmem:[%s166 + $0xdc] sm:$0xf]
      %v231 = vld [vmem:[%s166 + $0xe0] sm:$0xf]
      %v232 = vld [vmem:[%s166 + $0xe4] sm:$0xf]
      %v233 = vld [vmem:[%s166 + $0xe8] sm:$0xf]
      %v234 = vld [vmem:[%s166 + $0xec] sm:$0xf]
      %v235 = vld [vmem:[%s166 + $0xf0] sm:$0xf]
      %v236 = vld [vmem:[%s166 + $0xf4] sm:$0xf]
      %v237 = vld [vmem:[%s166 + $0xf8] sm:$0xf]
      %v238 = vld [vmem:[%s166 + $0xfc] sm:$0xf]
      %v239 = vld [vmem:[%s166 + $0x100] sm:$0xf]
      %v240 = vld [vmem:[%s166 + $0x104] sm:$0xf]
      %v241 = vld [vmem:[%s166 + $0x108] sm:$0xf]
      %v242 = vld [vmem:[%s166 + $0x10c] sm:$0xf]
      %v243 = vld [vmem:[%s166 + $0x110] sm:$0xf]
      %v244 = vld [vmem:[%s166 + $0x114] sm:$0xf]
      %v245 = vld [vmem:[%s166 + $0x118] sm:$0xf]
      %v246 = vld [vmem:[%s166 + $0x11c] sm:$0xf]
      %v247 = vld [vmem:[%s166 + $0x120] sm:$0xf]
      %v248 = vld [vmem:[%s166 + $0x124] sm:$0xf]
      %v249 = vld [vmem:[%s166 + $0x128] sm:$0xf]
      %v250 = vld [vmem:[%s166 + $0x12c] sm:$0xf]
      %v251 = vld [vmem:[%s166 + $0x130] sm:$0xf]
      %v252 = vld [vmem:[%s166 + $0x134] sm:$0xf]
      %v253 = vld [vmem:[%s166 + $0x138] sm:$0xf]
      %v254 = vld [vmem:[%s166 + $0x13c] sm:$0xf]
      %v255 = vld [vmem:[%s166 + $0x140] sm:$0xf]
      %v256 = vld [vmem:[%s166 + $0x144] sm:$0xf]
      %v257 = vld [vmem:[%s166 + $0x148] sm:$0xf]
      %v258 = vld [vmem:[%s166 + $0x14c] sm:$0xf]
      %v259 = vld [vmem:[%s166 + $0x150] sm:$0xf]
      %v260 = vld [vmem:[%s166 + $0x154] sm:$0xf]
      %v261 = vld [vmem:[%s166 + $0x158] sm:$0xf]
      %v262 = vld [vmem:[%s166 + $0x15c] sm:$0xf]
      %v263 = vld [vmem:[%s166 + $0x160] sm:$0xf]
      %v264 = vld [vmem:[%s166 + $0x164] sm:$0xf]
      %v265 = vld [vmem:[%s166 + $0x168] sm:$0xf]
      %v266 = vld [vmem:[%s166 + $0x16c] sm:$0xf]
      %v267 = vld [vmem:[%s166 + $0x170] sm:$0xf]
      %v268 = vld [vmem:[%s166 + $0x174] sm:$0xf]
      %v269 = vld [vmem:[%s166 + $0x178] sm:$0xf]
      %v270 = vld [vmem:[%s166 + $0x17c] sm:$0xf]
      %v271 = vld [vmem:[%s166 + $0x180] sm:$0xf]
      %v272 = vld [vmem:[%s166 + $0x184] sm:$0xf]
      %v273 = vld [vmem:[%s166 + $0x188] sm:$0xf]
      %v274 = vld [vmem:[%s166 + $0x18c] sm:$0xf]
      %v275 = vld [vmem:[%s166 + $0x190] sm:$0xf]
      %v276 = vld [vmem:[%s166 + $0x194] sm:$0xf]
      %v277 = vld [vmem:[%s166 + $0x198] sm:$0xf]
      %v278 = vld [vmem:[%s166 + $0x19c] sm:$0xf]
      %v279 = vld [vmem:[%s166 + $0x1a0] sm:$0xf]
      %v280 = vld [vmem:[%s166 + $0x1a4] sm:$0xf]
      %v281 = vld [vmem:[%s166 + $0x1a8] sm:$0xf]
      %v282 = vld [vmem:[%s166 + $0x1ac] sm:$0xf]
      %v283 = vld [vmem:[%s166 + $0x1b0] sm:$0xf]
      %v284 = vld [vmem:[%s166 + $0x1b4] sm:$0xf]
      %v285 = vld [vmem:[%s166 + $0x1b8] sm:$0xf]
      %v286 = vld [vmem:[%s166 + $0x1bc] sm:$0xf]
      %v287 = vld [vmem:[%s166 + $0x1c0] sm:$0xf]
      %v288 = vld [vmem:[%s166 + $0x1c4] sm:$0xf]
      %v289 = vld [vmem:[%s166 + $0x1c8] sm:$0xf]
      %v290 = vld [vmem:[%s166 + $0x1cc] sm:$0xf]
      %v291 = vld [vmem:[%s166 + $0x1d0] sm:$0xf]
      %v292 = vld [vmem:[%s166 + $0x1d4] sm:$0xf]
      %v293 = vld [vmem:[%s166 + $0x1d8] sm:$0xf]
      %v294 = vld [vmem:[%s166 + $0x1dc] sm:$0xf]
      %v295 = vld [vmem:[%s166 + $0x1e0] sm:$0xf]
      %v296 = vld [vmem:[%s166 + $0x1e4] sm:$0xf]
      %v297 = vld [vmem:[%s166 + $0x1e8] sm:$0xf]
      %v298 = vld [vmem:[%s166 + $0x1ec] sm:$0xf]
      %v299 = vld [vmem:[%s166 + $0x1f0] sm:$0xf]
      %v300 = vld [vmem:[%s166 + $0x1f4] sm:$0xf]
      %v301 = vld [vmem:[%s166 + $0x1f8] sm:$0xf]
      %v302 = vld [vmem:[%s166 + $0x1fc] sm:$0xf]
      %v303 = vld [vmem:[%s1] sm:$0xf]
      %v304 = vld [vmem:[%s1 + $0x4] sm:$0xf]
      %v305 = vld [vmem:[%s1 + $0x8] sm:$0xf]
      %v306 = vld [vmem:[%s1 + $0xc] sm:$0xf]
      %v307 = vld [vmem:[%s2] sm:$0x1]
      %v309 = vperm.slane %v307, 0
      %v439 = vunpack.c.l.b16 %v175
      %v440 = vunpack.c.l.b16 %v176
      %v441 = vunpack.c.l.b16 %v177
      %v442 = vunpack.c.l.b16 %v178
      %v443 = vunpack.c.l.b16 %v179
      %v444 = vunpack.c.l.b16 %v180
      %v445 = vunpack.c.l.b16 %v181
      %v446 = vunpack.c.l.b16 %v182
      %v447 = vunpack.c.l.b16 %v183
      %v448 = vunpack.c.l.b16 %v184
      %v449 = vunpack.c.l.b16 %v185
      %v450 = vunpack.c.l.b16 %v186
      %v451 = vunpack.c.l.b16 %v187
      %v452 = vunpack.c.l.b16 %v188
      %v453 = vunpack.c.l.b16 %v189
      %v454 = vunpack.c.l.b16 %v190
      %v455 = vunpack.c.l.b16 %v191
      %v456 = vunpack.c.l.b16 %v192
      %v457 = vunpack.c.l.b16 %v193
      %v458 = vunpack.c.l.b16 %v194
      %v459 = vunpack.c.l.b16 %v195
      %v460 = vunpack.c.l.b16 %v196
      %v461 = vunpack.c.l.b16 %v197
      %v462 = vunpack.c.l.b16 %v198
      %v463 = vunpack.c.l.b16 %v199
      %v464 = vunpack.c.l.b16 %v200
      %v465 = vunpack.c.l.b16 %v201
      %v466 = vunpack.c.l.b16 %v202
      %v467 = vunpack.c.l.b16 %v203
      %v468 = vunpack.c.l.b16 %v204
      %v469 = vunpack.c.l.b16 %v205
      %v470 = vunpack.c.l.b16 %v206
      %v471 = vunpack.c.l.b16 %v207
      %v472 = vunpack.c.l.b16 %v208
      %v473 = vunpack.c.l.b16 %v209
      %v474 = vunpack.c.l.b16 %v210
      %v475 = vunpack.c.l.b16 %v211
      %v476 = vunpack.c.l.b16 %v212
      %v477 = vunpack.c.l.b16 %v213
      %v478 = vunpack.c.l.b16 %v214
      %v479 = vunpack.c.l.b16 %v215
      %v480 = vunpack.c.l.b16 %v216
      %v481 = vunpack.c.l.b16 %v217
      %v482 = vunpack.c.l.b16 %v218
      %v483 = vunpack.c.l.b16 %v219
      %v484 = vunpack.c.l.b16 %v220
      %v485 = vunpack.c.l.b16 %v221
      %v486 = vunpack.c.l.b16 %v222
      %v487 = vunpack.c.l.b16 %v223
      %v488 = vunpack.c.l.b16 %v224
      %v489 = vunpack.c.l.b16 %v225
      %v490 = vunpack.c.l.b16 %v226
      %v491 = vunpack.c.l.b16 %v227
      %v492 = vunpack.c.l.b16 %v228
      %v493 = vunpack.c.l.b16 %v229
      %v494 = vunpack.c.l.b16 %v230
      %v495 = vunpack.c.l.b16 %v231
      %v496 = vunpack.c.l.b16 %v232
      %v497 = vunpack.c.l.b16 %v233
      %v498 = vunpack.c.l.b16 %v234
      %v499 = vunpack.c.l.b16 %v235
      %v500 = vunpack.c.l.b16 %v236
      %v501 = vunpack.c.l.b16 %v237
      %v502 = vunpack.c.l.b16 %v238
      %v503 = vunpack.c.l.b16 %v239
      %v504 = vunpack.c.l.b16 %v240
      %v505 = vunpack.c.l.b16 %v241
      %v506 = vunpack.c.l.b16 %v242
      %v507 = vunpack.c.l.b16 %v243
      %v508 = vunpack.c.l.b16 %v244
      %v509 = vunpack.c.l.b16 %v245
      %v510 = vunpack.c.l.b16 %v246
      %v511 = vunpack.c.l.b16 %v247
      %v512 = vunpack.c.l.b16 %v248
      %v513 = vunpack.c.l.b16 %v249
      %v514 = vunpack.c.l.b16 %v250
      %v515 = vunpack.c.l.b16 %v251
      %v516 = vunpack.c.l.b16 %v252
      %v517 = vunpack.c.l.b16 %v253
      %v518 = vunpack.c.l.b16 %v254
      %v519 = vunpack.c.l.b16 %v255
      %v520 = vunpack.c.l.b16 %v256
      %v521 = vunpack.c.l.b16 %v257
      %v522 = vunpack.c.l.b16 %v258
      %v523 = vunpack.c.l.b16 %v259
      %v524 = vunpack.c.l.b16 %v260
      %v525 = vunpack.c.l.b16 %v261
      %v526 = vunpack.c.l.b16 %v262
      %v527 = vunpack.c.l.b16 %v263
      %v528 = vunpack.c.l.b16 %v264
      %v529 = vunpack.c.l.b16 %v265
      %v530 = vunpack.c.l.b16 %v266
      %v531 = vunpack.c.l.b16 %v267
      %v532 = vunpack.c.l.b16 %v268
      %v533 = vunpack.c.l.b16 %v269
      %v534 = vunpack.c.l.b16 %v270
      %v535 = vunpack.c.l.b16 %v271
      %v536 = vunpack.c.l.b16 %v272
      %v537 = vunpack.c.l.b16 %v273
      %v538 = vunpack.c.l.b16 %v274
      %v539 = vunpack.c.l.b16 %v275
      %v540 = vunpack.c.l.b16 %v276
      %v541 = vunpack.c.l.b16 %v277
      %v542 = vunpack.c.l.b16 %v278
      %v543 = vunpack.c.l.b16 %v279
      %v544 = vunpack.c.l.b16 %v280
      %v545 = vunpack.c.l.b16 %v281
      %v546 = vunpack.c.l.b16 %v282
      %v547 = vunpack.c.l.b16 %v283
      %v548 = vunpack.c.l.b16 %v284
      %v549 = vunpack.c.l.b16 %v285
      %v550 = vunpack.c.l.b16 %v286
      %v551 = vunpack.c.l.b16 %v287
      %v552 = vunpack.c.l.b16 %v288
      %v553 = vunpack.c.l.b16 %v289
      %v554 = vunpack.c.l.b16 %v290
      %v555 = vunpack.c.l.b16 %v291
      %v556 = vunpack.c.l.b16 %v292
      %v557 = vunpack.c.l.b16 %v293
      %v558 = vunpack.c.l.b16 %v294
      %v559 = vunpack.c.l.b16 %v295
      %v560 = vunpack.c.l.b16 %v296
      %v561 = vunpack.c.l.b16 %v297
      %v562 = vunpack.c.l.b16 %v298
      %v563 = vunpack.c.l.b16 %v299
      %v564 = vunpack.c.l.b16 %v300
      %v565 = vunpack.c.l.b16 %v301
      %v566 = vunpack.c.l.b16 %v302
      %v567 = vpack.c.b16 %v440, %v439
      %v568 = vpack.c.b16 %v442, %v441
      %v569 = vpack.c.b16 %v444, %v443
      %v570 = vpack.c.b16 %v446, %v445
      %v571 = vpack.c.b16 %v448, %v447
      %v572 = vpack.c.b16 %v450, %v449
      %v573 = vpack.c.b16 %v452, %v451
      %v574 = vpack.c.b16 %v454, %v453
      %v575 = vpack.c.b16 %v456, %v455
      %v576 = vpack.c.b16 %v458, %v457
      %v577 = vpack.c.b16 %v460, %v459
      %v578 = vpack.c.b16 %v462, %v461
      %v579 = vpack.c.b16 %v464, %v463
      %v580 = vpack.c.b16 %v466, %v465
      %v581 = vpack.c.b16 %v468, %v467
      %v582 = vpack.c.b16 %v470, %v469
      %v583 = vpack.c.b16 %v472, %v471
      %v584 = vpack.c.b16 %v474, %v473
      %v585 = vpack.c.b16 %v476, %v475
      %v586 = vpack.c.b16 %v478, %v477
      %v587 = vpack.c.b16 %v480, %v479
      %v588 = vpack.c.b16 %v482, %v481
      %v589 = vpack.c.b16 %v484, %v483
      %v590 = vpack.c.b16 %v486, %v485
      %v591 = vpack.c.b16 %v488, %v487
      %v592 = vpack.c.b16 %v490, %v489
      %v593 = vpack.c.b16 %v492, %v491
      %v594 = vpack.c.b16 %v494, %v493
      %v595 = vpack.c.b16 %v496, %v495
      %v596 = vpack.c.b16 %v498, %v497
      %v597 = vpack.c.b16 %v500, %v499
      %v598 = vpack.c.b16 %v502, %v501
      %v599 = vpack.c.b16 %v504, %v503
      %v600 = vpack.c.b16 %v506, %v505
      %v601 = vpack.c.b16 %v508, %v507
      %v602 = vpack.c.b16 %v510, %v509
      %v603 = vpack.c.b16 %v512, %v511
      %v604 = vpack.c.b16 %v514, %v513
      %v605 = vpack.c.b16 %v516, %v515
      %v606 = vpack.c.b16 %v518, %v517
      %v607 = vpack.c.b16 %v520, %v519
      %v608 = vpack.c.b16 %v522, %v521
      %v609 = vpack.c.b16 %v524, %v523
      %v610 = vpack.c.b16 %v526, %v525
      %v611 = vpack.c.b16 %v528, %v527
      %v612 = vpack.c.b16 %v530, %v529
      %v613 = vpack.c.b16 %v532, %v531
      %v614 = vpack.c.b16 %v534, %v533
      %v615 = vpack.c.b16 %v536, %v535
      %v616 = vpack.c.b16 %v538, %v537
      %v617 = vpack.c.b16 %v540, %v539
      %v618 = vpack.c.b16 %v542, %v541
      %v619 = vpack.c.b16 %v544, %v543
      %v620 = vpack.c.b16 %v546, %v545
      %v621 = vpack.c.b16 %v548, %v547
      %v622 = vpack.c.b16 %v550, %v549
      %v623 = vpack.c.b16 %v552, %v551
      %v624 = vpack.c.b16 %v554, %v553
      %v625 = vpack.c.b16 %v556, %v555
      %v626 = vpack.c.b16 %v558, %v557
      %v627 = vpack.c.b16 %v560, %v559
      %v628 = vpack.c.b16 %v562, %v561
      %v629 = vpack.c.b16 %v564, %v563
      %v630 = vpack.c.b16 %v566, %v565
      %v635 = vunpack.c.l.b16 %v303
      %v636 = vunpack.c.l.b16 %v304
      %v637 = vunpack.c.l.b16 %v305
      %v638 = vunpack.c.l.b16 %v306
      %v639 = vpack.c.b16 %v636, %v635
      %v640 = vpack.c.b16 %v638, %v637
      %vm643 = vcmask 261120
      %v645 = vsel %vm643, %v567, 0
      %v648 = vsel %vm643, %v568, 0
      %v651 = vsel %vm643, %v569, 0
      %v654 = vsel %vm643, %v570, 0
      %v657 = vsel %vm643, %v571, 0
      %v660 = vsel %vm643, %v572, 0
      %v663 = vsel %vm643, %v573, 0
      %v666 = vsel %vm643, %v574, 0
      %v669 = vsel %vm643, %v575, 0
      %v672 = vsel %vm643, %v576, 0
      %v675 = vsel %vm643, %v577, 0
      %v678 = vsel %vm643, %v578, 0
      %v681 = vsel %vm643, %v579, 0
      %v684 = vsel %vm643, %v580, 0
      %v687 = vsel %vm643, %v581, 0
      %v690 = vsel %vm643, %v582, 0
      %v693 = vsel %vm643, %v583, 0
      %v696 = vsel %vm643, %v584, 0
      %v699 = vsel %vm643, %v585, 0
      %v702 = vsel %vm643, %v586, 0
      %v705 = vsel %vm643, %v587, 0
      %v708 = vsel %vm643, %v588, 0
      %v711 = vsel %vm643, %v589, 0
      %v714 = vsel %vm643, %v590, 0
      %v717 = vsel %vm643, %v591, 0
      %v720 = vsel %vm643, %v592, 0
      %v723 = vsel %vm643, %v593, 0
      %v726 = vsel %vm643, %v594, 0
      %v729 = vsel %vm643, %v595, 0
      %v732 = vsel %vm643, %v596, 0
      %v735 = vsel %vm643, %v597, 0
      %v738 = vsel %vm643, %v598, 0
      %v741 = vsel %vm643, %v599, 0
      %v744 = vsel %vm643, %v600, 0
      %v747 = vsel %vm643, %v601, 0
      %v750 = vsel %vm643, %v602, 0
      %v753 = vsel %vm643, %v603, 0
      %v756 = vsel %vm643, %v604, 0
      %v759 = vsel %vm643, %v605, 0
      %v762 = vsel %vm643, %v606, 0
      %v765 = vsel %vm643, %v607, 0
      %v768 = vsel %vm643, %v608, 0
      %v771 = vsel %vm643, %v609, 0
      %v774 = vsel %vm643, %v610, 0
      %v777 = vsel %vm643, %v611, 0
      %v780 = vsel %vm643, %v612, 0
      %v783 = vsel %vm643, %v613, 0
      %v786 = vsel %vm643, %v614, 0
      %v789 = vsel %vm643, %v615, 0
      %v792 = vsel %vm643, %v616, 0
      %v795 = vsel %vm643, %v617, 0
      %v798 = vsel %vm643, %v618, 0
      %v801 = vsel %vm643, %v619, 0
      %v804 = vsel %vm643, %v620, 0
      %v807 = vsel %vm643, %v621, 0
      %v810 = vsel %vm643, %v622, 0
      %v813 = vsel %vm643, %v623, 0
      %v816 = vsel %vm643, %v624, 0
      %v819 = vsel %vm643, %v625, 0
      %v822 = vsel %vm643, %v626, 0
      %v825 = vsel %vm643, %v627, 0
      %v828 = vsel %vm643, %v628, 0
      %v831 = vsel %vm643, %v629, 0
      %v834 = vsel %vm643, %v630, 0
      %836 = vmatpush.bf16.msra.mxu0 0
      %837 = vmatpush.bf16.msra.mxu0 0
      %838 = vmatpush.bf16.msra.mxu0 0
      %839 = vmatpush.bf16.msra.mxu0 0
      %840 = vmatpush.bf16.msra.mxu0 0
      %841 = vmatpush.bf16.msra.mxu0 0
      %842 = vmatpush.bf16.msra.mxu0 %v640
      %843 = vmatpush.bf16.msra.mxu0 %v639
      %844 = vmatmul.bf16.gmra.mxu0 %v645
      %v845 = vpop.f32.mrf.mxu0
      %v846 = vadd.f32 %v309, %v845
      %v847 = vpop.f32.mrf.mxu0
      %v848 = vadd.f32 %v309, %v847
      %849 = vmatmul.bf16.gmra.mxu0 %v648
      %v850 = vpop.f32.mrf.mxu0
      %v851 = vadd.f32 %v309, %v850
      %v852 = vpop.f32.mrf.mxu0
      %v853 = vadd.f32 %v309, %v852
      %854 = vmatmul.bf16.gmra.mxu0 %v651
      %v855 = vpop.f32.mrf.mxu0
      %v856 = vadd.f32 %v309, %v855
      %v857 = vpop.f32.mrf.mxu0
      %v858 = vadd.f32 %v309, %v857
      %859 = vmatmul.bf16.gmra.mxu0 %v654
      %v860 = vpop.f32.mrf.mxu0
      %v861 = vadd.f32 %v309, %v860
      %v862 = vpop.f32.mrf.mxu0
      %v863 = vadd.f32 %v309, %v862
      %864 = vmatmul.bf16.gmra.mxu0 %v657
      %v865 = vpop.f32.mrf.mxu0
      %v866 = vadd.f32 %v309, %v865
      %v867 = vpop.f32.mrf.mxu0
      %v868 = vadd.f32 %v309, %v867
      %869 = vmatmul.bf16.gmra.mxu0 %v660
      %v870 = vpop.f32.mrf.mxu0
      %v871 = vadd.f32 %v309, %v870
      %v872 = vpop.f32.mrf.mxu0
      %v873 = vadd.f32 %v309, %v872
      %874 = vmatmul.bf16.gmra.mxu0 %v663
      %v875 = vpop.f32.mrf.mxu0
      %v876 = vadd.f32 %v309, %v875
      %v877 = vpop.f32.mrf.mxu0
      %v878 = vadd.f32 %v309, %v877
      %879 = vmatmul.bf16.gmra.mxu0 %v666
      %v880 = vpop.f32.mrf.mxu0
      %v881 = vadd.f32 %v309, %v880
      %v882 = vpop.f32.mrf.mxu0
      %v883 = vadd.f32 %v309, %v882
      %884 = vmatmul.bf16.gmra.mxu0 %v669
      %v885 = vpop.f32.mrf.mxu0
      %v886 = vadd.f32 %v309, %v885
      %v887 = vpop.f32.mrf.mxu0
      %v888 = vadd.f32 %v309, %v887
      %889 = vmatmul.bf16.gmra.mxu0 %v672
      %v890 = vpop.f32.mrf.mxu0
      %v891 = vadd.f32 %v309, %v890
      %v892 = vpop.f32.mrf.mxu0
      %v893 = vadd.f32 %v309, %v892
      %894 = vmatmul.bf16.gmra.mxu0 %v675
      %v895 = vpop.f32.mrf.mxu0
      %v896 = vadd.f32 %v309, %v895
      %v897 = vpop.f32.mrf.mxu0
      %v898 = vadd.f32 %v309, %v897
      %899 = vmatmul.bf16.gmra.mxu0 %v678
      %v900 = vpop.f32.mrf.mxu0
      %v901 = vadd.f32 %v309, %v900
      %v902 = vpop.f32.mrf.mxu0
      %v903 = vadd.f32 %v309, %v902
      %904 = vmatmul.bf16.gmra.mxu0 %v681
      %v905 = vpop.f32.mrf.mxu0
      %v906 = vadd.f32 %v309, %v905
      %v907 = vpop.f32.mrf.mxu0
      %v908 = vadd.f32 %v309, %v907
      %909 = vmatmul.bf16.gmra.mxu0 %v684
      %v910 = vpop.f32.mrf.mxu0
      %v911 = vadd.f32 %v309, %v910
      %v912 = vpop.f32.mrf.mxu0
      %v913 = vadd.f32 %v309, %v912
      %914 = vmatmul.bf16.gmra.mxu0 %v687
      %v915 = vpop.f32.mrf.mxu0
      %v916 = vadd.f32 %v309, %v915
      %v917 = vpop.f32.mrf.mxu0
      %v918 = vadd.f32 %v309, %v917
      %919 = vmatmul.bf16.gmra.mxu0 %v690
      %v920 = vpop.f32.mrf.mxu0
      %v921 = vadd.f32 %v309, %v920
      %v922 = vpop.f32.mrf.mxu0
      %v923 = vadd.f32 %v309, %v922
      %924 = vmatmul.bf16.gmra.mxu0 %v693
      %v925 = vpop.f32.mrf.mxu0
      %v926 = vadd.f32 %v309, %v925
      %v927 = vpop.f32.mrf.mxu0
      %v928 = vadd.f32 %v309, %v927
      %929 = vmatmul.bf16.gmra.mxu0 %v696
      %v930 = vpop.f32.mrf.mxu0
      %v931 = vadd.f32 %v309, %v930
      %v932 = vpop.f32.mrf.mxu0
      %v933 = vadd.f32 %v309, %v932
      %934 = vmatmul.bf16.gmra.mxu0 %v699
      %v935 = vpop.f32.mrf.mxu0
      %v936 = vadd.f32 %v309, %v935
      %v937 = vpop.f32.mrf.mxu0
      %v938 = vadd.f32 %v309, %v937
      %939 = vmatmul.bf16.gmra.mxu0 %v702
      %v940 = vpop.f32.mrf.mxu0
      %v941 = vadd.f32 %v309, %v940
      %v942 = vpop.f32.mrf.mxu0
      %v943 = vadd.f32 %v309, %v942
      %944 = vmatmul.bf16.gmra.mxu0 %v705
      %v945 = vpop.f32.mrf.mxu0
      %v946 = vadd.f32 %v309, %v945
      %v947 = vpop.f32.mrf.mxu0
      %v948 = vadd.f32 %v309, %v947
      %949 = vmatmul.bf16.gmra.mxu0 %v708
      %v950 = vpop.f32.mrf.mxu0
      %v951 = vadd.f32 %v309, %v950
      %v952 = vpop.f32.mrf.mxu0
      %v953 = vadd.f32 %v309, %v952
      %954 = vmatmul.bf16.gmra.mxu0 %v711
      %v955 = vpop.f32.mrf.mxu0
      %v956 = vadd.f32 %v309, %v955
      %v957 = vpop.f32.mrf.mxu0
      %v958 = vadd.f32 %v309, %v957
      %959 = vmatmul.bf16.gmra.mxu0 %v714
      %v960 = vpop.f32.mrf.mxu0
      %v961 = vadd.f32 %v309, %v960
      %v962 = vpop.f32.mrf.mxu0
      %v963 = vadd.f32 %v309, %v962
      %964 = vmatmul.bf16.gmra.mxu0 %v717
      %v965 = vpop.f32.mrf.mxu0
      %v966 = vadd.f32 %v309, %v965
      %v967 = vpop.f32.mrf.mxu0
      %v968 = vadd.f32 %v309, %v967
      %969 = vmatmul.bf16.gmra.mxu0 %v720
      %v970 = vpop.f32.mrf.mxu0
      %v971 = vadd.f32 %v309, %v970
      %v972 = vpop.f32.mrf.mxu0
      %v973 = vadd.f32 %v309, %v972
      %974 = vmatmul.bf16.gmra.mxu0 %v723
      %v975 = vpop.f32.mrf.mxu0
      %v976 = vadd.f32 %v309, %v975
      %v977 = vpop.f32.mrf.mxu0
      %v978 = vadd.f32 %v309, %v977
      %979 = vmatmul.bf16.gmra.mxu0 %v726
      %v980 = vpop.f32.mrf.mxu0
      %v981 = vadd.f32 %v309, %v980
      %v982 = vpop.f32.mrf.mxu0
      %v983 = vadd.f32 %v309, %v982
      %984 = vmatmul.bf16.gmra.mxu0 %v729
      %v985 = vpop.f32.mrf.mxu0
      %v986 = vadd.f32 %v309, %v985
      %v987 = vpop.f32.mrf.mxu0
      %v988 = vadd.f32 %v309, %v987
      %989 = vmatmul.bf16.gmra.mxu0 %v732
      %v990 = vpop.f32.mrf.mxu0
      %v991 = vadd.f32 %v309, %v990
      %v992 = vpop.f32.mrf.mxu0
      %v993 = vadd.f32 %v309, %v992
      %994 = vmatmul.bf16.gmra.mxu0 %v735
      %v995 = vpop.f32.mrf.mxu0
      %v996 = vadd.f32 %v309, %v995
      %v997 = vpop.f32.mrf.mxu0
      %v998 = vadd.f32 %v309, %v997
      %999 = vmatmul.bf16.gmra.mxu0 %v738
      %v1000 = vpop.f32.mrf.mxu0
      %v1001 = vadd.f32 %v309, %v1000
      %v1002 = vpop.f32.mrf.mxu0
      %v1003 = vadd.f32 %v309, %v1002
      %1004 = vmatmul.bf16.gmra.mxu0 %v741
      %v1005 = vpop.f32.mrf.mxu0
      %v1006 = vadd.f32 %v309, %v1005
      %v1007 = vpop.f32.mrf.mxu0
      %v1008 = vadd.f32 %v309, %v1007
      %1009 = vmatmul.bf16.gmra.mxu0 %v744
      %v1010 = vpop.f32.mrf.mxu0
      %v1011 = vadd.f32 %v309, %v1010
      %v1012 = vpop.f32.mrf.mxu0
      %v1013 = vadd.f32 %v309, %v1012
      %1014 = vmatmul.bf16.gmra.mxu0 %v747
      %v1015 = vpop.f32.mrf.mxu0
      %v1016 = vadd.f32 %v309, %v1015
      %v1017 = vpop.f32.mrf.mxu0
      %v1018 = vadd.f32 %v309, %v1017
      %1019 = vmatmul.bf16.gmra.mxu0 %v750
      %v1020 = vpop.f32.mrf.mxu0
      %v1021 = vadd.f32 %v309, %v1020
      %v1022 = vpop.f32.mrf.mxu0
      %v1023 = vadd.f32 %v309, %v1022
      %1024 = vmatmul.bf16.gmra.mxu0 %v753
      %v1025 = vpop.f32.mrf.mxu0
      %v1026 = vadd.f32 %v309, %v1025
      %v1027 = vpop.f32.mrf.mxu0
      %v1028 = vadd.f32 %v309, %v1027
      %1029 = vmatmul.bf16.gmra.mxu0 %v756
      %v1030 = vpop.f32.mrf.mxu0
      %v1031 = vadd.f32 %v309, %v1030
      %v1032 = vpop.f32.mrf.mxu0
      %v1033 = vadd.f32 %v309, %v1032
      %1034 = vmatmul.bf16.gmra.mxu0 %v759
      %v1035 = vpop.f32.mrf.mxu0
      %v1036 = vadd.f32 %v309, %v1035
      %v1037 = vpop.f32.mrf.mxu0
      %v1038 = vadd.f32 %v309, %v1037
      %1039 = vmatmul.bf16.gmra.mxu0 %v762
      %v1040 = vpop.f32.mrf.mxu0
      %v1041 = vadd.f32 %v309, %v1040
      %v1042 = vpop.f32.mrf.mxu0
      %v1043 = vadd.f32 %v309, %v1042
      %1044 = vmatmul.bf16.gmra.mxu0 %v765
      %v1045 = vpop.f32.mrf.mxu0
      %v1046 = vadd.f32 %v309, %v1045
      %v1047 = vpop.f32.mrf.mxu0
      %v1048 = vadd.f32 %v309, %v1047
      %1049 = vmatmul.bf16.gmra.mxu0 %v768
      %v1050 = vpop.f32.mrf.mxu0
      %v1051 = vadd.f32 %v309, %v1050
      %v1052 = vpop.f32.mrf.mxu0
      %v1053 = vadd.f32 %v309, %v1052
      %1054 = vmatmul.bf16.gmra.mxu0 %v771
      %v1055 = vpop.f32.mrf.mxu0
      %v1056 = vadd.f32 %v309, %v1055
      %v1057 = vpop.f32.mrf.mxu0
      %v1058 = vadd.f32 %v309, %v1057
      %1059 = vmatmul.bf16.gmra.mxu0 %v774
      %v1060 = vpop.f32.mrf.mxu0
      %v1061 = vadd.f32 %v309, %v1060
      %v1062 = vpop.f32.mrf.mxu0
      %v1063 = vadd.f32 %v309, %v1062
      %1064 = vmatmul.bf16.gmra.mxu0 %v777
      %v1065 = vpop.f32.mrf.mxu0
      %v1066 = vadd.f32 %v309, %v1065
      %v1067 = vpop.f32.mrf.mxu0
      %v1068 = vadd.f32 %v309, %v1067
      %1069 = vmatmul.bf16.gmra.mxu0 %v780
      %v1070 = vpop.f32.mrf.mxu0
      %v1071 = vadd.f32 %v309, %v1070
      %v1072 = vpop.f32.mrf.mxu0
      %v1073 = vadd.f32 %v309, %v1072
      %1074 = vmatmul.bf16.gmra.mxu0 %v783
      %v1075 = vpop.f32.mrf.mxu0
      %v1076 = vadd.f32 %v309, %v1075
      %v1077 = vpop.f32.mrf.mxu0
      %v1078 = vadd.f32 %v309, %v1077
      %1079 = vmatmul.bf16.gmra.mxu0 %v786
      %v1080 = vpop.f32.mrf.mxu0
      %v1081 = vadd.f32 %v309, %v1080
      %v1082 = vpop.f32.mrf.mxu0
      %v1083 = vadd.f32 %v309, %v1082
      %1084 = vmatmul.bf16.gmra.mxu0 %v789
      %v1085 = vpop.f32.mrf.mxu0
      %v1086 = vadd.f32 %v309, %v1085
      %v1087 = vpop.f32.mrf.mxu0
      %v1088 = vadd.f32 %v309, %v1087
      %1089 = vmatmul.bf16.gmra.mxu0 %v792
      %v1090 = vpop.f32.mrf.mxu0
      %v1091 = vadd.f32 %v309, %v1090
      %v1092 = vpop.f32.mrf.mxu0
      %v1093 = vadd.f32 %v309, %v1092
      %1094 = vmatmul.bf16.gmra.mxu0 %v795
      %v1095 = vpop.f32.mrf.mxu0
      %v1096 = vadd.f32 %v309, %v1095
      %v1097 = vpop.f32.mrf.mxu0
      %v1098 = vadd.f32 %v309, %v1097
      %1099 = vmatmul.bf16.gmra.mxu0 %v798
      %v1100 = vpop.f32.mrf.mxu0
      %v1101 = vadd.f32 %v309, %v1100
      %v1102 = vpop.f32.mrf.mxu0
      %v1103 = vadd.f32 %v309, %v1102
      %1104 = vmatmul.bf16.gmra.mxu0 %v801
      %v1105 = vpop.f32.mrf.mxu0
      %v1106 = vadd.f32 %v309, %v1105
      %v1107 = vpop.f32.mrf.mxu0
      %v1108 = vadd.f32 %v309, %v1107
      %1109 = vmatmul.bf16.gmra.mxu0 %v804
      %v1110 = vpop.f32.mrf.mxu0
      %v1111 = vadd.f32 %v309, %v1110
      %v1112 = vpop.f32.mrf.mxu0
      %v1113 = vadd.f32 %v309, %v1112
      %1114 = vmatmul.bf16.gmra.mxu0 %v807
      %v1115 = vpop.f32.mrf.mxu0
      %v1116 = vadd.f32 %v309, %v1115
      %v1117 = vpop.f32.mrf.mxu0
      %v1118 = vadd.f32 %v309, %v1117
      %1119 = vmatmul.bf16.gmra.mxu0 %v810
      %v1120 = vpop.f32.mrf.mxu0
      %v1121 = vadd.f32 %v309, %v1120
      %v1122 = vpop.f32.mrf.mxu0
      %v1123 = vadd.f32 %v309, %v1122
      %1124 = vmatmul.bf16.gmra.mxu0 %v813
      %v1125 = vpop.f32.mrf.mxu0
      %v1126 = vadd.f32 %v309, %v1125
      %v1127 = vpop.f32.mrf.mxu0
      %v1128 = vadd.f32 %v309, %v1127
      %1129 = vmatmul.bf16.gmra.mxu0 %v816
      %v1130 = vpop.f32.mrf.mxu0
      %v1131 = vadd.f32 %v309, %v1130
      %v1132 = vpop.f32.mrf.mxu0
      %v1133 = vadd.f32 %v309, %v1132
      %1134 = vmatmul.bf16.gmra.mxu0 %v819
      %v1135 = vpop.f32.mrf.mxu0
      %v1136 = vadd.f32 %v309, %v1135
      %v1137 = vpop.f32.mrf.mxu0
      %v1138 = vadd.f32 %v309, %v1137
      %1139 = vmatmul.bf16.gmra.mxu0 %v822
      %v1140 = vpop.f32.mrf.mxu0
      %v1141 = vadd.f32 %v309, %v1140
      %v1142 = vpop.f32.mrf.mxu0
      %v1143 = vadd.f32 %v309, %v1142
      %1144 = vmatmul.bf16.gmra.mxu0 %v825
      %v1145 = vpop.f32.mrf.mxu0
      %v1146 = vadd.f32 %v309, %v1145
      %v1147 = vpop.f32.mrf.mxu0
      %v1148 = vadd.f32 %v309, %v1147
      %1149 = vmatmul.bf16.gmra.mxu0 %v828
      %v1150 = vpop.f32.mrf.mxu0
      %v1151 = vadd.f32 %v309, %v1150
      %v1152 = vpop.f32.mrf.mxu0
      %v1153 = vadd.f32 %v309, %v1152
      %1154 = vmatmul.bf16.gmra.mxu0 %v831
      %v1155 = vpop.f32.mrf.mxu0
      %v1156 = vadd.f32 %v309, %v1155
      %v1157 = vpop.f32.mrf.mxu0
      %v1158 = vadd.f32 %v309, %v1157
      %1159 = vmatmul.bf16.gmra.mxu0 %v834
      %v1160 = vpop.f32.mrf.mxu0
      %v1161 = vadd.f32 %v309, %v1160
      %v1162 = vpop.f32.mrf.mxu0
      %v1163 = vadd.f32 %v309, %v1162
      %1164 = vdwg.mxu0
      %1165 = vst.msk [vmem:[%s172] sm:$0xff] %vm643, %v846
      %1166 = vst.msk [vmem:[%s172 + $0x8] sm:$0xff] %vm643, %v848
      %1167 = vst.msk [vmem:[%s172 + $0x10] sm:$0xff] %vm643, %v851
      %1168 = vst.msk [vmem:[%s172 + $0x18] sm:$0xff] %vm643, %v853
      %1169 = vst.msk [vmem:[%s172 + $0x20] sm:$0xff] %vm643, %v856
      %1170 = vst.msk [vmem:[%s172 + $0x28] sm:$0xff] %vm643, %v858
      %1171 = vst.msk [vmem:[%s172 + $0x30] sm:$0xff] %vm643, %v861
      %1172 = vst.msk [vmem:[%s172 + $0x38] sm:$0xff] %vm643, %v863
      %1173 = vst.msk [vmem:[%s172 + $0x40] sm:$0xff] %vm643, %v866
      %1174 = vst.msk [vmem:[%s172 + $0x48] sm:$0xff] %vm643, %v868
      %1175 = vst.msk [vmem:[%s172 + $0x50] sm:$0xff] %vm643, %v871
      %1176 = vst.msk [vmem:[%s172 + $0x58] sm:$0xff] %vm643, %v873
      %1177 = vst.msk [vmem:[%s172 + $0x60] sm:$0xff] %vm643, %v876
      %1178 = vst.msk [vmem:[%s172 + $0x68] sm:$0xff] %vm643, %v878
      %1179 = vst.msk [vmem:[%s172 + $0x70] sm:$0xff] %vm643, %v881
      %1180 = vst.msk [vmem:[%s172 + $0x78] sm:$0xff] %vm643, %v883
      %1181 = vst.msk [vmem:[%s172 + $0x80] sm:$0xff] %vm643, %v886
      %1182 = vst.msk [vmem:[%s172 + $0x88] sm:$0xff] %vm643, %v888
      %1183 = vst.msk [vmem:[%s172 + $0x90] sm:$0xff] %vm643, %v891
      %1184 = vst.msk [vmem:[%s172 + $0x98] sm:$0xff] %vm643, %v893
      %1185 = vst.msk [vmem:[%s172 + $0xa0] sm:$0xff] %vm643, %v896
      %1186 = vst.msk [vmem:[%s172 + $0xa8] sm:$0xff] %vm643, %v898
      %1187 = vst.msk [vmem:[%s172 + $0xb0] sm:$0xff] %vm643, %v901
      %1188 = vst.msk [vmem:[%s172 + $0xb8] sm:$0xff] %vm643, %v903
      %1189 = vst.msk [vmem:[%s172 + $0xc0] sm:$0xff] %vm643, %v906
      %1190 = vst.msk [vmem:[%s172 + $0xc8] sm:$0xff] %vm643, %v908
      %1191 = vst.msk [vmem:[%s172 + $0xd0] sm:$0xff] %vm643, %v911
      %1192 = vst.msk [vmem:[%s172 + $0xd8] sm:$0xff] %vm643, %v913
      %1193 = vst.msk [vmem:[%s172 + $0xe0] sm:$0xff] %vm643, %v916
      %1194 = vst.msk [vmem:[%s172 + $0xe8] sm:$0xff] %vm643, %v918
      %1195 = vst.msk [vmem:[%s172 + $0xf0] sm:$0xff] %vm643, %v921
      %1196 = vst.msk [vmem:[%s172 + $0xf8] sm:$0xff] %vm643, %v923
      %1197 = vst.msk [vmem:[%s172 + $0x100] sm:$0xff] %vm643, %v926
      %1198 = vst.msk [vmem:[%s172 + $0x108] sm:$0xff] %vm643, %v928
      %1199 = vst.msk [vmem:[%s172 + $0x110] sm:$0xff] %vm643, %v931
      %1200 = vst.msk [vmem:[%s172 + $0x118] sm:$0xff] %vm643, %v933
      %1201 = vst.msk [vmem:[%s172 + $0x120] sm:$0xff] %vm643, %v936
      %1202 = vst.msk [vmem:[%s172 + $0x128] sm:$0xff] %vm643, %v938
      %1203 = vst.msk [vmem:[%s172 + $0x130] sm:$0xff] %vm643, %v941
      %1204 = vst.msk [vmem:[%s172 + $0x138] sm:$0xff] %vm643, %v943
      %1205 = vst.msk [vmem:[%s172 + $0x140] sm:$0xff] %vm643, %v946
      %1206 = vst.msk [vmem:[%s172 + $0x148] sm:$0xff] %vm643, %v948
      %1207 = vst.msk [vmem:[%s172 + $0x150] sm:$0xff] %vm643, %v951
      %1208 = vst.msk [vmem:[%s172 + $0x158] sm:$0xff] %vm643, %v953
      %1209 = vst.msk [vmem:[%s172 + $0x160] sm:$0xff] %vm643, %v956
      %1210 = vst.msk [vmem:[%s172 + $0x168] sm:$0xff] %vm643, %v958
      %1211 = vst.msk [vmem:[%s172 + $0x170] sm:$0xff] %vm643, %v961
      %1212 = vst.msk [vmem:[%s172 + $0x178] sm:$0xff] %vm643, %v963
      %1213 = vst.msk [vmem:[%s172 + $0x180] sm:$0xff] %vm643, %v966
      %1214 = vst.msk [vmem:[%s172 + $0x188] sm:$0xff] %vm643, %v968
      %1215 = vst.msk [vmem:[%s172 + $0x190] sm:$0xff] %vm643, %v971
      %1216 = vst.msk [vmem:[%s172 + $0x198] sm:$0xff] %vm643, %v973
      %1217 = vst.msk [vmem:[%s172 + $0x1a0] sm:$0xff] %vm643, %v976
      %1218 = vst.msk [vmem:[%s172 + $0x1a8] sm:$0xff] %vm643, %v978
      %1219 = vst.msk [vmem:[%s172 + $0x1b0] sm:$0xff] %vm643, %v981
      %1220 = vst.msk [vmem:[%s172 + $0x1b8] sm:$0xff] %vm643, %v983
      %1221 = vst.msk [vmem:[%s172 + $0x1c0] sm:$0xff] %vm643, %v986
      %1222 = vst.msk [vmem:[%s172 + $0x1c8] sm:$0xff] %vm643, %v988
      %1223 = vst.msk [vmem:[%s172 + $0x1d0] sm:$0xff] %vm643, %v991
      %1224 = vst.msk [vmem:[%s172 + $0x1d8] sm:$0xff] %vm643, %v993
      %1225 = vst.msk [vmem:[%s172 + $0x1e0] sm:$0xff] %vm643, %v996
      %1226 = vst.msk [vmem:[%s172 + $0x1e8] sm:$0xff] %vm643, %v998
      %1227 = vst.msk [vmem:[%s172 + $0x1f0] sm:$0xff] %vm643, %v1001
      %1228 = vst.msk [vmem:[%s172 + $0x1f8] sm:$0xff] %vm643, %v1003
      %1229 = vst.msk [vmem:[%s172 + $0x200] sm:$0xff] %vm643, %v1006
      %1230 = vst.msk [vmem:[%s172 + $0x208] sm:$0xff] %vm643, %v1008
      %1231 = vst.msk [vmem:[%s172 + $0x210] sm:$0xff] %vm643, %v1011
      %1232 = vst.msk [vmem:[%s172 + $0x218] sm:$0xff] %vm643, %v1013
      %1233 = vst.msk [vmem:[%s172 + $0x220] sm:$0xff] %vm643, %v1016
      %1234 = vst.msk [vmem:[%s172 + $0x228] sm:$0xff] %vm643, %v1018
      %1235 = vst.msk [vmem:[%s172 + $0x230] sm:$0xff] %vm643, %v1021
      %1236 = vst.msk [vmem:[%s172 + $0x238] sm:$0xff] %vm643, %v1023
      %1237 = vst.msk [vmem:[%s172 + $0x240] sm:$0xff] %vm643, %v1026
      %1238 = vst.msk [vmem:[%s172 + $0x248] sm:$0xff] %vm643, %v1028
      %1239 = vst.msk [vmem:[%s172 + $0x250] sm:$0xff] %vm643, %v1031
      %1240 = vst.msk [vmem:[%s172 + $0x258] sm:$0xff] %vm643, %v1033
      %1241 = vst.msk [vmem:[%s172 + $0x260] sm:$0xff] %vm643, %v1036
      %1242 = vst.msk [vmem:[%s172 + $0x268] sm:$0xff] %vm643, %v1038
      %1243 = vst.msk [vmem:[%s172 + $0x270] sm:$0xff] %vm643, %v1041
      %1244 = vst.msk [vmem:[%s172 + $0x278] sm:$0xff] %vm643, %v1043
      %1245 = vst.msk [vmem:[%s172 + $0x280] sm:$0xff] %vm643, %v1046
      %1246 = vst.msk [vmem:[%s172 + $0x288] sm:$0xff] %vm643, %v1048
      %1247 = vst.msk [vmem:[%s172 + $0x290] sm:$0xff] %vm643, %v1051
      %1248 = vst.msk [vmem:[%s172 + $0x298] sm:$0xff] %vm643, %v1053
      %1249 = vst.msk [vmem:[%s172 + $0x2a0] sm:$0xff] %vm643, %v1056
      %1250 = vst.msk [vmem:[%s172 + $0x2a8] sm:$0xff] %vm643, %v1058
      %1251 = vst.msk [vmem:[%s172 + $0x2b0] sm:$0xff] %vm643, %v1061
      %1252 = vst.msk [vmem:[%s172 + $0x2b8] sm:$0xff] %vm643, %v1063
      %1253 = vst.msk [vmem:[%s172 + $0x2c0] sm:$0xff] %vm643, %v1066
      %1254 = vst.msk [vmem:[%s172 + $0x2c8] sm:$0xff] %vm643, %v1068
      %1255 = vst.msk [vmem:[%s172 + $0x2d0] sm:$0xff] %vm643, %v1071
      %1256 = vst.msk [vmem:[%s172 + $0x2d8] sm:$0xff] %vm643, %v1073
      %1257 = vst.msk [vmem:[%s172 + $0x2e0] sm:$0xff] %vm643, %v1076
      %1258 = vst.msk [vmem:[%s172 + $0x2e8] sm:$0xff] %vm643, %v1078
      %1259 = vst.msk [vmem:[%s172 + $0x2f0] sm:$0xff] %vm643, %v1081
      %1260 = vst.msk [vmem:[%s172 + $0x2f8] sm:$0xff] %vm643, %v1083
      %1261 = vst.msk [vmem:[%s172 + $0x300] sm:$0xff] %vm643, %v1086
      %1262 = vst.msk [vmem:[%s172 + $0x308] sm:$0xff] %vm643, %v1088
      %1263 = vst.msk [vmem:[%s172 + $0x310] sm:$0xff] %vm643, %v1091
      %1264 = vst.msk [vmem:[%s172 + $0x318] sm:$0xff] %vm643, %v1093
      %1265 = vst.msk [vmem:[%s172 + $0x320] sm:$0xff] %vm643, %v1096
      %1266 = vst.msk [vmem:[%s172 + $0x328] sm:$0xff] %vm643, %v1098
      %1267 = vst.msk [vmem:[%s172 + $0x330] sm:$0xff] %vm643, %v1101
      %1268 = vst.msk [vmem:[%s172 + $0x338] sm:$0xff] %vm643, %v1103
      %1269 = vst.msk [vmem:[%s172 + $0x340] sm:$0xff] %vm643, %v1106
      %1270 = vst.msk [vmem:[%s172 + $0x348] sm:$0xff] %vm643, %v1108
      %1271 = vst.msk [vmem:[%s172 + $0x350] sm:$0xff] %vm643, %v1111
      %1272 = vst.msk [vmem:[%s172 + $0x358] sm:$0xff] %vm643, %v1113
      %1273 = vst.msk [vmem:[%s172 + $0x360] sm:$0xff] %vm643, %v1116
      %1274 = vst.msk [vmem:[%s172 + $0x368] sm:$0xff] %vm643, %v1118
      %1275 = vst.msk [vmem:[%s172 + $0x370] sm:$0xff] %vm643, %v1121
      %1276 = vst.msk [vmem:[%s172 + $0x378] sm:$0xff] %vm643, %v1123
      %1277 = vst.msk [vmem:[%s172 + $0x380] sm:$0xff] %vm643, %v1126
      %1278 = vst.msk [vmem:[%s172 + $0x388] sm:$0xff] %vm643, %v1128
      %1279 = vst.msk [vmem:[%s172 + $0x390] sm:$0xff] %vm643, %v1131
      %1280 = vst.msk [vmem:[%s172 + $0x398] sm:$0xff] %vm643, %v1133
      %1281 = vst.msk [vmem:[%s172 + $0x3a0] sm:$0xff] %vm643, %v1136
      %1282 = vst.msk [vmem:[%s172 + $0x3a8] sm:$0xff] %vm643, %v1138
      %1283 = vst.msk [vmem:[%s172 + $0x3b0] sm:$0xff] %vm643, %v1141
      %1284 = vst.msk [vmem:[%s172 + $0x3b8] sm:$0xff] %vm643, %v1143
      %1285 = vst.msk [vmem:[%s172 + $0x3c0] sm:$0xff] %vm643, %v1146
      %1286 = vst.msk [vmem:[%s172 + $0x3c8] sm:$0xff] %vm643, %v1148
      %1287 = vst.msk [vmem:[%s172 + $0x3d0] sm:$0xff] %vm643, %v1151
      %1288 = vst.msk [vmem:[%s172 + $0x3d8] sm:$0xff] %vm643, %v1153
      %1289 = vst.msk [vmem:[%s172 + $0x3e0] sm:$0xff] %vm643, %v1156
      %1290 = vst.msk [vmem:[%s172 + $0x3e8] sm:$0xff] %vm643, %v1158
      %1291 = vst.msk [vmem:[%s172 + $0x3f0] sm:$0xff] %vm643, %v1161
      %1292 = vst.msk [vmem:[%s172 + $0x3f8] sm:$0xff] %vm643, %v1163
      %s1293 = smul.u32 128, %s14
      %p1294 = scmp.lt.s32.totalorder %s1293, 255
      %s1295 = scalar_select %p1294, %s1293, 255
      %s1296 = smul.addr %s1295, 8
      %s1297 = scalar_lea.vmem %s3, %s1296
      // Predicated region
      $region33: #{global_attention_forward.3} parent=31 // pred_check
        %p1298 = pneg %p100
      $region34: #{global_attention_forward.3} parent=31 // pred_check_branch
        %1300 = sbr.rel (%p1298) target = $region36
      $region35: #{global_attention_forward.3} parent=31 // pred_region
        %s1301 = smul.u32 128, %s14
      $region36: #{global_attention_forward.3} parent=31 // pred_fallthru
        _
    $region32: #{global_attention_forward.3} parent=5 // pred_fallthru
      _
    %p1302 = scmp.le.s32.totalorder 2, %s9
    // Predicated region
    $region37: #{global_attention_forward.3} parent=5 // pred_check
      %p1303 = pneg %p1302
    $region38: #{global_attention_forward.3} parent=5 // pred_check_branch
      %1305 = sbr.rel (%p1303) target = $region40
    $region39: #{global_attention_forward.3} parent=5 // pred_region
      %s1306 = ssub.s32 %s9, 2
      // Predicated region
      $region41: #{global_attention_forward.3} parent=39 // pred_check
        %p1307 = pneg %p106
      $region42: #{global_attention_forward.3} parent=39 // pred_check_branch
        %1309 = sbr.rel (%p1307) target = $region44
      $region43: #{global_attention_forward.3} parent=39 // pred_region
        %s1310 = smul.u32 128, %s15
        %p1311 = scmp.lt.s32.totalorder %s1310, 255
        %s1312 = scalar_select %p1311, %s1310, 255
        %s1313 = smul.addr %s1312, 8
        %s1314 = scalar_lea.vmem %s3, %s1313
      $region44: #{global_attention_forward.3} parent=39 // pred_fallthru
        _
    $region40: #{global_attention_forward.3} parent=5 // pred_fallthru
      _
  $region6: #{global_attention_forward.3} parent=0 // loop_footer
    %s13 = sadd.s32 1, %s9
  $region7: #{global_attention_forward.3} parent=0 // loop_footer_branch
    %8 = sbr.rel target = $region3
  $region8: #{global_attention_forward.3} parent=0 // loop_exit
    _

</llo_original>
